<compile_context>
chip_gen: v7x
topology: tpu7x:2x2x1
jax: 0.10.0
libtpu: 0.0.40
codegen_flags: <defaults>
</compile_context>

<pallas_src>
import functools

import jax
import jax.numpy as jnp
import numpy as np
from jax.experimental import pallas as pl
from jax.experimental.pallas import tpu as pltpu


# ----------------------------------------------------------------------------
# Shared attention core.  q/k/v are (M, C) f32 values, M = WB*N.
# ----------------------------------------------------------------------------
def _attention_core(q, k, v, mb_ref, wp_ref, bp_ref, out_ref, *,
                    num_heads, win_block, n_masks):
    WB = win_block
    M, C = q.shape
    N = M // WB
    hd = C // num_heads
    rep = WB // n_masks
    mxu_dtype = wp_ref.dtype

    # Per-head attention.  H is small and static; each iteration runs WB
    # windows at once through batched (single leading batch dim) MXU matmuls.
    # The per-head context is folded directly into the output projection, so
    # there is no (M, C) context slab, no lane-masked scratch stores and no
    # f32 read-back.
    # TODO(synk): for very large H, group heads inside
    # lax.fori_loop(..., unroll=True) to bound live vreg state.
    out_acc = None
    for h in range(num_heads):
        sl = slice(h * hd, (h + 1) * hd)
        q_h = q[:, sl].reshape(WB, N, hd).astype(mxu_dtype)
        k_h = k[:, sl].reshape(WB, N, hd).astype(mxu_dtype)
        v_h = v[:, sl].reshape(WB, N, hd).astype(mxu_dtype)

        s = jnp.einsum('bqd,bkd->bqk', q_h, k_h,
                       preferred_element_type=jnp.float32)        # (WB, N, N) f32

        # Single broadcast add of the pre-combined (rel-pos bias + shift mask).
        # Window w of this block uses mask row (w % nW); only leading-dim
        # reshapes are involved -- no (WB, N, N) tile materialization.
        s = (s.reshape(rep, n_masks, N, N) + mb_ref[h]).reshape(WB, N, N)

        # Numerically-stable f32 softmax; denominator via EUP approx reciprocal.
        s = s - jnp.max(s, axis=-1, keepdims=True)
        p = jnp.exp(s)
        p = p * pl.reciprocal(jnp.sum(p, axis=-1, keepdims=True), approx=True)

        ctx_h = jnp.einsum('bqk,bkd->bqd', p.astype(mxu_dtype), v_h,
                           preferred_element_type=jnp.float32)    # (WB, N, hd)

        # Fold this head straight into the output projection: out += ctx_h @ Wp_h.
        # Wp row slices are sublane-aligned static ref slices (hd multiple of 8).
        proj_h = jnp.dot(ctx_h.reshape(M, hd).astype(mxu_dtype),
                         wp_ref[sl, :], preferred_element_type=jnp.float32)
        out_acc = proj_h if out_acc is None else out_acc + proj_h

    out = out_acc + bp_ref[...]
    # TODO(synk): for C < 128 (toy shapes) this store uses C/128 lanes; a
    # wrapper-side (B_, N*C) lane-dense repack would make it a dense vst.
    # Production C >= 128 is already lane-dense, no change needed.
    out_ref[...] = out.reshape(WB, N, C).astype(out_ref.dtype)


# ----------------------------------------------------------------------------
# Kernel variants: split QKV (C < 128) and fused QKV (C % 128 == 0).
# ----------------------------------------------------------------------------
def _wattn_kernel_split(x_ref, mb_ref, wq_ref, bq_ref, wk_ref, wv_ref, bv_ref,
                        wp_ref, bp_ref, out_ref, *, num_heads, win_block, n_masks):
    WB, N, C = x_ref.shape
    mxu_dtype = wq_ref.dtype
    x = x_ref[...].reshape(WB * N, C).astype(mxu_dtype)           # (M, C)

    q = jnp.dot(x, wq_ref[...], preferred_element_type=jnp.float32) + bq_ref[...]
    # K bias is dropped: q.bk is constant along the softmax axis -> cancels.
    k = jnp.dot(x, wk_ref[...], preferred_element_type=jnp.float32)
    v = jnp.dot(x, wv_ref[...], preferred_element_type=jnp.float32) + bv_ref[...]

    _attention_core(q, k, v, mb_ref, wp_ref, bp_ref, out_ref,
                    num_heads=num_heads, win_block=win_block, n_masks=n_masks)


def _wattn_kernel_fused(x_ref, mb_ref, wqkv_ref, bq_ref, bv_ref,
                        wp_ref, bp_ref, out_ref, *, num_heads, win_block, n_masks):
    WB, N, C = x_ref.shape
    mxu_dtype = wqkv_ref.dtype
    x = x_ref[...].reshape(WB * N, C).astype(mxu_dtype)           # (M, C)

    # One (M,C)x(C,3C) MXU pass; slices land on 128-lane boundaries (C%128==0).
    qkv = jnp.dot(x, wqkv_ref[...], preferred_element_type=jnp.float32)
    q = qkv[:, :C] + bq_ref[...]
    k = qkv[:, C:2 * C]                    # K bias dropped (cancels in softmax)
    v = qkv[:, 2 * C:] + bv_ref[...]

    _attention_core(q, k, v, mb_ref, wp_ref, bp_ref, out_ref,
                    num_heads=num_heads, win_block=win_block, n_masks=n_masks)


# ----------------------------------------------------------------------------
# Per-generation tiling / VMEM policy.
#   v5e : 1 TC, 128 MiB VMEM (16 MiB default scoped), 4x128^2 MXU -> M >= 128.
#   v6e : 1 TC, 128 MiB VMEM, 2x256^2 MXU -> M >= 256, take the biggest block.
#   v7x : 2 TCs, 64 MiB VMEM -> M >= 256 under a tighter budget; keep the grid
#         even and >= 2 so both TensorCores stay busy.
# ----------------------------------------------------------------------------
_GEN_CFG = {
    "v5e":     dict(target_rows=128, vmem_limit=96 << 20,  min_grid=1, even_grid=False),
    "v6e":     dict(target_rows=256, vmem_limit=100 << 20, min_grid=1, even_grid=False),
    "v7x":     dict(target_rows=256, vmem_limit=48 << 20,  min_grid=2, even_grid=True),
    "unknown": dict(target_rows=256, vmem_limit=None,      min_grid=2, even_grid=True),
}


def _tpu_generation():
    try:
        kind = jax.devices()[0].device_kind.lower()
    except Exception:
        return "unknown"
    if "v5e" in kind or "v5 lite" in kind or "v5litepod" in kind:
        return "v5e"
    if "v6" in kind:
        return "v6e"
    if "v7" in kind:
        return "v7x"
    return "unknown"


def _vmem_bytes_estimate(WB, N, C, H, nW, x_itemsize, w_itemsize=2):
    """Rough per-grid-step VMEM footprint (double-buffered I/O + residents +
    main f32 intermediates) used to bound the block size."""
    M = WB * N
    f32 = 4
    io = 2 * 2 * WB * N * C * x_itemsize                     # x + out tiles, dbl-buffered
    weights = 2 * (4 * C * C * w_itemsize + 3 * C * f32)     # qkv + proj weights + biases
    mask_bias = 2 * H * nW * N * N * f32                     # resident mask+bias operand
    inter = 3 * M * C * f32 + 2 * WB * N * N * f32 + 2 * M * C * f32
    return io + weights + mask_bias + inter


def _pick_win_block(B_, N, C, H, nW, x_itemsize, cfg):
    """Windows per grid step: multiple of nW dividing B_, largest that fits the
    VMEM budget, preferring WB*N >= target_rows; on v7x keep grid >= 2 / even."""
    cands = [w for w in range(nW, B_ + 1, nW) if B_ % w == 0]
    budget = int(0.7 * (cfg["vmem_limit"] if cfg["vmem_limit"] else (32 << 20)))
    fits = [w for w in cands
            if _vmem_bytes_estimate(w, N, C, H, nW, x_itemsize) <= budget]
    if not fits:
        fits = [min(cands)]

    def grid_ok(w):
        g = B_ // w
        if g < cfg["min_grid"]:
            return False
        if cfg["even_grid"] and g % 2:
            return False
        return True

    pool = [w for w in fits if grid_ok(w)] or fits
    big = [w for w in pool if w * N >= cfg["target_rows"]]
    return max(big) if big else max(pool)


# ----------------------------------------------------------------------------
# One-time parameter transform for the kernel.
# ----------------------------------------------------------------------------
def prepare_kernel_params(params, *, num_heads, mxu_dtype=jnp.bfloat16):
    """Fold the qk scale into the q projection, drop the (redundant) k bias,
    fuse Q/K/V weights when C is a multiple of 128, store MXU weights in bf16
    (accumulation stays f32 in the kernel; biases stay f32)."""
    wq, bq, wkv, bkv, rel_bias, wp, bp = params
    C = wq.shape[0]
    scale = (C // num_heads) ** -0.5
    wq_s = wq * scale
    bq_s = bq * scale
    wk = wkv[:, :C]
    wv = wkv[:, C:]
    bv = bkv[:, C:]
    # bkv[:, :C] (the K bias) is intentionally dropped: q.bk is constant along
    # the softmax axis and cancels exactly in the max-subtracted softmax.
    kp = dict(
        bq=bq_s.astype(jnp.float32),
        bv=bv.astype(jnp.float32),
        rel_bias=rel_bias.astype(jnp.float32),
        wp=wp.astype(mxu_dtype),
        bp=bp.astype(jnp.float32),
    )
    if C % 128 == 0:
        kp["fused"] = True
        kp["wqkv"] = jnp.concatenate([wq_s, wk, wv], axis=1).astype(mxu_dtype)
    else:
        kp["fused"] = False
        kp["wq"] = wq_s.astype(mxu_dtype)
        kp["wk"] = wk.astype(mxu_dtype)
        kp["wv"] = wv.astype(mxu_dtype)
    return kp


# ----------------------------------------------------------------------------
# Wrapper
# ----------------------------------------------------------------------------
def window_attention(x, mask, kparams, *, num_heads, win_block=None):
    """x: (B_, N, C); mask: (nW, N, N) additive mask or None.

    NOTE: window w (global index within B_) is assumed to use mask[w % nW],
    i.e. the caller lays windows out batch-major / window-minor (standard
    Swin layout produced by window_partition)."""
    B_, N, C = x.shape
    H = num_heads
    if mask is None:
        mask = jnp.zeros((1, N, N), jnp.float32)
    nW = mask.shape[0]

    gen = _tpu_generation()
    cfg = _GEN_CFG[gen]
    if win_block is None:
        win_block = _pick_win_block(B_, N, C, H, nW, x.dtype.itemsize, cfg)
    WB = win_block
    assert B_ % WB == 0 and WB % nW == 0, (B_, WB, nW)

    # Pre-combine relative-position bias and shift-window mask once per call
    # (tiny (H, nW, N, N) op, outside the grid loop): collapses two in-kernel
    # adds into one and removes any per-step mask tiling.  Kept in f32; can be
    # stored bf16 for VMEM-constrained production configs (v7x / v5e).
    mask_bias = kparams["rel_bias"][:, None, :, :] + mask[None].astype(jnp.float32)

    fused = kparams["fused"]
    if fused:
        kernel = functools.partial(_wattn_kernel_fused, num_heads=H,
                                   win_block=WB, n_masks=nW)
        weight_args = (kparams["wqkv"], kparams["bq"], kparams["bv"],
                       kparams["wp"], kparams["bp"])
        weight_specs = [
            pl.BlockSpec((C, 3 * C), lambda b: (0, 0)),   # wqkv (scale folded)
            pl.BlockSpec((1, C), lambda b: (0, 0)),       # bq (scaled)
            pl.BlockSpec((1, C), lambda b: (0, 0)),       # bv
            pl.BlockSpec((C, C), lambda b: (0, 0)),       # wp
            pl.BlockSpec((1, C), lambda b: (0, 0)),       # bp
        ]
    else:
        kernel = functools.partial(_wattn_kernel_split, num_heads=H,
                                   win_block=WB, n_masks=nW)
        weight_args = (kparams["wq"], kparams["bq"], kparams["wk"],
                       kparams["wv"], kparams["bv"], kparams["wp"], kparams["bp"])
        weight_specs = [
            pl.BlockSpec((C, C), lambda b: (0, 0)),       # wq (scale folded)
            pl.BlockSpec((1, C), lambda b: (0, 0)),       # bq (scaled)
            pl.BlockSpec((C, C), lambda b: (0, 0)),       # wk (no bias: cancels)
            pl.BlockSpec((C, C), lambda b: (0, 0)),       # wv
            pl.BlockSpec((1, C), lambda b: (0, 0)),       # bv
            pl.BlockSpec((C, C), lambda b: (0, 0)),       # wp
            pl.BlockSpec((1, C), lambda b: (0, 0)),       # bp
        ]

    # Advisory cost estimate so XLA does not treat the custom call as free.
    hd = C // H
    M_total = B_ * N
    flops = 2 * M_total * 4 * C * C + 4 * B_ * H * N * N * hd
    transcendentals = B_ * H * N * N
    bytes_accessed = (2 * M_total * C * x.dtype.itemsize
                      + sum(int(np.prod(a.shape)) * a.dtype.itemsize
                            for a in weight_args)
                      + int(mask_bias.size) * 4)

    # TODO(synk): mark the constant-index operands (mask_bias, weights, biases)
    # with pipeline_mode=pl.Buffered(1) to reclaim their double-buffer VMEM on
    # v7x once single-buffered pipeline_mode is validated on the target jax.
    out = pl.pallas_call(
        kernel,
        out_shape=jax.ShapeDtypeStruct((B_, N, C), x.dtype),
        grid_spec=pltpu.PrefetchScalarGridSpec(
            num_scalar_prefetch=0,
            grid=(B_ // WB,),
            in_specs=[
                pl.BlockSpec((WB, N, C), lambda b: (b, 0, 0)),        # x (WB windows)
                pl.BlockSpec((H, nW, N, N), lambda b: (0, 0, 0, 0)),  # bias+mask (resident)
            ] + weight_specs,
            out_specs=pl.BlockSpec((WB, N, C), lambda b: (b, 0, 0)),
        ),
        compiler_params=pltpu.CompilerParams(
            dimension_semantics=("parallel",),
            vmem_limit_bytes=cfg["vmem_limit"]),
        cost_estimate=pl.CostEstimate(flops=int(flops),
                                      transcendentals=int(transcendentals),
                                      bytes_accessed=int(bytes_accessed)),
    )(x, mask_bias, *weight_args)
    return out


# ----------------------------------------------------------------------------
# Parameter / buffer construction (deterministic, matches torch __init__ shapes)
# ----------------------------------------------------------------------------
def make_relative_position_index(win_size):
    wh, ww = win_size
    coords_h = np.arange(wh)
    coords_w = np.arange(ww)
    coords = np.stack(np.meshgrid(coords_h, coords_w, indexing="ij"))   # (2, wh, ww)
    coords_flatten = coords.reshape(2, -1)                              # (2, N)
    relative_coords = coords_flatten[:, :, None] - coords_flatten[:, None, :]
    relative_coords = relative_coords.transpose(1, 2, 0)                # (N, N, 2)
    relative_coords[:, :, 0] += wh - 1
    relative_coords[:, :, 1] += ww - 1
    relative_coords[:, :, 0] *= 2 * ww - 1
    return relative_coords.sum(-1)                                      # (N, N)


def init_params(key, dim, win_size, num_heads):
    wh, ww = win_size
    N = wh * ww
    ks = jax.random.split(key, 7)
    # torch nn.Linear weights are (out, in); we store transposed (in, out).
    wq = jax.random.normal(ks[0], (dim, dim), jnp.float32) * 0.05
    bq = jax.random.normal(ks[1], (1, dim), jnp.float32) * 0.05
    wkv = jax.random.normal(ks[2], (dim, 2 * dim), jnp.float32) * 0.05
    bkv = jax.random.normal(ks[3], (1, 2 * dim), jnp.float32) * 0.05
    wp = jax.random.normal(ks[4], (dim, dim), jnp.float32) * 0.05
    bp = jax.random.normal(ks[5], (1, dim), jnp.float32) * 0.05
    # trunc_normal_(std=0.02) -> deterministic normal*0.02 clipped to +-2 std.
    table = jnp.clip(
        jax.random.normal(ks[6], ((2 * wh - 1) * (2 * ww - 1), num_heads), jnp.float32) * 0.02,
        -0.04, 0.04)

    # Gather relative position bias: (N*N,) index into table -> (H, N, N)
    rel_idx = jnp.asarray(make_relative_position_index(win_size).reshape(-1))  # (N*N,)
    rel_bias = table[rel_idx].reshape(N, N, num_heads).transpose(2, 0, 1)      # (H, N, N)

    return (wq, bq, wkv, bkv, rel_bias, wp, bp)


# ----------------------------------------------------------------------------
# Pure-JAX reference (mirrors the torch forward) for a correctness check.
# ----------------------------------------------------------------------------
def reference(x, mask, params, *, num_heads):
    B_, N, C = x.shape
    hd = C // num_heads
    scale = hd ** -0.5
    wq, bq, wkv, bkv, rel_bias, wp, bp = params

    q = (x @ wq + bq).reshape(B_, N, num_heads, hd).transpose(0, 2, 1, 3)      # (B,H,N,hd)
    kv = (x @ wkv + bkv).reshape(B_, N, 2, num_heads, hd).transpose(2, 0, 3, 1, 4)
    k, v = kv[0], kv[1]                                                        # (B,H,N,hd)

    attn = (q * scale) @ jnp.swapaxes(k, -2, -1)                               # (B,H,N,N)
    attn = attn + rel_bias[None]
    nW = mask.shape[0]
    attn = attn.reshape(B_ // nW, nW, num_heads, N, N) + mask[None, :, None]
    attn = attn.reshape(B_, num_heads, N, N)
    attn = jax.nn.softmax(attn, axis=-1)
    out = (attn @ v).transpose(0, 2, 1, 3).reshape(B_, N, C)
    return out @ wp + bp


if __name__ == "__main__":
    # Small shapes consistent with the module (enough windows to batch >=8/step).
    dim = 32
    num_heads = 4
    win_size = (4, 4)
    N = win_size[0] * win_size[1]      # 16 tokens per window
    nW = 4                             # shift-window masks per image
    batch_groups = 4
    B_ = batch_groups * nW             # 16 total windows

    key = jax.random.PRNGKey(0)
    kx, kmask, kparam = jax.random.split(key, 3)

    x = jax.random.normal(kx, (B_, N, dim), jnp.float32)
    # additive shift-window style mask: (nW, N, N) with 0 / -100 entries
    raw = jax.random.uniform(kmask, (nW, N, N))
    mask = jnp.where(raw > 0.8, jnp.float32(-100.0), jnp.float32(0.0))

    params = init_params(kparam, dim, win_size, num_heads)
    kparams = prepare_kernel_params(params, num_heads=num_heads)

    out = window_attention(x, mask, kparams, num_heads=num_heads)
    out = jax.block_until_ready(out)

    ref = reference(x, mask, params, num_heads=num_heads)
    assert out.shape == (B_, N, dim)
    # bf16 MXU operands + approx reciprocal in the kernel -> loosened tolerance
    # (accumulation and softmax are f32; dropping bk is exact).
    err = float(jnp.max(jnp.abs(out - ref)))
    assert err < 3e-2, err

    print("KERNEL_OK")
</pallas_src>

<mosaic_0001>
module attributes {stable_mosaic.version = 11 : i64} {
  func.func @_wattn_kernel_split(%arg0: i32, %arg1: memref<8x16x32xf32, #tpu.memory_space<vmem>>, %arg2: memref<4x4x16x16xf32, #tpu.memory_space<vmem>>, %arg3: memref<32x32xbf16, #tpu.memory_space<vmem>>, %arg4: memref<1x32xf32, #tpu.memory_space<vmem>>, %arg5: memref<32x32xbf16, #tpu.memory_space<vmem>>, %arg6: memref<32x32xbf16, #tpu.memory_space<vmem>>, %arg7: memref<1x32xf32, #tpu.memory_space<vmem>>, %arg8: memref<32x32xbf16, #tpu.memory_space<vmem>>, %arg9: memref<1x32xf32, #tpu.memory_space<vmem>>, %arg10: memref<8x16x32xf32, #tpu.memory_space<vmem>>) attributes {dimension_semantics = [#tpu.dimension_semantics<parallel>], iteration_bounds = array<i64: 2>, scalar_prefetch = 0 : i64, scratch_operands = 0 : i64, tpu.core_type = #tpu.core_type<tc>, window_params = [{transform_indices = @transform_0, window_bounds = array<i64: 8, 16, 32>}, {pipeline_mode = #tpu.pipeline_mode<synchronous>, transform_indices = @transform_1, window_bounds = array<i64: 4, 4, 16, 16>}, {pipeline_mode = #tpu.pipeline_mode<synchronous>, transform_indices = @transform_2, window_bounds = array<i64: 32, 32>}, {pipeline_mode = #tpu.pipeline_mode<synchronous>, transform_indices = @transform_3, window_bounds = array<i64: 1, 32>}, {pipeline_mode = #tpu.pipeline_mode<synchronous>, transform_indices = @transform_4, window_bounds = array<i64: 32, 32>}, {pipeline_mode = #tpu.pipeline_mode<synchronous>, transform_indices = @transform_5, window_bounds = array<i64: 32, 32>}, {pipeline_mode = #tpu.pipeline_mode<synchronous>, transform_indices = @transform_6, window_bounds = array<i64: 1, 32>}, {pipeline_mode = #tpu.pipeline_mode<synchronous>, transform_indices = @transform_7, window_bounds = array<i64: 32, 32>}, {pipeline_mode = #tpu.pipeline_mode<synchronous>, transform_indices = @transform_8, window_bounds = array<i64: 1, 32>}, {transform_indices = @transform_9, window_bounds = array<i64: 8, 16, 32>}]} {
    %c0 = arith.constant 0 : index
    %c0_0 = arith.constant 0 : index
    %c0_1 = arith.constant 0 : index
    %0 = vector.load %arg1[%c0, %c0_0, %c0_1] : memref<8x16x32xf32, #tpu.memory_space<vmem>>, vector<8x16x32xf32>
    %1 = vector.shape_cast %0 : vector<8x16x32xf32> to vector<128x32xf32>
    %2 = arith.truncf %1 : vector<128x32xf32> to vector<128x32xbf16>
    %c0_2 = arith.constant 0 : index
    %c0_3 = arith.constant 0 : index
    %3 = vector.load %arg3[%c0_2, %c0_3] : memref<32x32xbf16, #tpu.memory_space<vmem>>, vector<32x32xbf16>
    %cst = arith.constant dense<0.000000e+00> : vector<128x32xf32>
    %4 = tpu.matmul %2, %3, %cst {dimension_numbers = #tpu.dot_dimension_numbers<[1], [0], [0], [1], [0, 0, 1, 1], [], []>} : vector<128x32xbf16>, vector<32x32xbf16>, vector<128x32xf32> -> vector<128x32xf32>
    %c0_4 = arith.constant 0 : index
    %c0_5 = arith.constant 0 : index
    %5 = vector.load %arg4[%c0_4, %c0_5] : memref<1x32xf32, #tpu.memory_space<vmem>>, vector<1x32xf32>
    %6 = vector.broadcast %5 : vector<1x32xf32> to vector<128x32xf32>
    %7 = arith.addf %4, %6 : vector<128x32xf32>
    %c0_6 = arith.constant 0 : index
    %c0_7 = arith.constant 0 : index
    %8 = vector.load %arg5[%c0_6, %c0_7] : memref<32x32xbf16, #tpu.memory_space<vmem>>, vector<32x32xbf16>
    %cst_8 = arith.constant dense<0.000000e+00> : vector<128x32xf32>
    %9 = tpu.matmul %2, %8, %cst_8 {dimension_numbers = #tpu.dot_dimension_numbers<[1], [0], [0], [1], [0, 0, 1, 1], [], []>} : vector<128x32xbf16>, vector<32x32xbf16>, vector<128x32xf32> -> vector<128x32xf32>
    %c0_9 = arith.constant 0 : index
    %c0_10 = arith.constant 0 : index
    %10 = vector.load %arg6[%c0_9, %c0_10] : memref<32x32xbf16, #tpu.memory_space<vmem>>, vector<32x32xbf16>
    %cst_11 = arith.constant dense<0.000000e+00> : vector<128x32xf32>
    %11 = tpu.matmul %2, %10, %cst_11 {dimension_numbers = #tpu.dot_dimension_numbers<[1], [0], [0], [1], [0, 0, 1, 1], [], []>} : vector<128x32xbf16>, vector<32x32xbf16>, vector<128x32xf32> -> vector<128x32xf32>
    %c0_12 = arith.constant 0 : index
    %c0_13 = arith.constant 0 : index
    %12 = vector.load %arg7[%c0_12, %c0_13] : memref<1x32xf32, #tpu.memory_space<vmem>>, vector<1x32xf32>
    %13 = vector.broadcast %12 : vector<1x32xf32> to vector<128x32xf32>
    %14 = arith.addf %11, %13 : vector<128x32xf32>
    %15 = vector.extract_strided_slice %7 {offsets = [0, 0], sizes = [128, 8], strides = [1, 1]} : vector<128x32xf32> to vector<128x8xf32>
    %16 = vector.shape_cast %15 : vector<128x8xf32> to vector<8x16x8xf32>
    %17 = arith.truncf %16 : vector<8x16x8xf32> to vector<8x16x8xbf16>
    %18 = vector.extract_strided_slice %9 {offsets = [0, 0], sizes = [128, 8], strides = [1, 1]} : vector<128x32xf32> to vector<128x8xf32>
    %19 = vector.shape_cast %18 : vector<128x8xf32> to vector<8x16x8xf32>
    %20 = arith.truncf %19 : vector<8x16x8xf32> to vector<8x16x8xbf16>
    %21 = vector.extract_strided_slice %14 {offsets = [0, 0], sizes = [128, 8], strides = [1, 1]} : vector<128x32xf32> to vector<128x8xf32>
    %22 = vector.shape_cast %21 : vector<128x8xf32> to vector<8x16x8xf32>
    %23 = arith.truncf %22 : vector<8x16x8xf32> to vector<8x16x8xbf16>
    "tpu.trace_start"() <{level = 10 : i32, message = "bqd,bkd->bqk"}> : () -> ()
    %cst_14 = arith.constant dense<0.000000e+00> : vector<8x16x16xf32>
    %24 = tpu.matmul %17, %20, %cst_14 {dimension_numbers = #tpu.dot_dimension_numbers<[2], [2], [1], [1], [0, 0, 0, 1, 1, 1], [0], [0]>} : vector<8x16x8xbf16>, vector<8x16x8xbf16>, vector<8x16x16xf32> -> vector<8x16x16xf32>
    "tpu.trace_stop"() : () -> ()
    %25 = vector.shape_cast %24 : vector<8x16x16xf32> to vector<2x4x16x16xf32>
    %c0_15 = arith.constant 0 : index
    %c0_16 = arith.constant 0 : index
    %c0_17 = arith.constant 0 : index
    %c0_18 = arith.constant 0 : index
    %26 = vector.load %arg2[%c0_15, %c0_16, %c0_17, %c0_18] : memref<4x4x16x16xf32, #tpu.memory_space<vmem>>, vector<1x4x16x16xf32>
    %27 = vector.shape_cast %26 : vector<1x4x16x16xf32> to vector<4x16x16xf32>
    %28 = vector.shape_cast %27 : vector<4x16x16xf32> to vector<1x4x16x16xf32>
    %29 = vector.broadcast %28 : vector<1x4x16x16xf32> to vector<2x4x16x16xf32>
    %30 = arith.addf %25, %29 : vector<2x4x16x16xf32>
    %31 = vector.shape_cast %30 : vector<2x4x16x16xf32> to vector<8x16x16xf32>
    %cst_19 = arith.constant dense<0xFF800000> : vector<8x16xf32>
    %32 = vector.multi_reduction <maximumf>, %31, %cst_19 [2] : vector<8x16x16xf32> to vector<8x16xf32>
    %33 = vector.shape_cast %32 : vector<8x16xf32> to vector<8x16x1xf32>
    %34 = vector.broadcast %33 : vector<8x16x1xf32> to vector<8x16x16xf32>
    %35 = arith.subf %31, %34 : vector<8x16x16xf32>
    %36 = math.exp %35 : vector<8x16x16xf32>
    %cst_20 = arith.constant dense<0.000000e+00> : vector<8x16xf32>
    %37 = vector.multi_reduction <add>, %36, %cst_20 [2] : vector<8x16x16xf32> to vector<8x16xf32>
    %38 = vector.shape_cast %37 : vector<8x16xf32> to vector<8x16x1xf32>
    %39 = tpu.reciprocal %38 {approx = true} : vector<8x16x1xf32> -> vector<8x16x1xf32>
    %40 = vector.broadcast %39 : vector<8x16x1xf32> to vector<8x16x16xf32>
    %41 = arith.mulf %36, %40 : vector<8x16x16xf32>
    %42 = arith.truncf %41 : vector<8x16x16xf32> to vector<8x16x16xbf16>
    "tpu.trace_start"() <{level = 10 : i32, message = "bqk,bkd->bqd"}> : () -> ()
    %cst_21 = arith.constant dense<0.000000e+00> : vector<8x16x8xf32>
    %43 = tpu.matmul %42, %23, %cst_21 {dimension_numbers = #tpu.dot_dimension_numbers<[2], [1], [1], [2], [0, 0, 0, 1, 1, 2], [0], [0]>} : vector<8x16x16xbf16>, vector<8x16x8xbf16>, vector<8x16x8xf32> -> vector<8x16x8xf32>
    "tpu.trace_stop"() : () -> ()
    %44 = vector.shape_cast %43 : vector<8x16x8xf32> to vector<128x8xf32>
    %45 = arith.truncf %44 : vector<128x8xf32> to vector<128x8xbf16>
    %c0_22 = arith.constant 0 : index
    %c0_23 = arith.constant 0 : index
    %46 = vector.load %arg8[%c0_22, %c0_23] : memref<32x32xbf16, #tpu.memory_space<vmem>>, vector<8x32xbf16>
    %cst_24 = arith.constant dense<0.000000e+00> : vector<128x32xf32>
    %47 = tpu.matmul %45, %46, %cst_24 {dimension_numbers = #tpu.dot_dimension_numbers<[1], [0], [0], [1], [0, 0, 1, 1], [], []>} : vector<128x8xbf16>, vector<8x32xbf16>, vector<128x32xf32> -> vector<128x32xf32>
    %48 = vector.extract_strided_slice %7 {offsets = [0, 8], sizes = [128, 8], strides = [1, 1]} : vector<128x32xf32> to vector<128x8xf32>
    %49 = vector.shape_cast %48 : vector<128x8xf32> to vector<8x16x8xf32>
    %50 = arith.truncf %49 : vector<8x16x8xf32> to vector<8x16x8xbf16>
    %51 = vector.extract_strided_slice %9 {offsets = [0, 8], sizes = [128, 8], strides = [1, 1]} : vector<128x32xf32> to vector<128x8xf32>
    %52 = vector.shape_cast %51 : vector<128x8xf32> to vector<8x16x8xf32>
    %53 = arith.truncf %52 : vector<8x16x8xf32> to vector<8x16x8xbf16>
    %54 = vector.extract_strided_slice %14 {offsets = [0, 8], sizes = [128, 8], strides = [1, 1]} : vector<128x32xf32> to vector<128x8xf32>
    %55 = vector.shape_cast %54 : vector<128x8xf32> to vector<8x16x8xf32>
    %56 = arith.truncf %55 : vector<8x16x8xf32> to vector<8x16x8xbf16>
    "tpu.trace_start"() <{level = 10 : i32, message = "bqd,bkd->bqk"}> : () -> ()
    %cst_25 = arith.constant dense<0.000000e+00> : vector<8x16x16xf32>
    %57 = tpu.matmul %50, %53, %cst_25 {dimension_numbers = #tpu.dot_dimension_numbers<[2], [2], [1], [1], [0, 0, 0, 1, 1, 1], [0], [0]>} : vector<8x16x8xbf16>, vector<8x16x8xbf16>, vector<8x16x16xf32> -> vector<8x16x16xf32>
    "tpu.trace_stop"() : () -> ()
    %58 = vector.shape_cast %57 : vector<8x16x16xf32> to vector<2x4x16x16xf32>
    %c1 = arith.constant 1 : index
    %c0_26 = arith.constant 0 : index
    %c0_27 = arith.constant 0 : index
    %c0_28 = arith.constant 0 : index
    %59 = vector.load %arg2[%c1, %c0_26, %c0_27, %c0_28] : memref<4x4x16x16xf32, #tpu.memory_space<vmem>>, vector<1x4x16x16xf32>
    %60 = vector.shape_cast %59 : vector<1x4x16x16xf32> to vector<4x16x16xf32>
    %61 = vector.shape_cast %60 : vector<4x16x16xf32> to vector<1x4x16x16xf32>
    %62 = vector.broadcast %61 : vector<1x4x16x16xf32> to vector<2x4x16x16xf32>
    %63 = arith.addf %58, %62 : vector<2x4x16x16xf32>
    %64 = vector.shape_cast %63 : vector<2x4x16x16xf32> to vector<8x16x16xf32>
    %cst_29 = arith.constant dense<0xFF800000> : vector<8x16xf32>
    %65 = vector.multi_reduction <maximumf>, %64, %cst_29 [2] : vector<8x16x16xf32> to vector<8x16xf32>
    %66 = vector.shape_cast %65 : vector<8x16xf32> to vector<8x16x1xf32>
    %67 = vector.broadcast %66 : vector<8x16x1xf32> to vector<8x16x16xf32>
    %68 = arith.subf %64, %67 : vector<8x16x16xf32>
    %69 = math.exp %68 : vector<8x16x16xf32>
    %cst_30 = arith.constant dense<0.000000e+00> : vector<8x16xf32>
    %70 = vector.multi_reduction <add>, %69, %cst_30 [2] : vector<8x16x16xf32> to vector<8x16xf32>
    %71 = vector.shape_cast %70 : vector<8x16xf32> to vector<8x16x1xf32>
    %72 = tpu.reciprocal %71 {approx = true} : vector<8x16x1xf32> -> vector<8x16x1xf32>
    %73 = vector.broadcast %72 : vector<8x16x1xf32> to vector<8x16x16xf32>
    %74 = arith.mulf %69, %73 : vector<8x16x16xf32>
    %75 = arith.truncf %74 : vector<8x16x16xf32> to vector<8x16x16xbf16>
    "tpu.trace_start"() <{level = 10 : i32, message = "bqk,bkd->bqd"}> : () -> ()
    %cst_31 = arith.constant dense<0.000000e+00> : vector<8x16x8xf32>
    %76 = tpu.matmul %75, %56, %cst_31 {dimension_numbers = #tpu.dot_dimension_numbers<[2], [1], [1], [2], [0, 0, 0, 1, 1, 2], [0], [0]>} : vector<8x16x16xbf16>, vector<8x16x8xbf16>, vector<8x16x8xf32> -> vector<8x16x8xf32>
    "tpu.trace_stop"() : () -> ()
    %77 = vector.shape_cast %76 : vector<8x16x8xf32> to vector<128x8xf32>
    %78 = arith.truncf %77 : vector<128x8xf32> to vector<128x8xbf16>
    %c8 = arith.constant 8 : index
    %c0_32 = arith.constant 0 : index
    %79 = vector.load %arg8[%c8, %c0_32] : memref<32x32xbf16, #tpu.memory_space<vmem>>, vector<8x32xbf16>
    %cst_33 = arith.constant dense<0.000000e+00> : vector<128x32xf32>
    %80 = tpu.matmul %78, %79, %cst_33 {dimension_numbers = #tpu.dot_dimension_numbers<[1], [0], [0], [1], [0, 0, 1, 1], [], []>} : vector<128x8xbf16>, vector<8x32xbf16>, vector<128x32xf32> -> vector<128x32xf32>
    %81 = arith.addf %47, %80 : vector<128x32xf32>
    %82 = vector.extract_strided_slice %7 {offsets = [0, 16], sizes = [128, 8], strides = [1, 1]} : vector<128x32xf32> to vector<128x8xf32>
    %83 = vector.shape_cast %82 : vector<128x8xf32> to vector<8x16x8xf32>
    %84 = arith.truncf %83 : vector<8x16x8xf32> to vector<8x16x8xbf16>
    %85 = vector.extract_strided_slice %9 {offsets = [0, 16], sizes = [128, 8], strides = [1, 1]} : vector<128x32xf32> to vector<128x8xf32>
    %86 = vector.shape_cast %85 : vector<128x8xf32> to vector<8x16x8xf32>
    %87 = arith.truncf %86 : vector<8x16x8xf32> to vector<8x16x8xbf16>
    %88 = vector.extract_strided_slice %14 {offsets = [0, 16], sizes = [128, 8], strides = [1, 1]} : vector<128x32xf32> to vector<128x8xf32>
    %89 = vector.shape_cast %88 : vector<128x8xf32> to vector<8x16x8xf32>
    %90 = arith.truncf %89 : vector<8x16x8xf32> to vector<8x16x8xbf16>
    "tpu.trace_start"() <{level = 10 : i32, message = "bqd,bkd->bqk"}> : () -> ()
    %cst_34 = arith.constant dense<0.000000e+00> : vector<8x16x16xf32>
    %91 = tpu.matmul %84, %87, %cst_34 {dimension_numbers = #tpu.dot_dimension_numbers<[2], [2], [1], [1], [0, 0, 0, 1, 1, 1], [0], [0]>} : vector<8x16x8xbf16>, vector<8x16x8xbf16>, vector<8x16x16xf32> -> vector<8x16x16xf32>
    "tpu.trace_stop"() : () -> ()
    %92 = vector.shape_cast %91 : vector<8x16x16xf32> to vector<2x4x16x16xf32>
    %c2 = arith.constant 2 : index
    %c0_35 = arith.constant 0 : index
    %c0_36 = arith.constant 0 : index
    %c0_37 = arith.constant 0 : index
    %93 = vector.load %arg2[%c2, %c0_35, %c0_36, %c0_37] : memref<4x4x16x16xf32, #tpu.memory_space<vmem>>, vector<1x4x16x16xf32>
    %94 = vector.shape_cast %93 : vector<1x4x16x16xf32> to vector<4x16x16xf32>
    %95 = vector.shape_cast %94 : vector<4x16x16xf32> to vector<1x4x16x16xf32>
    %96 = vector.broadcast %95 : vector<1x4x16x16xf32> to vector<2x4x16x16xf32>
    %97 = arith.addf %92, %96 : vector<2x4x16x16xf32>
    %98 = vector.shape_cast %97 : vector<2x4x16x16xf32> to vector<8x16x16xf32>
    %cst_38 = arith.constant dense<0xFF800000> : vector<8x16xf32>
    %99 = vector.multi_reduction <maximumf>, %98, %cst_38 [2] : vector<8x16x16xf32> to vector<8x16xf32>
    %100 = vector.shape_cast %99 : vector<8x16xf32> to vector<8x16x1xf32>
    %101 = vector.broadcast %100 : vector<8x16x1xf32> to vector<8x16x16xf32>
    %102 = arith.subf %98, %101 : vector<8x16x16xf32>
    %103 = math.exp %102 : vector<8x16x16xf32>
    %cst_39 = arith.constant dense<0.000000e+00> : vector<8x16xf32>
    %104 = vector.multi_reduction <add>, %103, %cst_39 [2] : vector<8x16x16xf32> to vector<8x16xf32>
    %105 = vector.shape_cast %104 : vector<8x16xf32> to vector<8x16x1xf32>
    %106 = tpu.reciprocal %105 {approx = true} : vector<8x16x1xf32> -> vector<8x16x1xf32>
    %107 = vector.broadcast %106 : vector<8x16x1xf32> to vector<8x16x16xf32>
    %108 = arith.mulf %103, %107 : vector<8x16x16xf32>
    %109 = arith.truncf %108 : vector<8x16x16xf32> to vector<8x16x16xbf16>
    "tpu.trace_start"() <{level = 10 : i32, message = "bqk,bkd->bqd"}> : () -> ()
    %cst_40 = arith.constant dense<0.000000e+00> : vector<8x16x8xf32>
    %110 = tpu.matmul %109, %90, %cst_40 {dimension_numbers = #tpu.dot_dimension_numbers<[2], [1], [1], [2], [0, 0, 0, 1, 1, 2], [0], [0]>} : vector<8x16x16xbf16>, vector<8x16x8xbf16>, vector<8x16x8xf32> -> vector<8x16x8xf32>
    "tpu.trace_stop"() : () -> ()
    %111 = vector.shape_cast %110 : vector<8x16x8xf32> to vector<128x8xf32>
    %112 = arith.truncf %111 : vector<128x8xf32> to vector<128x8xbf16>
    %c16 = arith.constant 16 : index
    %c0_41 = arith.constant 0 : index
    %113 = vector.load %arg8[%c16, %c0_41] : memref<32x32xbf16, #tpu.memory_space<vmem>>, vector<8x32xbf16>
    %cst_42 = arith.constant dense<0.000000e+00> : vector<128x32xf32>
    %114 = tpu.matmul %112, %113, %cst_42 {dimension_numbers = #tpu.dot_dimension_numbers<[1], [0], [0], [1], [0, 0, 1, 1], [], []>} : vector<128x8xbf16>, vector<8x32xbf16>, vector<128x32xf32> -> vector<128x32xf32>
    %115 = arith.addf %81, %114 : vector<128x32xf32>
    %116 = vector.extract_strided_slice %7 {offsets = [0, 24], sizes = [128, 8], strides = [1, 1]} : vector<128x32xf32> to vector<128x8xf32>
    %117 = vector.shape_cast %116 : vector<128x8xf32> to vector<8x16x8xf32>
    %118 = arith.truncf %117 : vector<8x16x8xf32> to vector<8x16x8xbf16>
    %119 = vector.extract_strided_slice %9 {offsets = [0, 24], sizes = [128, 8], strides = [1, 1]} : vector<128x32xf32> to vector<128x8xf32>
    %120 = vector.shape_cast %119 : vector<128x8xf32> to vector<8x16x8xf32>
    %121 = arith.truncf %120 : vector<8x16x8xf32> to vector<8x16x8xbf16>
    %122 = vector.extract_strided_slice %14 {offsets = [0, 24], sizes = [128, 8], strides = [1, 1]} : vector<128x32xf32> to vector<128x8xf32>
    %123 = vector.shape_cast %122 : vector<128x8xf32> to vector<8x16x8xf32>
    %124 = arith.truncf %123 : vector<8x16x8xf32> to vector<8x16x8xbf16>
    "tpu.trace_start"() <{level = 10 : i32, message = "bqd,bkd->bqk"}> : () -> ()
    %cst_43 = arith.constant dense<0.000000e+00> : vector<8x16x16xf32>
    %125 = tpu.matmul %118, %121, %cst_43 {dimension_numbers = #tpu.dot_dimension_numbers<[2], [2], [1], [1], [0, 0, 0, 1, 1, 1], [0], [0]>} : vector<8x16x8xbf16>, vector<8x16x8xbf16>, vector<8x16x16xf32> -> vector<8x16x16xf32>
    "tpu.trace_stop"() : () -> ()
    %126 = vector.shape_cast %125 : vector<8x16x16xf32> to vector<2x4x16x16xf32>
    %c3 = arith.constant 3 : index
    %c0_44 = arith.constant 0 : index
    %c0_45 = arith.constant 0 : index
    %c0_46 = arith.constant 0 : index
    %127 = vector.load %arg2[%c3, %c0_44, %c0_45, %c0_46] : memref<4x4x16x16xf32, #tpu.memory_space<vmem>>, vector<1x4x16x16xf32>
    %128 = vector.shape_cast %127 : vector<1x4x16x16xf32> to vector<4x16x16xf32>
    %129 = vector.shape_cast %128 : vector<4x16x16xf32> to vector<1x4x16x16xf32>
    %130 = vector.broadcast %129 : vector<1x4x16x16xf32> to vector<2x4x16x16xf32>
    %131 = arith.addf %126, %130 : vector<2x4x16x16xf32>
    %132 = vector.shape_cast %131 : vector<2x4x16x16xf32> to vector<8x16x16xf32>
    %cst_47 = arith.constant dense<0xFF800000> : vector<8x16xf32>
    %133 = vector.multi_reduction <maximumf>, %132, %cst_47 [2] : vector<8x16x16xf32> to vector<8x16xf32>
    %134 = vector.shape_cast %133 : vector<8x16xf32> to vector<8x16x1xf32>
    %135 = vector.broadcast %134 : vector<8x16x1xf32> to vector<8x16x16xf32>
    %136 = arith.subf %132, %135 : vector<8x16x16xf32>
    %137 = math.exp %136 : vector<8x16x16xf32>
    %cst_48 = arith.constant dense<0.000000e+00> : vector<8x16xf32>
    %138 = vector.multi_reduction <add>, %137, %cst_48 [2] : vector<8x16x16xf32> to vector<8x16xf32>
    %139 = vector.shape_cast %138 : vector<8x16xf32> to vector<8x16x1xf32>
    %140 = tpu.reciprocal %139 {approx = true} : vector<8x16x1xf32> -> vector<8x16x1xf32>
    %141 = vector.broadcast %140 : vector<8x16x1xf32> to vector<8x16x16xf32>
    %142 = arith.mulf %137, %141 : vector<8x16x16xf32>
    %143 = arith.truncf %142 : vector<8x16x16xf32> to vector<8x16x16xbf16>
    "tpu.trace_start"() <{level = 10 : i32, message = "bqk,bkd->bqd"}> : () -> ()
    %cst_49 = arith.constant dense<0.000000e+00> : vector<8x16x8xf32>
    %144 = tpu.matmul %143, %124, %cst_49 {dimension_numbers = #tpu.dot_dimension_numbers<[2], [1], [1], [2], [0, 0, 0, 1, 1, 2], [0], [0]>} : vector<8x16x16xbf16>, vector<8x16x8xbf16>, vector<8x16x8xf32> -> vector<8x16x8xf32>
    "tpu.trace_stop"() : () -> ()
    %145 = vector.shape_cast %144 : vector<8x16x8xf32> to vector<128x8xf32>
    %146 = arith.truncf %145 : vector<128x8xf32> to vector<128x8xbf16>
    %c24 = arith.constant 24 : index
    %c0_50 = arith.constant 0 : index
    %147 = vector.load %arg8[%c24, %c0_50] : memref<32x32xbf16, #tpu.memory_space<vmem>>, vector<8x32xbf16>
    %cst_51 = arith.constant dense<0.000000e+00> : vector<128x32xf32>
    %148 = tpu.matmul %146, %147, %cst_51 {dimension_numbers = #tpu.dot_dimension_numbers<[1], [0], [0], [1], [0, 0, 1, 1], [], []>} : vector<128x8xbf16>, vector<8x32xbf16>, vector<128x32xf32> -> vector<128x32xf32>
    %149 = arith.addf %115, %148 : vector<128x32xf32>
    %c0_52 = arith.constant 0 : index
    %c0_53 = arith.constant 0 : index
    %150 = vector.load %arg9[%c0_52, %c0_53] : memref<1x32xf32, #tpu.memory_space<vmem>>, vector<1x32xf32>
    %151 = vector.broadcast %150 : vector<1x32xf32> to vector<128x32xf32>
    %152 = arith.addf %149, %151 : vector<128x32xf32>
    %153 = vector.shape_cast %152 : vector<128x32xf32> to vector<8x16x32xf32>
    %c0_54 = arith.constant 0 : index
    %c0_55 = arith.constant 0 : index
    %c0_56 = arith.constant 0 : index
    %154 = vector.load %arg10[%c0_54, %c0_55, %c0_56] : memref<8x16x32xf32, #tpu.memory_space<vmem>>, vector<8x16x32xf32>
    tpu.vector_store %arg10[%c0_54, %c0_55, %c0_56], %153 {strides = array<i32>} : memref<8x16x32xf32, #tpu.memory_space<vmem>>, vector<8x16x32xf32>,
    return
  }
  func.func @transform_0(%arg0: i32) -> (i32, i32, i32) {
    %c0_i32 = arith.constant 0 : i32
    %c0_i32_0 = arith.constant 0 : i32
    %c0_i32_1 = arith.constant 0 : i32
    return %arg0, %c0_i32, %c0_i32_0 : i32, i32, i32
  }
  func.func @transform_1(%arg0: i32) -> (i32, i32, i32, i32) {
    %c0_i32 = arith.constant 0 : i32
    %c0_i32_0 = arith.constant 0 : i32
    %c0_i32_1 = arith.constant 0 : i32
    %c0_i32_2 = arith.constant 0 : i32
    %c0_i32_3 = arith.constant 0 : i32
    return %c0_i32, %c0_i32_0, %c0_i32_1, %c0_i32_2 : i32, i32, i32, i32
  }
  func.func @transform_2(%arg0: i32) -> (i32, i32) {
    %c0_i32 = arith.constant 0 : i32
    %c0_i32_0 = arith.constant 0 : i32
    %c0_i32_1 = arith.constant 0 : i32
    return %c0_i32, %c0_i32_0 : i32, i32
  }
  func.func @transform_3(%arg0: i32) -> (i32, i32) {
    %c0_i32 = arith.constant 0 : i32
    %c0_i32_0 = arith.constant 0 : i32
    %c0_i32_1 = arith.constant 0 : i32
    return %c0_i32, %c0_i32_0 : i32, i32
  }
  func.func @transform_4(%arg0: i32) -> (i32, i32) {
    %c0_i32 = arith.constant 0 : i32
    %c0_i32_0 = arith.constant 0 : i32
    %c0_i32_1 = arith.constant 0 : i32
    return %c0_i32, %c0_i32_0 : i32, i32
  }
  func.func @transform_5(%arg0: i32) -> (i32, i32) {
    %c0_i32 = arith.constant 0 : i32
    %c0_i32_0 = arith.constant 0 : i32
    %c0_i32_1 = arith.constant 0 : i32
    return %c0_i32, %c0_i32_0 : i32, i32
  }
  func.func @transform_6(%arg0: i32) -> (i32, i32) {
    %c0_i32 = arith.constant 0 : i32
    %c0_i32_0 = arith.constant 0 : i32
    %c0_i32_1 = arith.constant 0 : i32
    return %c0_i32, %c0_i32_0 : i32, i32
  }
  func.func @transform_7(%arg0: i32) -> (i32, i32) {
    %c0_i32 = arith.constant 0 : i32
    %c0_i32_0 = arith.constant 0 : i32
    %c0_i32_1 = arith.constant 0 : i32
    return %c0_i32, %c0_i32_0 : i32, i32
  }
  func.func @transform_8(%arg0: i32) -> (i32, i32) {
    %c0_i32 = arith.constant 0 : i32
    %c0_i32_0 = arith.constant 0 : i32
    %c0_i32_1 = arith.constant 0 : i32
    return %c0_i32, %c0_i32_0 : i32, i32
  }
  func.func @transform_9(%arg0: i32) -> (i32, i32, i32) {
    %c0_i32 = arith.constant 0 : i32
    %c0_i32_0 = arith.constant 0 : i32
    %c0_i32_1 = arith.constant 0 : i32
    return %arg0, %c0_i32, %c0_i32_0 : i32, i32, i32
  }
}

</mosaic_0001>

<llo_original>
// kernel: tpu_custom_call.1
$region0: #{tpu_custom_call.1}
  #allocation0 [shape = 'u32[]', space=smem, size = 0x4, offset = 0x4, fixed_abs, tag = 'smem constant byte address 0x4 - core index']
  #allocation1 [shape = 'u32[144,128]{1,0:T(1,128)}', space=vmem, size = 0x12000, scoped, tag = 'internal scratch']
  %s0 = inlined_call_operand.hbm [shape: f32[16,16,32], index: 0, kind: input, shape index: {}]
  %s1 = inlined_call_operand.hbm [shape: f32[4,4,16,16], index: 1, kind: input, shape index: {}]
  %s2 = inlined_call_operand.hbm [shape: bf16[32,32], index: 2, kind: input, shape index: {}]
  %s3 = inlined_call_operand.vmem [shape: f32[1,32], index: 3, kind: input, shape index: {}]
  %s4 = inlined_call_operand.hbm [shape: bf16[32,32], index: 4, kind: input, shape index: {}]
  %s5 = inlined_call_operand.vmem [shape: bf16[32,32], index: 5, kind: input, shape index: {}]
  %s6 = inlined_call_operand.vmem [shape: f32[1,32], index: 6, kind: input, shape index: {}]
  %s7 = inlined_call_operand.hbm [shape: bf16[32,32], index: 7, kind: input, shape index: {}]
  %s8 = inlined_call_operand.vmem [shape: f32[1,32], index: 8, kind: input, shape index: {}]
  %s9 = inlined_call_operand.hbm [shape: f32[16,16,32], index: 9, kind: output, shape index: {}]
  %s10 = sld [smem:[#allocation0]]
  $region89: #{tpu_custom_call.1} parent=0
    _
  %s12 = ssub.s32 1, %s10
  %s13 = scalar_select 0, %s12, %s10
  $region1: #{tpu_custom_call.1} parent=0
    #allocation2 [shape = 'u8[131072]{0}', space=vmem, size = 0x20000, scoped, tag = 'input window, operand 0']
    #allocation3 [shape = 's32[2]{0}', space=sflag, size = 0x8, scoped, tag = 'scoped memory for tpu_custom_call.1']
    #allocation4 [shape = 's32[2]{0}', space=sflag, size = 0x8, scoped, tag = 'scoped memory for tpu_custom_call.1']
    #allocation5 [shape = 'u8[131072]{0}', space=vmem, size = 0x20000, scoped, tag = 'input window, operand 1, single buffered']
    #allocation6 [shape = 's32[1]{0}', space=sflag, size = 0x4, scoped, tag = 'scoped memory for tpu_custom_call.1']
    #allocation7 [shape = 'u8[8192]{0}', space=vmem, size = 0x2000, scoped, tag = 'input window, operand 2, single buffered']
    #allocation8 [shape = 'u8[8192]{0}', space=vmem, size = 0x2000, scoped, tag = 'input window, operand 4, single buffered']
    #allocation9 [shape = 's32[1]{0}', space=sflag, size = 0x4, scoped, tag = 'scoped memory for tpu_custom_call.1']
    #allocation10 [shape = 'u8[8192]{0}', space=vmem, size = 0x2000, scoped, tag = 'input window, operand 7, single buffered']
    #allocation11 [shape = 'u8[131072]{0}', space=vmem, size = 0x20000, scoped, tag = 'output window, operand 0']
    %14 = vsyncpa [#allocation3], 0
    %s15 = scalar_lea.sflag [#allocation3], 1
    %16 = vsyncpa %s15, 0
    %17 = vsyncpa [#allocation6], 0
    %18 = vsyncpa [#allocation9], 0
    %19 = vsyncpa [#allocation4], 0
    %s20 = scalar_lea.sflag [#allocation4], 1
    %21 = vsyncpa %s20, 0
    loop: start=0, step=1, limit=4
    $region2: #{tpu_custom_call.1} parent=1 // loop_pre_header
      _
    $region3: #{tpu_custom_call.1} parent=1 // loop_header
      %s23 = sphi 0, %s27
      %p24 = scmp.ge.s32.totalorder %s23, 4
      %s33 = sphi 0, %s35
      %s36 = sphi 0, %s33
      %s37 = sphi 0, %s36
      %s53 = sphi 0, %s37
      %s57 = sphi 0, %s57
      %s59 = sphi 0, %s57
      %s60 = sphi 0, %s59
      %s74 = sphi 0, %s60
      %s78 = sphi 0, %s78
      %s80 = sphi 0, %s78
      %s81 = sphi 0, %s80
      %s95 = sphi 0, %s81
      %s99 = sphi 0, %s99
      %s101 = sphi 0, %s99
      %s102 = sphi 0, %s101
      %s116 = sphi 0, %s102
      %s120 = sphi 0, %s120
      %s122 = sphi 0, %s120
      %s123 = sphi 0, %s122
      %s137 = sphi 0, %s123
      %s141 = sphi 0, %s141
      %s143 = sphi 0, %s141
      %s144 = sphi 0, %s143
      %s158 = sphi 0, %s144
      %s162 = sphi 0, %s162
      %s164 = sphi 0, %s162
      %s165 = sphi 0, %s164
      %s179 = sphi 0, %s165
      %s183 = sphi 0, %s183
      %s185 = sphi 0, %s183
      %s186 = sphi 0, %s185
      %s200 = sphi 0, %s186
      %s204 = sphi 0, %s204
      %s206 = sphi 0, %s204
      %s207 = sphi 0, %s206
      %s221 = sphi 0, %s207
      %s227 = sphi 0, %s229
      %s230 = sphi 0, %s227
      %s231 = sphi 0, %s230
      %s247 = sphi 0, %s231
    $region4: #{tpu_custom_call.1} parent=1 // loop_header_branch
      %26 = sbr.rel (%p24) target = $region8
    $region5: #{tpu_custom_call.1} parent=1 // loop_body
      %s28 = ssub.s32 %s23, 1
      %s29 = ssub.s32 %s23, 2
      %s30 = sadd.s32 %s23, 1
      %s31 = ssub.s32 %s23, %s30
      %p32 = scmp.eq.s32.totalorder %s31, 0
      %s34 = sadd.s32 %s33, 1
      %s35 = scalar_select %p32, %s33, %s34
      %p38 = pneg %p32
      %p39 = scmp.eq.s32.totalorder %s23, 1
      %p40 = por %p38, %p39
      %p41 = scmp.ne.s32.totalorder %s33, %s36
      %p42 = scmp.eq.s32.totalorder %s23, 0
      %p43 = por %p41, %p42
      %p44 = scmp.ne.s32.totalorder %s33, %s36
      %p45 = scmp.eq.s32.totalorder %s28, 1
      %p46 = por %p44, %p45
      %p47 = scmp.ne.s32.totalorder %s36, %s37
      %p48 = scmp.eq.s32.totalorder %s28, 0
      %p49 = por %p47, %p48
      %p50 = scmp.ne.s32.totalorder %s36, %s37
      %p51 = scmp.eq.s32.totalorder %s29, 1
      %p52 = por %p50, %p51
      %p54 = scmp.ne.s32.totalorder %s37, %s53
      %p55 = scmp.eq.s32.totalorder %s29, 0
      %p56 = por %p54, %p55
      %s58 = sadd.s32 %s57, 1
      %p61 = scmp.eq.s32.totalorder %s23, 1
      %p62 = scmp.ne.s32.totalorder %s57, %s59
      %p63 = scmp.eq.s32.totalorder %s23, 0
      %p64 = por %p62, %p63
      %p65 = scmp.ne.s32.totalorder %s57, %s59
      %p66 = scmp.eq.s32.totalorder %s28, 1
      %p67 = por %p65, %p66
      %p68 = scmp.ne.s32.totalorder %s59, %s60
      %p69 = scmp.eq.s32.totalorder %s28, 0
      %p70 = por %p68, %p69
      %p71 = scmp.ne.s32.totalorder %s59, %s60
      %p72 = scmp.eq.s32.totalorder %s29, 1
      %p73 = por %p71, %p72
      %p75 = scmp.ne.s32.totalorder %s60, %s74
      %p76 = scmp.eq.s32.totalorder %s29, 0
      %p77 = por %p75, %p76
      %s79 = sadd.s32 %s78, 1
      %p82 = scmp.eq.s32.totalorder %s23, 1
      %p83 = scmp.ne.s32.totalorder %s78, %s80
      %p84 = scmp.eq.s32.totalorder %s23, 0
      %p85 = por %p83, %p84
      %p86 = scmp.ne.s32.totalorder %s78, %s80
      %p87 = scmp.eq.s32.totalorder %s28, 1
      %p88 = por %p86, %p87
      %p89 = scmp.ne.s32.totalorder %s80, %s81
      %p90 = scmp.eq.s32.totalorder %s28, 0
      %p91 = por %p89, %p90
      %p92 = scmp.ne.s32.totalorder %s80, %s81
      %p93 = scmp.eq.s32.totalorder %s29, 1
      %p94 = por %p92, %p93
      %p96 = scmp.ne.s32.totalorder %s81, %s95
      %p97 = scmp.eq.s32.totalorder %s29, 0
      %p98 = por %p96, %p97
      %s100 = sadd.s32 %s99, 1
      %p103 = scmp.eq.s32.totalorder %s23, 1
      %p104 = scmp.ne.s32.totalorder %s99, %s101
      %p105 = scmp.eq.s32.totalorder %s23, 0
      %p106 = por %p104, %p105
      %p107 = scmp.ne.s32.totalorder %s99, %s101
      %p108 = scmp.eq.s32.totalorder %s28, 1
      %p109 = por %p107, %p108
      %p110 = scmp.ne.s32.totalorder %s101, %s102
      %p111 = scmp.eq.s32.totalorder %s28, 0
      %p112 = por %p110, %p111
      %p113 = scmp.ne.s32.totalorder %s101, %s102
      %p114 = scmp.eq.s32.totalorder %s29, 1
      %p115 = por %p113, %p114
      %p117 = scmp.ne.s32.totalorder %s102, %s116
      %p118 = scmp.eq.s32.totalorder %s29, 0
      %p119 = por %p117, %p118
      %s121 = sadd.s32 %s120, 1
      %p124 = scmp.eq.s32.totalorder %s23, 1
      %p125 = scmp.ne.s32.totalorder %s120, %s122
      %p126 = scmp.eq.s32.totalorder %s23, 0
      %p127 = por %p125, %p126
      %p128 = scmp.ne.s32.totalorder %s120, %s122
      %p129 = scmp.eq.s32.totalorder %s28, 1
      %p130 = por %p128, %p129
      %p131 = scmp.ne.s32.totalorder %s122, %s123
      %p132 = scmp.eq.s32.totalorder %s28, 0
      %p133 = por %p131, %p132
      %p134 = scmp.ne.s32.totalorder %s122, %s123
      %p135 = scmp.eq.s32.totalorder %s29, 1
      %p136 = por %p134, %p135
      %p138 = scmp.ne.s32.totalorder %s123, %s137
      %p139 = scmp.eq.s32.totalorder %s29, 0
      %p140 = por %p138, %p139
      %s142 = sadd.s32 %s141, 1
      %p145 = scmp.eq.s32.totalorder %s23, 1
      %p146 = scmp.ne.s32.totalorder %s141, %s143
      %p147 = scmp.eq.s32.totalorder %s23, 0
      %p148 = por %p146, %p147
      %p149 = scmp.ne.s32.totalorder %s141, %s143
      %p150 = scmp.eq.s32.totalorder %s28, 1
      %p151 = por %p149, %p150
      %p152 = scmp.ne.s32.totalorder %s143, %s144
      %p153 = scmp.eq.s32.totalorder %s28, 0
      %p154 = por %p152, %p153
      %p155 = scmp.ne.s32.totalorder %s143, %s144
      %p156 = scmp.eq.s32.totalorder %s29, 1
      %p157 = por %p155, %p156
      %p159 = scmp.ne.s32.totalorder %s144, %s158
      %p160 = scmp.eq.s32.totalorder %s29, 0
      %p161 = por %p159, %p160
      %s163 = sadd.s32 %s162, 1
      %p166 = scmp.eq.s32.totalorder %s23, 1
      %p167 = scmp.ne.s32.totalorder %s162, %s164
      %p168 = scmp.eq.s32.totalorder %s23, 0
      %p169 = por %p167, %p168
      %p170 = scmp.ne.s32.totalorder %s162, %s164
      %p171 = scmp.eq.s32.totalorder %s28, 1
      %p172 = por %p170, %p171
      %p173 = scmp.ne.s32.totalorder %s164, %s165
      %p174 = scmp.eq.s32.totalorder %s28, 0
      %p175 = por %p173, %p174
      %p176 = scmp.ne.s32.totalorder %s164, %s165
      %p177 = scmp.eq.s32.totalorder %s29, 1
      %p178 = por %p176, %p177
      %p180 = scmp.ne.s32.totalorder %s165, %s179
      %p181 = scmp.eq.s32.totalorder %s29, 0
      %p182 = por %p180, %p181
      %s184 = sadd.s32 %s183, 1
      %p187 = scmp.eq.s32.totalorder %s23, 1
      %p188 = scmp.ne.s32.totalorder %s183, %s185
      %p189 = scmp.eq.s32.totalorder %s23, 0
      %p190 = por %p188, %p189
      %p191 = scmp.ne.s32.totalorder %s183, %s185
      %p192 = scmp.eq.s32.totalorder %s28, 1
      %p193 = por %p191, %p192
      %p194 = scmp.ne.s32.totalorder %s185, %s186
      %p195 = scmp.eq.s32.totalorder %s28, 0
      %p196 = por %p194, %p195
      %p197 = scmp.ne.s32.totalorder %s185, %s186
      %p198 = scmp.eq.s32.totalorder %s29, 1
      %p199 = por %p197, %p198
      %p201 = scmp.ne.s32.totalorder %s186, %s200
      %p202 = scmp.eq.s32.totalorder %s29, 0
      %p203 = por %p201, %p202
      %s205 = sadd.s32 %s204, 1
      %p208 = scmp.eq.s32.totalorder %s23, 1
      %p209 = scmp.ne.s32.totalorder %s204, %s206
      %p210 = scmp.eq.s32.totalorder %s23, 0
      %p211 = por %p209, %p210
      %p212 = scmp.ne.s32.totalorder %s204, %s206
      %p213 = scmp.eq.s32.totalorder %s28, 1
      %p214 = por %p212, %p213
      %p215 = scmp.ne.s32.totalorder %s206, %s207
      %p216 = scmp.eq.s32.totalorder %s28, 0
      %p217 = por %p215, %p216
      %p218 = scmp.ne.s32.totalorder %s206, %s207
      %p219 = scmp.eq.s32.totalorder %s29, 1
      %p220 = por %p218, %p219
      %p222 = scmp.ne.s32.totalorder %s207, %s221
      %p223 = scmp.eq.s32.totalorder %s29, 0
      %p224 = por %p222, %p223
      %s225 = ssub.s32 %s23, %s30
      %p226 = scmp.eq.s32.totalorder %s225, 0
      %s228 = sadd.s32 %s227, 1
      %s229 = scalar_select %p226, %s227, %s228
      %p232 = pneg %p226
      %p233 = scmp.eq.s32.totalorder %s23, 1
      %p234 = por %p232, %p233
      %p235 = scmp.ne.s32.totalorder %s227, %s230
      %p236 = scmp.eq.s32.totalorder %s23, 0
      %p237 = por %p235, %p236
      %p238 = scmp.ne.s32.totalorder %s227, %s230
      %p239 = scmp.eq.s32.totalorder %s28, 1
      %p240 = por %p238, %p239
      %p241 = scmp.ne.s32.totalorder %s230, %s231
      %p242 = scmp.eq.s32.totalorder %s28, 0
      %p243 = por %p241, %p242
      %p244 = scmp.ne.s32.totalorder %s230, %s231
      %p245 = scmp.eq.s32.totalorder %s29, 1
      %p246 = por %p244, %p245
      %p248 = scmp.ne.s32.totalorder %s231, %s247
      %p249 = scmp.eq.s32.totalorder %s29, 0
      %p250 = por %p248, %p249
      %p251 = scmp.le.s32.totalorder 1, %s23
      %p252 = scmp.lt.s32.totalorder %s23, 3
      %p253 = pnand %p251, %p252
      %p254 = pneg %p253
      // Predicated region
      $region9: #{tpu_custom_call.1} parent=5 // pred_check
        _
      $region10: #{tpu_custom_call.1} parent=5 // pred_check_branch
        %256 = sbr.rel (%p253) target = $region12
      $region11: #{tpu_custom_call.1} parent=5 // pred_region
        %s257 = ssub.s32 %s23, 1
        // Predicated region
        $region13: #{tpu_custom_call.1} parent=11 // pred_check
          %p258 = pneg %p70
        $region14: #{tpu_custom_call.1} parent=11 // pred_check_branch
          %260 = sbr.rel (%p258) target = $region16
        $region15: #{tpu_custom_call.1} parent=11 // pred_region
          %s262 = ssub.s32 4096, 4096
          %263 = vsyncadd [#allocation6], %s262
          %s264 = sshll.u32 [#allocation5], 4
          %s265 = int_to_ptr.vmem [resolvable:$true] %s264
          %270 = dma.hbm_to_vmem [thread:$0]  %s1, 4096, %s265, [#allocation6], 128, 128, 8
        $region16: #{tpu_custom_call.1} parent=11 // pred_fallthru
          _
        // Predicated region
        $region17: #{tpu_custom_call.1} parent=11 // pred_check
          %p271 = pneg %p91
        $region18: #{tpu_custom_call.1} parent=11 // pred_check_branch
          %273 = sbr.rel (%p271) target = $region20
        $region19: #{tpu_custom_call.1} parent=11 // pred_region
          %s275 = ssub.s32 256, 256
          %276 = vsyncadd [#allocation6], %s275
          %s277 = sshll.u32 [#allocation7], 4
          %s278 = int_to_ptr.vmem [resolvable:$true] %s277
          %283 = dma.hbm_to_vmem [thread:$0]  %s2, 256, %s278, [#allocation6], 64, 64, 4
        $region20: #{tpu_custom_call.1} parent=11 // pred_fallthru
          _
        // Predicated region
        $region21: #{tpu_custom_call.1} parent=11 // pred_check
          %p284 = pneg %p112
        $region22: #{tpu_custom_call.1} parent=11 // pred_check_branch
          %286 = sbr.rel (%p284) target = $region24
        $region23: #{tpu_custom_call.1} parent=11 // pred_region
          _
        $region24: #{tpu_custom_call.1} parent=11 // pred_fallthru
          _
        // Predicated region
        $region25: #{tpu_custom_call.1} parent=11 // pred_check
          %p287 = pneg %p133
        $region26: #{tpu_custom_call.1} parent=11 // pred_check_branch
          %289 = sbr.rel (%p287) target = $region28
        $region27: #{tpu_custom_call.1} parent=11 // pred_region
          %s291 = ssub.s32 256, 256
          %292 = vsyncadd [#allocation9], %s291
          %s293 = sshll.u32 [#allocation8], 4
          %s294 = int_to_ptr.vmem [resolvable:$true] %s293
          %299 = dma.hbm_to_vmem [thread:$0]  %s4, 256, %s294, [#allocation9], 64, 64, 4
        $region28: #{tpu_custom_call.1} parent=11 // pred_fallthru
          _
        // Predicated region
        $region29: #{tpu_custom_call.1} parent=11 // pred_check
          %p300 = pneg %p154
        $region30: #{tpu_custom_call.1} parent=11 // pred_check_branch
          %302 = sbr.rel (%p300) target = $region32
        $region31: #{tpu_custom_call.1} parent=11 // pred_region
          _
        $region32: #{tpu_custom_call.1} parent=11 // pred_fallthru
          _
        // Predicated region
        $region33: #{tpu_custom_call.1} parent=11 // pred_check
          %p303 = pneg %p175
        $region34: #{tpu_custom_call.1} parent=11 // pred_check_branch
          %305 = sbr.rel (%p303) target = $region36
        $region35: #{tpu_custom_call.1} parent=11 // pred_region
          _
        $region36: #{tpu_custom_call.1} parent=11 // pred_fallthru
          _
        // Predicated region
        $region37: #{tpu_custom_call.1} parent=11 // pred_check
          %p306 = pneg %p196
        $region38: #{tpu_custom_call.1} parent=11 // pred_check_branch
          %308 = sbr.rel (%p306) target = $region40
        $region39: #{tpu_custom_call.1} parent=11 // pred_region
          %s310 = ssub.s32 256, 256
          %311 = vsyncadd [#allocation9], %s310
          %s312 = sshll.u32 [#allocation10], 4
          %s313 = int_to_ptr.vmem [resolvable:$true] %s312
          %318 = dma.hbm_to_vmem [thread:$0]  %s7, 256, %s313, [#allocation9], 64, 64, 4
        $region40: #{tpu_custom_call.1} parent=11 // pred_fallthru
          _
        // Predicated region
        $region41: #{tpu_custom_call.1} parent=11 // pred_check
          %p319 = pneg %p217
        $region42: #{tpu_custom_call.1} parent=11 // pred_check_branch
          %321 = sbr.rel (%p319) target = $region44
        $region43: #{tpu_custom_call.1} parent=11 // pred_region
          _
        $region44: #{tpu_custom_call.1} parent=11 // pred_fallthru
          _
      $region12: #{tpu_custom_call.1} parent=5 // pred_fallthru
        _
      %p322 = scmp.lt.s32.totalorder %s23, 2
      // Predicated region
      $region45: #{tpu_custom_call.1} parent=5 // pred_check
        %p323 = pneg %p322
      $region46: #{tpu_custom_call.1} parent=5 // pred_check_branch
        %325 = sbr.rel (%p323) target = $region48
      $region47: #{tpu_custom_call.1} parent=5 // pred_region
        // Predicated region
        $region49: #{tpu_custom_call.1} parent=47 // pred_check
          %p326 = pneg %p43
        $region50: #{tpu_custom_call.1} parent=47 // pred_check_branch
          %328 = sbr.rel (%p326) target = $region52
        $region51: #{tpu_custom_call.1} parent=47 // pred_region
          %s329 = sand.u32 %s33, 1
          %s330 = scalar_lea.sflag [#allocation3], %s329
          %s331 = sand.u32 %s33, 1
          %s332 = smul.addr %s331, 128
          %s333 = scalar_lea.vmem [#allocation2], %s332
          %s334 = smul.u32 8, %s23
          %s336 = ssub.s32 2048, 2048
          %337 = vsyncadd %s330, %s336
          %s338 = smul.addr %s334, 2
          %s339 = smul.addr %s338, 128
          %s340 = scalar_lea.hbm %s0, %s339
          %s341 = sshll.u32 %s333, 4
          %s342 = int_to_ptr.vmem [resolvable:$true] %s341
          %347 = dma.hbm_to_vmem [thread:$0]  %s340, 2048, %s342, %s330, 128, 128, 8
        $region52: #{tpu_custom_call.1} parent=47 // pred_fallthru
          _
      $region48: #{tpu_custom_call.1} parent=5 // pred_fallthru
        _
      %p348 = scmp.le.s32.totalorder 1, %s23
      %p349 = scmp.lt.s32.totalorder %s23, 3
      %p350 = pnand %p348, %p349
      %p351 = pneg %p350
      // Predicated region
      $region53: #{tpu_custom_call.1} parent=5 // pred_check
        _
      $region54: #{tpu_custom_call.1} parent=5 // pred_check_branch
        %353 = sbr.rel (%p350) target = $region56
      $region55: #{tpu_custom_call.1} parent=5 // pred_region
        %s354 = ssub.s32 %s23, 1
        %s355 = sand.u32 %s36, 1
        %s356 = scalar_lea.sflag [#allocation3], %s355
        %s357 = sand.u32 %s36, 1
        %s358 = smul.addr %s357, 128
        %s359 = scalar_lea.vmem [#allocation2], %s358
        // Predicated region
        $region57: #{tpu_custom_call.1} parent=55 // pred_check
          %p360 = pneg %p49
        $region58: #{tpu_custom_call.1} parent=55 // pred_check_branch
          %362 = sbr.rel (%p360) target = $region60
        $region59: #{tpu_custom_call.1} parent=55 // pred_region
          %363 = dma.done %s356, 2048
        $region60: #{tpu_custom_call.1} parent=55 // pred_fallthru
          _
        // Predicated region
        $region61: #{tpu_custom_call.1} parent=55 // pred_check
          %p364 = pneg %p70
        $region62: #{tpu_custom_call.1} parent=55 // pred_check_branch
          %366 = sbr.rel (%p364) target = $region64
        $region63: #{tpu_custom_call.1} parent=55 // pred_region
          %367 = dma.done [#allocation6], 4096
        $region64: #{tpu_custom_call.1} parent=55 // pred_fallthru
          _
        // Predicated region
        $region65: #{tpu_custom_call.1} parent=55 // pred_check
          %p368 = pneg %p91
        $region66: #{tpu_custom_call.1} parent=55 // pred_check_branch
          %370 = sbr.rel (%p368) target = $region68
        $region67: #{tpu_custom_call.1} parent=55 // pred_region
          %371 = dma.done [#allocation6], 256
        $region68: #{tpu_custom_call.1} parent=55 // pred_fallthru
          _
        // Predicated region
        $region69: #{tpu_custom_call.1} parent=55 // pred_check
          %p372 = pneg %p133
        $region70: #{tpu_custom_call.1} parent=55 // pred_check_branch
          %374 = sbr.rel (%p372) target = $region72
        $region71: #{tpu_custom_call.1} parent=55 // pred_region
          %375 = dma.done [#allocation9], 256
        $region72: #{tpu_custom_call.1} parent=55 // pred_fallthru
          _
        // Predicated region
        $region73: #{tpu_custom_call.1} parent=55 // pred_check
          %p376 = pneg %p196
        $region74: #{tpu_custom_call.1} parent=55 // pred_check_branch
          %378 = sbr.rel (%p376) target = $region76
        $region75: #{tpu_custom_call.1} parent=55 // pred_region
          %379 = dma.done [#allocation9], 256
        $region76: #{tpu_custom_call.1} parent=55 // pred_fallthru
          _
        %s380 = sand.u32 %s36, 1
        %s381 = scalar_lea.sflag [#allocation3], %s380
        %s382 = sand.u32 %s36, 1
        %s383 = smul.addr %s382, 128
        %s384 = scalar_lea.vmem [#allocation2], %s383
        %p385 = pneg %p49
        %p386 = pneg %p46
        %p387 = pneg %p70
        %p388 = pneg %p67
        %p389 = pneg %p91
        %p390 = pneg %p88
        %p391 = pneg %p112
        %p392 = pneg %p109
        %p393 = pneg %p133
        %p394 = pneg %p130
        %p395 = pneg %p154
        %p396 = pneg %p151
        %p397 = pneg %p175
        %p398 = pneg %p172
        %p399 = pneg %p196
        %p400 = pneg %p193
        %p401 = pneg %p217
        %p402 = pneg %p214
        %p403 = pneg %p243
        %p404 = pneg %p240
        %s405 = sand.u32 %s230, 1
        %s406 = scalar_lea.sflag [#allocation4], %s405
        %s407 = sand.u32 %s230, 1
        %s408 = smul.addr %s407, 128
        %s409 = scalar_lea.vmem [#allocation11], %s408
        %s410 = smul.u32 8, %s28
        %s411 = smul.u32 8, %s28
        %v413 = vld [vmem:[%s359] sm:$0xff]
        %v414 = vld [vmem:[%s359 + $0x8] sm:$0xff]
        %v415 = vld [vmem:[%s359 + $0x10] sm:$0xff]
        %v416 = vld [vmem:[%s359 + $0x18] sm:$0xff]
        %v417 = vld [vmem:[%s359 + $0x20] sm:$0xff]
        %v418 = vld [vmem:[%s359 + $0x28] sm:$0xff]
        %v419 = vld [vmem:[%s359 + $0x30] sm:$0xff]
        %v420 = vld [vmem:[%s359 + $0x38] sm:$0xff]
        %v421 = vld [vmem:[%s359 + $0x40] sm:$0xff]
        %v422 = vld [vmem:[%s359 + $0x48] sm:$0xff]
        %v423 = vld [vmem:[%s359 + $0x50] sm:$0xff]
        %v424 = vld [vmem:[%s359 + $0x58] sm:$0xff]
        %v425 = vld [vmem:[%s359 + $0x60] sm:$0xff]
        %v426 = vld [vmem:[%s359 + $0x68] sm:$0xff]
        %v427 = vld [vmem:[%s359 + $0x70] sm:$0xff]
        %v428 = vld [vmem:[%s359 + $0x78] sm:$0xff]
        %v429 = vpack.c.bf16 %v414, %v413
        %v430 = vpack.c.bf16 %v416, %v415
        %v431 = vpack.c.bf16 %v418, %v417
        %v432 = vpack.c.bf16 %v420, %v419
        %v433 = vpack.c.bf16 %v422, %v421
        %v434 = vpack.c.bf16 %v424, %v423
        %v435 = vpack.c.bf16 %v426, %v425
        %v436 = vpack.c.bf16 %v428, %v427
        %v437 = vld [vmem:[#allocation7] sm:$0xf]
        %v438 = vld [vmem:[#allocation7 + $0x4] sm:$0xf]
        %v439 = vld [vmem:[#allocation7 + $0x8] sm:$0xf]
        %v440 = vld [vmem:[#allocation7 + $0xc] sm:$0xf]
        %v441 = vld [vmem:[%s3] sm:$0x1]
        %v443 = vlaneseq
        %v444 = vshrl.u32 %v443, 7
        %v445 = vsub.s32 0, %v444
        %v446 = vrot.slane %v441, %v445
        %v452 = vunpack.c.l.b16 %v437
        %v453 = vunpack.c.l.b16 %v438
        %v454 = vunpack.c.l.b16 %v439
        %v455 = vunpack.c.l.b16 %v440
        %v456 = vpack.c.b16 %v453, %v452
        %v457 = vpack.c.b16 %v455, %v454
        %vm460 = vcmask 261120
        %v462 = vsel %vm460, %v429, 0
        %v465 = vsel %vm460, %v430, 0
        %v468 = vsel %vm460, %v431, 0
        %v471 = vsel %vm460, %v432, 0
        %v474 = vsel %vm460, %v433, 0
        %v477 = vsel %vm460, %v434, 0
        %v480 = vsel %vm460, %v435, 0
        %v483 = vsel %vm460, %v436, 0
        %485 = vmatprep.subr.bf16.mxu0 0
        %486 = vmatpush1.bf16.msra.mxu0 %v456
        %487 = vmatprep.subr.bf16.mxu0 0
        %488 = vmatpush1.bf16.msra.mxu0 %v457
        %489 = vmatprep.subr.bf16.mxu0 0
        %490 = vmatpush1.bf16.msra.mxu0 0
        %491 = vmatprep.subr.bf16.mxu0 0
        %492 = vmatpush1.bf16.msra.mxu0 0
        %493 = vmatprep.subr.bf16.mxu0 0
        %494 = vmatpush1.bf16.msra.mxu0 0
        %495 = vmatprep.subr.bf16.mxu0 0
        %496 = vmatpush1.bf16.msra.mxu0 0
        %497 = vmatprep.subr.bf16.mxu0 0
        %498 = vmatpush1.bf16.msra.mxu0 0
        %499 = vmatprep.subr.bf16.mxu0 0
        %500 = vmatpush1.bf16.msra.mxu0 0
        %501 = vmatprep.subr.bf16.mxu0 0
        %502 = vmatpush1.bf16.msra.mxu0 0
        %503 = vmatprep.subr.bf16.mxu0 0
        %504 = vmatpush1.bf16.msra.mxu0 0
        %505 = vmatprep.subr.bf16.mxu0 0
        %506 = vmatpush1.bf16.msra.mxu0 0
        %507 = vmatprep.subr.bf16.mxu0 0
        %508 = vmatpush1.bf16.msra.mxu0 0
        %509 = vmatprep.subr.bf16.mxu0 0
        %510 = vmatpush1.bf16.msra.mxu0 0
        %511 = vmatprep.subr.bf16.mxu0 0
        %512 = vmatpush1.bf16.msra.mxu0 0
        %513 = vmatprep.subr.bf16.mxu0 0
        %514 = vmatpush1.bf16.msra.mxu0 0
        %515 = vmatprep.subr.bf16.mxu0 0
        %516 = vmatpush1.bf16.msra.mxu0 0
        %517 = vmatprep.mubr.bf16.mxu0 0
        %518 = vmatmul.mubr.bf16.gmra.mrb[0].mxu0 %v462
        %v519 = vpop.f32.mrb[0].mxu0
        %v520 = vadd.f32 %v446, %v519
        %v521 = vpop.f32.mrb[0].mxu0
        %v522 = vpop.f32.mrb[0].mxu0
        %v523 = vadd.f32 %v446, %v522
        %v524 = vpop.f32.mrb[0].mxu0
        %525 = vmatprep.mubr.bf16.mxu0 0
        %526 = vmatmul.mubr.bf16.gmra.mrb[0].mxu0 %v465
        %v527 = vpop.f32.mrb[0].mxu0
        %v528 = vadd.f32 %v446, %v527
        %v529 = vpop.f32.mrb[0].mxu0
        %v530 = vpop.f32.mrb[0].mxu0
        %v531 = vadd.f32 %v446, %v530
        %v532 = vpop.f32.mrb[0].mxu0
        %533 = vmatprep.mubr.bf16.mxu0 0
        %534 = vmatmul.mubr.bf16.gmra.mrb[0].mxu0 %v468
        %v535 = vpop.f32.mrb[0].mxu0
        %v536 = vadd.f32 %v446, %v535
        %v537 = vpop.f32.mrb[0].mxu0
        %v538 = vpop.f32.mrb[0].mxu0
        %v539 = vadd.f32 %v446, %v538
        %v540 = vpop.f32.mrb[0].mxu0
        %541 = vmatprep.mubr.bf16.mxu0 0
        %542 = vmatmul.mubr.bf16.gmra.mrb[0].mxu0 %v471
        %v543 = vpop.f32.mrb[0].mxu0
        %v544 = vadd.f32 %v446, %v543
        %v545 = vpop.f32.mrb[0].mxu0
        %v546 = vpop.f32.mrb[0].mxu0
        %v547 = vadd.f32 %v446, %v546
        %v548 = vpop.f32.mrb[0].mxu0
        %549 = vmatprep.mubr.bf16.mxu0 0
        %550 = vmatmul.mubr.bf16.gmra.mrb[0].mxu0 %v474
        %v551 = vpop.f32.mrb[0].mxu0
        %v552 = vadd.f32 %v446, %v551
        %v553 = vpop.f32.mrb[0].mxu0
        %v554 = vpop.f32.mrb[0].mxu0
        %v555 = vadd.f32 %v446, %v554
        %v556 = vpop.f32.mrb[0].mxu0
        %557 = vmatprep.mubr.bf16.mxu0 0
        %558 = vmatmul.mubr.bf16.gmra.mrb[0].mxu0 %v477
        %v559 = vpop.f32.mrb[0].mxu0
        %v560 = vadd.f32 %v446, %v559
        %v561 = vpop.f32.mrb[0].mxu0
        %v562 = vpop.f32.mrb[0].mxu0
        %v563 = vadd.f32 %v446, %v562
        %v564 = vpop.f32.mrb[0].mxu0
        %565 = vmatprep.mubr.bf16.mxu0 0
        %566 = vmatmul.mubr.bf16.gmra.mrb[0].mxu0 %v480
        %v567 = vpop.f32.mrb[0].mxu0
        %v568 = vadd.f32 %v446, %v567
        %v569 = vpop.f32.mrb[0].mxu0
        %v570 = vpop.f32.mrb[0].mxu0
        %v571 = vadd.f32 %v446, %v570
        %v572 = vpop.f32.mrb[0].mxu0
        %573 = vmatprep.mubr.bf16.mxu0 0
        %574 = vmatmul.mubr.bf16.gmra.mrb[0].mxu0 %v483
        %v575 = vpop.f32.mrb[0].mxu0
        %v576 = vadd.f32 %v446, %v575
        %v577 = vpop.f32.mrb[0].mxu0
        %v578 = vpop.f32.mrb[0].mxu0
        %v579 = vadd.f32 %v446, %v578
        %v580 = vpop.f32.mrb[0].mxu0
        %581 = vdwg.mxu0
        %v582 = vld [vmem:[#allocation8] sm:$0xf]
        %v583 = vld [vmem:[#allocation8 + $0x4] sm:$0xf]
        %v584 = vld [vmem:[#allocation8 + $0x8] sm:$0xf]
        %v585 = vld [vmem:[#allocation8 + $0xc] sm:$0xf]
        %v590 = vunpack.c.l.b16 %v582
        %v591 = vunpack.c.l.b16 %v583
        %v592 = vunpack.c.l.b16 %v584
        %v593 = vunpack.c.l.b16 %v585
        %v594 = vpack.c.b16 %v591, %v590
        %v595 = vpack.c.b16 %v593, %v592
        %598 = vmatprep.subr.bf16.mxu0 0
        %599 = vmatpush1.bf16.msra.mxu0 %v594
        %600 = vmatprep.subr.bf16.mxu0 0
        %601 = vmatpush1.bf16.msra.mxu0 %v595
        %602 = vmatprep.subr.bf16.mxu0 0
        %603 = vmatpush1.bf16.msra.mxu0 0
        %604 = vmatprep.subr.bf16.mxu0 0
        %605 = vmatpush1.bf16.msra.mxu0 0
        %606 = vmatprep.subr.bf16.mxu0 0
        %607 = vmatpush1.bf16.msra.mxu0 0
        %608 = vmatprep.subr.bf16.mxu0 0
        %609 = vmatpush1.bf16.msra.mxu0 0
        %610 = vmatprep.subr.bf16.mxu0 0
        %611 = vmatpush1.bf16.msra.mxu0 0
        %612 = vmatprep.subr.bf16.mxu0 0
        %613 = vmatpush1.bf16.msra.mxu0 0
        %614 = vmatprep.subr.bf16.mxu0 0
        %615 = vmatpush1.bf16.msra.mxu0 0
        %616 = vmatprep.subr.bf16.mxu0 0
        %617 = vmatpush1.bf16.msra.mxu0 0
        %618 = vmatprep.subr.bf16.mxu0 0
        %619 = vmatpush1.bf16.msra.mxu0 0
        %620 = vmatprep.subr.bf16.mxu0 0
        %621 = vmatpush1.bf16.msra.mxu0 0
        %622 = vmatprep.subr.bf16.mxu0 0
        %623 = vmatpush1.bf16.msra.mxu0 0
        %624 = vmatprep.subr.bf16.mxu0 0
        %625 = vmatpush1.bf16.msra.mxu0 0
        %626 = vmatprep.subr.bf16.mxu0 0
        %627 = vmatpush1.bf16.msra.mxu0 0
        %628 = vmatprep.subr.bf16.mxu0 0
        %629 = vmatpush1.bf16.msra.mxu0 0
        %630 = vmatprep.mubr.bf16.mxu0 0
        %631 = vmatmul.mubr.bf16.gmra.mrb[0].mxu0 %v462
        %v632 = vpop.f32.mrb[0].mxu0
        %v633 = vadd.f32 0.0, %v632
        %v634 = vpop.f32.mrb[0].mxu0
        %v635 = vpop.f32.mrb[0].mxu0
        %v636 = vadd.f32 0.0, %v635
        %v637 = vpop.f32.mrb[0].mxu0
        %638 = vmatprep.mubr.bf16.mxu0 0
        %639 = vmatmul.mubr.bf16.gmra.mrb[0].mxu0 %v465
        %v640 = vpop.f32.mrb[0].mxu0
        %v641 = vadd.f32 0.0, %v640
        %v642 = vpop.f32.mrb[0].mxu0
        %v643 = vpop.f32.mrb[0].mxu0
        %v644 = vadd.f32 0.0, %v643
        %v645 = vpop.f32.mrb[0].mxu0
        %646 = vmatprep.mubr.bf16.mxu0 0
        %647 = vmatmul.mubr.bf16.gmra.mrb[0].mxu0 %v468
        %v648 = vpop.f32.mrb[0].mxu0
        %v649 = vadd.f32 0.0, %v648
        %v650 = vpop.f32.mrb[0].mxu0
        %v651 = vpop.f32.mrb[0].mxu0
        %v652 = vadd.f32 0.0, %v651
        %v653 = vpop.f32.mrb[0].mxu0
        %654 = vmatprep.mubr.bf16.mxu0 0
        %655 = vmatmul.mubr.bf16.gmra.mrb[0].mxu0 %v471
        %v656 = vpop.f32.mrb[0].mxu0
        %v657 = vadd.f32 0.0, %v656
        %v658 = vpop.f32.mrb[0].mxu0
        %v659 = vpop.f32.mrb[0].mxu0
        %v660 = vadd.f32 0.0, %v659
        %v661 = vpop.f32.mrb[0].mxu0
        %662 = vmatprep.mubr.bf16.mxu0 0
        %663 = vmatmul.mubr.bf16.gmra.mrb[0].mxu0 %v474
        %v664 = vpop.f32.mrb[0].mxu0
        %v665 = vadd.f32 0.0, %v664
        %v666 = vpop.f32.mrb[0].mxu0
        %v667 = vpop.f32.mrb[0].mxu0
        %v668 = vadd.f32 0.0, %v667
        %v669 = vpop.f32.mrb[0].mxu0
        %670 = vmatprep.mubr.bf16.mxu0 0
        %671 = vmatmul.mubr.bf16.gmra.mrb[0].mxu0 %v477
        %v672 = vpop.f32.mrb[0].mxu0
        %v673 = vadd.f32 0.0, %v672
        %v674 = vpop.f32.mrb[0].mxu0
        %v675 = vpop.f32.mrb[0].mxu0
        %v676 = vadd.f32 0.0, %v675
        %v677 = vpop.f32.mrb[0].mxu0
        %678 = vmatprep.mubr.bf16.mxu0 0
        %679 = vmatmul.mubr.bf16.gmra.mrb[0].mxu0 %v480
        %v680 = vpop.f32.mrb[0].mxu0
        %v681 = vadd.f32 0.0, %v680
        %v682 = vpop.f32.mrb[0].mxu0
        %v683 = vpop.f32.mrb[0].mxu0
        %v684 = vadd.f32 0.0, %v683
        %v685 = vpop.f32.mrb[0].mxu0
        %686 = vmatprep.mubr.bf16.mxu0 0
        %687 = vmatmul.mubr.bf16.gmra.mrb[0].mxu0 %v483
        %v688 = vpop.f32.mrb[0].mxu0
        %v689 = vadd.f32 0.0, %v688
        %v690 = vpop.f32.mrb[0].mxu0
        %v691 = vpop.f32.mrb[0].mxu0
        %v692 = vadd.f32 0.0, %v691
        %v693 = vpop.f32.mrb[0].mxu0
        %694 = vdwg.mxu0
        %v695 = vld [vmem:[%s5] sm:$0xf]
        %v696 = vld [vmem:[%s5 + $0x4] sm:$0xf]
        %v697 = vld [vmem:[%s5 + $0x8] sm:$0xf]
        %v698 = vld [vmem:[%s5 + $0xc] sm:$0xf]
        %v699 = vld [vmem:[%s6] sm:$0x1]
        %v701 = vlaneseq
        %v702 = vshrl.u32 %v701, 7
        %v703 = vsub.s32 0, %v702
        %v704 = vrot.slane %v699, %v703
        %v710 = vunpack.c.l.b16 %v695
        %v711 = vunpack.c.l.b16 %v696
        %v712 = vunpack.c.l.b16 %v697
        %v713 = vunpack.c.l.b16 %v698
        %v714 = vpack.c.b16 %v711, %v710
        %v715 = vpack.c.b16 %v713, %v712
        %718 = vmatprep.subr.bf16.mxu0 0
        %719 = vmatpush1.bf16.msra.mxu0 %v714
        %720 = vmatprep.subr.bf16.mxu0 0
        %721 = vmatpush1.bf16.msra.mxu0 %v715
        %722 = vmatprep.subr.bf16.mxu0 0
        %723 = vmatpush1.bf16.msra.mxu0 0
        %724 = vmatprep.subr.bf16.mxu0 0
        %725 = vmatpush1.bf16.msra.mxu0 0
        %726 = vmatprep.subr.bf16.mxu0 0
        %727 = vmatpush1.bf16.msra.mxu0 0
        %728 = vmatprep.subr.bf16.mxu0 0
        %729 = vmatpush1.bf16.msra.mxu0 0
        %730 = vmatprep.subr.bf16.mxu0 0
        %731 = vmatpush1.bf16.msra.mxu0 0
        %732 = vmatprep.subr.bf16.mxu0 0
        %733 = vmatpush1.bf16.msra.mxu0 0
        %734 = vmatprep.subr.bf16.mxu0 0
        %735 = vmatpush1.bf16.msra.mxu0 0
        %736 = vmatprep.subr.bf16.mxu0 0
        %737 = vmatpush1.bf16.msra.mxu0 0
        %738 = vmatprep.subr.bf16.mxu0 0
        %739 = vmatpush1.bf16.msra.mxu0 0
        %740 = vmatprep.subr.bf16.mxu0 0
        %741 = vmatpush1.bf16.msra.mxu0 0
        %742 = vmatprep.subr.bf16.mxu0 0
        %743 = vmatpush1.bf16.msra.mxu0 0
        %744 = vmatprep.subr.bf16.mxu0 0
        %745 = vmatpush1.bf16.msra.mxu0 0
        %746 = vmatprep.subr.bf16.mxu0 0
        %747 = vmatpush1.bf16.msra.mxu0 0
        %748 = vmatprep.subr.bf16.mxu0 0
        %749 = vmatpush1.bf16.msra.mxu0 0
        %750 = vmatprep.mubr.bf16.mxu0 0
        %751 = vmatmul.mubr.bf16.gmra.mrb[0].mxu0 %v462
        %v752 = vpop.f32.mrb[0].mxu0
        %v753 = vadd.f32 %v704, %v752
        %v754 = vpop.f32.mrb[0].mxu0
        %v755 = vpop.f32.mrb[0].mxu0
        %v756 = vadd.f32 %v704, %v755
        %v757 = vpop.f32.mrb[0].mxu0
        %758 = vmatprep.mubr.bf16.mxu0 0
        %759 = vmatmul.mubr.bf16.gmra.mrb[0].mxu0 %v465
        %v760 = vpop.f32.mrb[0].mxu0
        %v761 = vadd.f32 %v704, %v760
        %v762 = vpop.f32.mrb[0].mxu0
        %v763 = vpop.f32.mrb[0].mxu0
        %v764 = vadd.f32 %v704, %v763
        %v765 = vpop.f32.mrb[0].mxu0
        %766 = vmatprep.mubr.bf16.mxu0 0
        %767 = vmatmul.mubr.bf16.gmra.mrb[0].mxu0 %v468
        %v768 = vpop.f32.mrb[0].mxu0
        %v769 = vadd.f32 %v704, %v768
        %v770 = vpop.f32.mrb[0].mxu0
        %v771 = vpop.f32.mrb[0].mxu0
        %v772 = vadd.f32 %v704, %v771
        %v773 = vpop.f32.mrb[0].mxu0
        %774 = vmatprep.mubr.bf16.mxu0 0
        %775 = vmatmul.mubr.bf16.gmra.mrb[0].mxu0 %v471
        %v776 = vpop.f32.mrb[0].mxu0
        %v777 = vadd.f32 %v704, %v776
        %v778 = vpop.f32.mrb[0].mxu0
        %v779 = vpop.f32.mrb[0].mxu0
        %v780 = vadd.f32 %v704, %v779
        %v781 = vpop.f32.mrb[0].mxu0
        %782 = vmatprep.mubr.bf16.mxu0 0
        %783 = vmatmul.mubr.bf16.gmra.mrb[0].mxu0 %v474
        %v784 = vpop.f32.mrb[0].mxu0
        %v785 = vadd.f32 %v704, %v784
        %v786 = vpop.f32.mrb[0].mxu0
        %v787 = vpop.f32.mrb[0].mxu0
        %v788 = vadd.f32 %v704, %v787
        %v789 = vpop.f32.mrb[0].mxu0
        %790 = vmatprep.mubr.bf16.mxu0 0
        %791 = vmatmul.mubr.bf16.gmra.mrb[0].mxu0 %v477
        %v792 = vpop.f32.mrb[0].mxu0
        %v793 = vadd.f32 %v704, %v792
        %v794 = vpop.f32.mrb[0].mxu0
        %v795 = vpop.f32.mrb[0].mxu0
        %v796 = vadd.f32 %v704, %v795
        %v797 = vpop.f32.mrb[0].mxu0
        %798 = vmatprep.mubr.bf16.mxu0 0
        %799 = vmatmul.mubr.bf16.gmra.mrb[0].mxu0 %v480
        %v800 = vpop.f32.mrb[0].mxu0
        %v801 = vadd.f32 %v704, %v800
        %v802 = vpop.f32.mrb[0].mxu0
        %v803 = vpop.f32.mrb[0].mxu0
        %v804 = vadd.f32 %v704, %v803
        %v805 = vpop.f32.mrb[0].mxu0
        %806 = vmatprep.mubr.bf16.mxu0 0
        %807 = vmatmul.mubr.bf16.gmra.mrb[0].mxu0 %v483
        %v808 = vpop.f32.mrb[0].mxu0
        %v809 = vadd.f32 %v704, %v808
        %v810 = vpop.f32.mrb[0].mxu0
        %v811 = vpop.f32.mrb[0].mxu0
        %v812 = vadd.f32 %v704, %v811
        %v813 = vpop.f32.mrb[0].mxu0
        %814 = vdwg.mxu0
        %v815 = vpack.c.bf16 %v523, %v520
        %v816 = vpack.c.bf16 %v531, %v528
        %v817 = vpack.c.bf16 %v539, %v536
        %v818 = vpack.c.bf16 %v547, %v544
        %v819 = vpack.c.bf16 %v555, %v552
        %v820 = vpack.c.bf16 %v563, %v560
        %v821 = vpack.c.bf16 %v571, %v568
        %v822 = vpack.c.bf16 %v579, %v576
        %v823 = vpack.c.bf16 %v636, %v633
        %v824 = vpack.c.bf16 %v644, %v641
        %v825 = vpack.c.bf16 %v652, %v649
        %v826 = vpack.c.bf16 %v660, %v657
        %v827 = vpack.c.bf16 %v668, %v665
        %v828 = vpack.c.bf16 %v676, %v673
        %v829 = vpack.c.bf16 %v684, %v681
        %v830 = vpack.c.bf16 %v692, %v689
        %v831 = vpack.c.bf16 %v756, %v753
        %v832 = vpack.c.bf16 %v764, %v761
        %v833 = vpack.c.bf16 %v772, %v769
        %v834 = vpack.c.bf16 %v780, %v777
        %v835 = vpack.c.bf16 %v788, %v785
        %v836 = vpack.c.bf16 %v796, %v793
        %v837 = vpack.c.bf16 %v804, %v801
        %v838 = vpack.c.bf16 %v812, %v809
        %vm839 = vcmask 64512
        %v841 = vsel %vm839, %v815, 0
        %v844 = vsel %vm839, %v823, 0
        %846 = vmatprep.subr.bf16.mxu0 0
        %847 = vmatpush1.bf16.xpose.msra.mxu0 %v844
        %848 = vmatprep.subr.bf16.mxu0 0
        %849 = vmatpush1.bf16.xpose.msra.mxu0 0
        %850 = vmatprep.subr.bf16.mxu0 0
        %851 = vmatpush1.bf16.xpose.msra.mxu0 0
        %852 = vmatprep.subr.bf16.mxu0 0
        %853 = vmatpush1.bf16.xpose.msra.mxu0 0
        %854 = vmatprep.subr.bf16.mxu0 0
        %855 = vmatpush1.bf16.xpose.msra.mxu0 0
        %856 = vmatprep.subr.bf16.mxu0 0
        %857 = vmatpush1.bf16.xpose.msra.mxu0 0
        %858 = vmatprep.subr.bf16.mxu0 0
        %859 = vmatpush1.bf16.xpose.msra.mxu0 0
        %860 = vmatprep.subr.bf16.mxu0 0
        %861 = vmatpush1.bf16.xpose.msra.mxu0 0
        %862 = vmatprep.subr.bf16.mxu0 0
        %863 = vmatpush1.bf16.xpose.msra.mxu0 0
        %864 = vmatprep.subr.bf16.mxu0 0
        %865 = vmatpush1.bf16.xpose.msra.mxu0 0
        %866 = vmatprep.subr.bf16.mxu0 0
        %867 = vmatpush1.bf16.xpose.msra.mxu0 0
        %868 = vmatprep.subr.bf16.mxu0 0
        %869 = vmatpush1.bf16.xpose.msra.mxu0 0
        %870 = vmatprep.subr.bf16.mxu0 0
        %871 = vmatpush1.bf16.xpose.msra.mxu0 0
        %872 = vmatprep.subr.bf16.mxu0 0
        %873 = vmatpush1.bf16.xpose.msra.mxu0 0
        %874 = vmatprep.subr.bf16.mxu0 0
        %875 = vmatpush1.bf16.xpose.msra.mxu0 0
        %876 = vmatprep.subr.bf16.mxu0 0
        %877 = vmatpush1.bf16.xpose.msra.mxu0 0
        %878 = vmatprep.mubr.bf16.mxu0 0
        %879 = vmatmul.mubr.bf16.gmra.mrb[0].mxu0 %v841
        %v880 = vpop.f32.mrb[0].mxu0
        %v881 = vadd.f32 0.0, %v880
        %v882 = vpop.f32.mrb[0].mxu0
        %v883 = vpop.f32.mrb[0].mxu0
        %v884 = vadd.f32 0.0, %v883
        %v885 = vpop.f32.mrb[0].mxu0
        %886 = vdwg.mxu0
        %v888 = vsel %vm839, %v816, 0
        %v891 = vsel %vm839, %v824, 0
        %893 = vmatprep.subr.bf16.mxu0 0
        %894 = vmatpush1.bf16.xpose.msra.mxu0 %v891
        %895 = vmatprep.subr.bf16.mxu0 0
        %896 = vmatpush1.bf16.xpose.msra.mxu0 0
        %897 = vmatprep.subr.bf16.mxu0 0
        %898 = vmatpush1.bf16.xpose.msra.mxu0 0
        %899 = vmatprep.subr.bf16.mxu0 0
        %900 = vmatpush1.bf16.xpose.msra.mxu0 0
        %901 = vmatprep.subr.bf16.mxu0 0
        %902 = vmatpush1.bf16.xpose.msra.mxu0 0
        %903 = vmatprep.subr.bf16.mxu0 0
        %904 = vmatpush1.bf16.xpose.msra.mxu0 0
        %905 = vmatprep.subr.bf16.mxu0 0
        %906 = vmatpush1.bf16.xpose.msra.mxu0 0
        %907 = vmatprep.subr.bf16.mxu0 0
        %908 = vmatpush1.bf16.xpose.msra.mxu0 0
        %909 = vmatprep.subr.bf16.mxu0 0
        %910 = vmatpush1.bf16.xpose.msra.mxu0 0
        %911 = vmatprep.subr.bf16.mxu0 0
        %912 = vmatpush1.bf16.xpose.msra.mxu0 0
        %913 = vmatprep.subr.bf16.mxu0 0
        %914 = vmatpush1.bf16.xpose.msra.mxu0 0
        %915 = vmatprep.subr.bf16.mxu0 0
        %916 = vmatpush1.bf16.xpose.msra.mxu0 0
        %917 = vmatprep.subr.bf16.mxu0 0
        %918 = vmatpush1.bf16.xpose.msra.mxu0 0
        %919 = vmatprep.subr.bf16.mxu0 0
        %920 = vmatpush1.bf16.xpose.msra.mxu0 0
        %921 = vmatprep.subr.bf16.mxu0 0
        %922 = vmatpush1.bf16.xpose.msra.mxu0 0
        %923 = vmatprep.subr.bf16.mxu0 0
        %924 = vmatpush1.bf16.xpose.msra.mxu0 0
        %925 = vmatprep.mubr.bf16.mxu0 0
        %926 = vmatmul.mubr.bf16.gmra.mrb[0].mxu0 %v888
        %v927 = vpop.f32.mrb[0].mxu0
        %v928 = vadd.f32 0.0, %v927
        %v929 = vpop.f32.mrb[0].mxu0
        %v930 = vpop.f32.mrb[0].mxu0
        %v931 = vadd.f32 0.0, %v930
        %v932 = vpop.f32.mrb[0].mxu0
        %933 = vdwg.mxu0
        %v935 = vsel %vm839, %v817, 0
        %v938 = vsel %vm839, %v825, 0
        %940 = vmatprep.subr.bf16.mxu0 0
        %941 = vmatpush1.bf16.xpose.msra.mxu0 %v938
        %942 = vmatprep.subr.bf16.mxu0 0
        %943 = vmatpush1.bf16.xpose.msra.mxu0 0
        %944 = vmatprep.subr.bf16.mxu0 0
        %945 = vmatpush1.bf16.xpose.msra.mxu0 0
        %946 = vmatprep.subr.bf16.mxu0 0
        %947 = vmatpush1.bf16.xpose.msra.mxu0 0
        %948 = vmatprep.subr.bf16.mxu0 0
        %949 = vmatpush1.bf16.xpose.msra.mxu0 0
        %950 = vmatprep.subr.bf16.mxu0 0
        %951 = vmatpush1.bf16.xpose.msra.mxu0 0
        %952 = vmatprep.subr.bf16.mxu0 0
        %953 = vmatpush1.bf16.xpose.msra.mxu0 0
        %954 = vmatprep.subr.bf16.mxu0 0
        %955 = vmatpush1.bf16.xpose.msra.mxu0 0
        %956 = vmatprep.subr.bf16.mxu0 0
        %957 = vmatpush1.bf16.xpose.msra.mxu0 0
        %958 = vmatprep.subr.bf16.mxu0 0
        %959 = vmatpush1.bf16.xpose.msra.mxu0 0
        %960 = vmatprep.subr.bf16.mxu0 0
        %961 = vmatpush1.bf16.xpose.msra.mxu0 0
        %962 = vmatprep.subr.bf16.mxu0 0
        %963 = vmatpush1.bf16.xpose.msra.mxu0 0
        %964 = vmatprep.subr.bf16.mxu0 0
        %965 = vmatpush1.bf16.xpose.msra.mxu0 0
        %966 = vmatprep.subr.bf16.mxu0 0
        %967 = vmatpush1.bf16.xpose.msra.mxu0 0
        %968 = vmatprep.subr.bf16.mxu0 0
        %969 = vmatpush1.bf16.xpose.msra.mxu0 0
        %970 = vmatprep.subr.bf16.mxu0 0
        %971 = vmatpush1.bf16.xpose.msra.mxu0 0
        %972 = vmatprep.mubr.bf16.mxu0 0
        %973 = vmatmul.mubr.bf16.gmra.mrb[0].mxu0 %v935
        %v974 = vpop.f32.mrb[0].mxu0
        %v975 = vadd.f32 0.0, %v974
        %v976 = vpop.f32.mrb[0].mxu0
        %v977 = vpop.f32.mrb[0].mxu0
        %v978 = vadd.f32 0.0, %v977
        %v979 = vpop.f32.mrb[0].mxu0
        %980 = vdwg.mxu0
        %v982 = vsel %vm839, %v818, 0
        %v985 = vsel %vm839, %v826, 0
        %987 = vmatprep.subr.bf16.mxu0 0
        %988 = vmatpush1.bf16.xpose.msra.mxu0 %v985
        %989 = vmatprep.subr.bf16.mxu0 0
        %990 = vmatpush1.bf16.xpose.msra.mxu0 0
        %991 = vmatprep.subr.bf16.mxu0 0
        %992 = vmatpush1.bf16.xpose.msra.mxu0 0
        %993 = vmatprep.subr.bf16.mxu0 0
        %994 = vmatpush1.bf16.xpose.msra.mxu0 0
        %995 = vmatprep.subr.bf16.mxu0 0
        %996 = vmatpush1.bf16.xpose.msra.mxu0 0
        %997 = vmatprep.subr.bf16.mxu0 0
        %998 = vmatpush1.bf16.xpose.msra.mxu0 0
        %999 = vmatprep.subr.bf16.mxu0 0
        %1000 = vmatpush1.bf16.xpose.msra.mxu0 0
        %1001 = vmatprep.subr.bf16.mxu0 0
        %1002 = vmatpush1.bf16.xpose.msra.mxu0 0
        %1003 = vmatprep.subr.bf16.mxu0 0
        %1004 = vmatpush1.bf16.xpose.msra.mxu0 0
        %1005 = vmatprep.subr.bf16.mxu0 0
        %1006 = vmatpush1.bf16.xpose.msra.mxu0 0
        %1007 = vmatprep.subr.bf16.mxu0 0
        %1008 = vmatpush1.bf16.xpose.msra.mxu0 0
        %1009 = vmatprep.subr.bf16.mxu0 0
        %1010 = vmatpush1.bf16.xpose.msra.mxu0 0
        %1011 = vmatprep.subr.bf16.mxu0 0
        %1012 = vmatpush1.bf16.xpose.msra.mxu0 0
        %1013 = vmatprep.subr.bf16.mxu0 0
        %1014 = vmatpush1.bf16.xpose.msra.mxu0 0
        %1015 = vmatprep.subr.bf16.mxu0 0
        %1016 = vmatpush1.bf16.xpose.msra.mxu0 0
        %1017 = vmatprep.subr.bf16.mxu0 0
        %1018 = vmatpush1.bf16.xpose.msra.mxu0 0
        %1019 = vmatprep.mubr.bf16.mxu0 0
        %1020 = vmatmul.mubr.bf16.gmra.mrb[0].mxu0 %v982
        %v1021 = vpop.f32.mrb[0].mxu0
        %v1022 = vadd.f32 0.0, %v1021
        %v1023 = vpop.f32.mrb[0].mxu0
        %v1024 = vpop.f32.mrb[0].mxu0
        %v1025 = vadd.f32 0.0, %v1024
        %v1026 = vpop.f32.mrb[0].mxu0
        %1027 = vdwg.mxu0
        %v1029 = vsel %vm839, %v819, 0
        %v1032 = vsel %vm839, %v827, 0
        %1034 = vmatprep.subr.bf16.mxu0 0
        %1035 = vmatpush1.bf16.xpose.msra.mxu0 %v1032
        %1036 = vmatprep.subr.bf16.mxu0 0
        %1037 = vmatpush1.bf16.xpose.msra.mxu0 0
        %1038 = vmatprep.subr.bf16.mxu0 0
        %1039 = vmatpush1.bf16.xpose.msra.mxu0 0
        %1040 = vmatprep.subr.bf16.mxu0 0
        %1041 = vmatpush1.bf16.xpose.msra.mxu0 0
        %1042 = vmatprep.subr.bf16.mxu0 0
        %1043 = vmatpush1.bf16.xpose.msra.mxu0 0
        %1044 = vmatprep.subr.bf16.mxu0 0
        %1045 = vmatpush1.bf16.xpose.msra.mxu0 0
        %1046 = vmatprep.subr.bf16.mxu0 0
        %1047 = vmatpush1.bf16.xpose.msra.mxu0 0
        %1048 = vmatprep.subr.bf16.mxu0 0
        %1049 = vmatpush1.bf16.xpose.msra.mxu0 0
        %1050 = vmatprep.subr.bf16.mxu0 0
        %1051 = vmatpush1.bf16.xpose.msra.mxu0 0
        %1052 = vmatprep.subr.bf16.mxu0 0
        %1053 = vmatpush1.bf16.xpose.msra.mxu0 0
        %1054 = vmatprep.subr.bf16.mxu0 0
        %1055 = vmatpush1.bf16.xpose.msra.mxu0 0
        %1056 = vmatprep.subr.bf16.mxu0 0
        %1057 = vmatpush1.bf16.xpose.msra.mxu0 0
        %1058 = vmatprep.subr.bf16.mxu0 0
        %1059 = vmatpush1.bf16.xpose.msra.mxu0 0
        %1060 = vmatprep.subr.bf16.mxu0 0
        %1061 = vmatpush1.bf16.xpose.msra.mxu0 0
        %1062 = vmatprep.subr.bf16.mxu0 0
        %1063 = vmatpush1.bf16.xpose.msra.mxu0 0
        %1064 = vmatprep.subr.bf16.mxu0 0
        %1065 = vmatpush1.bf16.xpose.msra.mxu0 0
        %1066 = vmatprep.mubr.bf16.mxu0 0
        %1067 = vmatmul.mubr.bf16.gmra.mrb[0].mxu0 %v1029
        %v1068 = vpop.f32.mrb[0].mxu0
        %v1069 = vadd.f32 0.0, %v1068
        %v1070 = vpop.f32.mrb[0].mxu0
        %v1071 = vpop.f32.mrb[0].mxu0
        %v1072 = vadd.f32 0.0, %v1071
        %v1073 = vpop.f32.mrb[0].mxu0
        %1074 = vdwg.mxu0
        %v1076 = vsel %vm839, %v820, 0
        %v1079 = vsel %vm839, %v828, 0
        %1081 = vmatprep.subr.bf16.mxu0 0
        %1082 = vmatpush1.bf16.xpose.msra.mxu0 %v1079
        %1083 = vmatprep.subr.bf16.mxu0 0
        %1084 = vmatpush1.bf16.xpose.msra.mxu0 0
        %1085 = vmatprep.subr.bf16.mxu0 0
        %1086 = vmatpush1.bf16.xpose.msra.mxu0 0
        %1087 = vmatprep.subr.bf16.mxu0 0
        %1088 = vmatpush1.bf16.xpose.msra.mxu0 0
        %1089 = vmatprep.subr.bf16.mxu0 0
        %1090 = vmatpush1.bf16.xpose.msra.mxu0 0
        %1091 = vmatprep.subr.bf16.mxu0 0
        %1092 = vmatpush1.bf16.xpose.msra.mxu0 0
        %1093 = vmatprep.subr.bf16.mxu0 0
        %1094 = vmatpush1.bf16.xpose.msra.mxu0 0
        %1095 = vmatprep.subr.bf16.mxu0 0
        %1096 = vmatpush1.bf16.xpose.msra.mxu0 0
        %1097 = vmatprep.subr.bf16.mxu0 0
        %1098 = vmatpush1.bf16.xpose.msra.mxu0 0
        %1099 = vmatprep.subr.bf16.mxu0 0
        %1100 = vmatpush1.bf16.xpose.msra.mxu0 0
        %1101 = vmatprep.subr.bf16.mxu0 0
        %1102 = vmatpush1.bf16.xpose.msra.mxu0 0
        %1103 = vmatprep.subr.bf16.mxu0 0
        %1104 = vmatpush1.bf16.xpose.msra.mxu0 0
        %1105 = vmatprep.subr.bf16.mxu0 0
        %1106 = vmatpush1.bf16.xpose.msra.mxu0 0
        %1107 = vmatprep.subr.bf16.mxu0 0
        %1108 = vmatpush1.bf16.xpose.msra.mxu0 0
        %1109 = vmatprep.subr.bf16.mxu0 0
        %1110 = vmatpush1.bf16.xpose.msra.mxu0 0
        %1111 = vmatprep.subr.bf16.mxu0 0
        %1112 = vmatpush1.bf16.xpose.msra.mxu0 0
        %1113 = vmatprep.mubr.bf16.mxu0 0
        %1114 = vmatmul.mubr.bf16.gmra.mrb[0].mxu0 %v1076
        %v1115 = vpop.f32.mrb[0].mxu0
        %v1116 = vadd.f32 0.0, %v1115
        %v1117 = vpop.f32.mrb[0].mxu0
        %v1118 = vpop.f32.mrb[0].mxu0
        %v1119 = vadd.f32 0.0, %v1118
        %v1120 = vpop.f32.mrb[0].mxu0
        %1121 = vdwg.mxu0
        %v1123 = vsel %vm839, %v821, 0
        %v1126 = vsel %vm839, %v829, 0
        %1128 = vmatprep.subr.bf16.mxu0 0
        %1129 = vmatpush1.bf16.xpose.msra.mxu0 %v1126
        %1130 = vmatprep.subr.bf16.mxu0 0
        %1131 = vmatpush1.bf16.xpose.msra.mxu0 0
        %1132 = vmatprep.subr.bf16.mxu0 0
        %1133 = vmatpush1.bf16.xpose.msra.mxu0 0
        %1134 = vmatprep.subr.bf16.mxu0 0
        %1135 = vmatpush1.bf16.xpose.msra.mxu0 0
        %1136 = vmatprep.subr.bf16.mxu0 0
        %1137 = vmatpush1.bf16.xpose.msra.mxu0 0
        %1138 = vmatprep.subr.bf16.mxu0 0
        %1139 = vmatpush1.bf16.xpose.msra.mxu0 0
        %1140 = vmatprep.subr.bf16.mxu0 0
        %1141 = vmatpush1.bf16.xpose.msra.mxu0 0
        %1142 = vmatprep.subr.bf16.mxu0 0
        %1143 = vmatpush1.bf16.xpose.msra.mxu0 0
        %1144 = vmatprep.subr.bf16.mxu0 0
        %1145 = vmatpush1.bf16.xpose.msra.mxu0 0
        %1146 = vmatprep.subr.bf16.mxu0 0
        %1147 = vmatpush1.bf16.xpose.msra.mxu0 0
        %1148 = vmatprep.subr.bf16.mxu0 0
        %1149 = vmatpush1.bf16.xpose.msra.mxu0 0
        %1150 = vmatprep.subr.bf16.mxu0 0
        %1151 = vmatpush1.bf16.xpose.msra.mxu0 0
        %1152 = vmatprep.subr.bf16.mxu0 0
        %1153 = vmatpush1.bf16.xpose.msra.mxu0 0
        %1154 = vmatprep.subr.bf16.mxu0 0
        %1155 = vmatpush1.bf16.xpose.msra.mxu0 0
        %1156 = vmatprep.subr.bf16.mxu0 0
        %1157 = vmatpush1.bf16.xpose.msra.mxu0 0
        %1158 = vmatprep.subr.bf16.mxu0 0
        %1159 = vmatpush1.bf16.xpose.msra.mxu0 0
        %1160 = vmatprep.mubr.bf16.mxu0 0
        %1161 = vmatmul.mubr.bf16.gmra.mrb[0].mxu0 %v1123
        %v1162 = vpop.f32.mrb[0].mxu0
        %v1163 = vadd.f32 0.0, %v1162
        %v1164 = vpop.f32.mrb[0].mxu0
        %v1165 = vpop.f32.mrb[0].mxu0
        %v1166 = vadd.f32 0.0, %v1165
        %v1167 = vpop.f32.mrb[0].mxu0
        %1168 = vdwg.mxu0
        %v1170 = vsel %vm839, %v822, 0
        %v1173 = vsel %vm839, %v830, 0
        %1175 = vmatprep.subr.bf16.mxu0 0
        %1176 = vmatpush1.bf16.xpose.msra.mxu0 %v1173
        %1177 = vmatprep.subr.bf16.mxu0 0
        %1178 = vmatpush1.bf16.xpose.msra.mxu0 0
        %1179 = vmatprep.subr.bf16.mxu0 0
        %1180 = vmatpush1.bf16.xpose.msra.mxu0 0
        %1181 = vmatprep.subr.bf16.mxu0 0
        %1182 = vmatpush1.bf16.xpose.msra.mxu0 0
        %1183 = vmatprep.subr.bf16.mxu0 0
        %1184 = vmatpush1.bf16.xpose.msra.mxu0 0
        %1185 = vmatprep.subr.bf16.mxu0 0
        %1186 = vmatpush1.bf16.xpose.msra.mxu0 0
        %1187 = vmatprep.subr.bf16.mxu0 0
        %1188 = vmatpush1.bf16.xpose.msra.mxu0 0
        %1189 = vmatprep.subr.bf16.mxu0 0
        %1190 = vmatpush1.bf16.xpose.msra.mxu0 0
        %1191 = vmatprep.subr.bf16.mxu0 0
        %1192 = vmatpush1.bf16.xpose.msra.mxu0 0
        %1193 = vmatprep.subr.bf16.mxu0 0
        %1194 = vmatpush1.bf16.xpose.msra.mxu0 0
        %1195 = vmatprep.subr.bf16.mxu0 0
        %1196 = vmatpush1.bf16.xpose.msra.mxu0 0
        %1197 = vmatprep.subr.bf16.mxu0 0
        %1198 = vmatpush1.bf16.xpose.msra.mxu0 0
        %1199 = vmatprep.subr.bf16.mxu0 0
        %1200 = vmatpush1.bf16.xpose.msra.mxu0 0
        %1201 = vmatprep.subr.bf16.mxu0 0
        %1202 = vmatpush1.bf16.xpose.msra.mxu0 0
        %1203 = vmatprep.subr.bf16.mxu0 0
        %1204 = vmatpush1.bf16.xpose.msra.mxu0 0
        %1205 = vmatprep.subr.bf16.mxu0 0
        %1206 = vmatpush1.bf16.xpose.msra.mxu0 0
        %1207 = vmatprep.mubr.bf16.mxu0 0
        %1208 = vmatmul.mubr.bf16.gmra.mrb[0].mxu0 %v1170
        %v1209 = vpop.f32.mrb[0].mxu0
        %v1210 = vadd.f32 0.0, %v1209
        %v1211 = vpop.f32.mrb[0].mxu0
        %v1212 = vpop.f32.mrb[0].mxu0
        %v1213 = vadd.f32 0.0, %v1212
        %v1214 = vpop.f32.mrb[0].mxu0
        %1215 = vdwg.mxu0
        %v1216 = vld [vmem:[#allocation5] sm:$0xff]
        %v1217 = vld [vmem:[#allocation5 + $0x8] sm:$0xff]
        %v1218 = vld [vmem:[#allocation5 + $0x10] sm:$0xff]
        %v1219 = vld [vmem:[#allocation5 + $0x18] sm:$0xff]
        %v1220 = vld [vmem:[#allocation5 + $0x20] sm:$0xff]
        %v1221 = vld [vmem:[#allocation5 + $0x28] sm:$0xff]
        %v1222 = vld [vmem:[#allocation5 + $0x30] sm:$0xff]
        %v1223 = vld [vmem:[#allocation5 + $0x38] sm:$0xff]
        %v1224 = vadd.f32 %v881, %v1216
        %v1225 = vadd.f32 %v884, %v1217
        %v1226 = vadd.f32 %v928, %v1218
        %v1227 = vadd.f32 %v931, %v1219
        %v1228 = vadd.f32 %v975, %v1220
        %v1229 = vadd.f32 %v978, %v1221
        %v1230 = vadd.f32 %v1022, %v1222
        %v1231 = vadd.f32 %v1025, %v1223
        %v1232 = vadd.f32 %v1069, %v1216
        %v1233 = vadd.f32 %v1072, %v1217
        %v1234 = vadd.f32 %v1116, %v1218
        %v1235 = vadd.f32 %v1119, %v1219
        %v1236 = vadd.f32 %v1163, %v1220
        %v1237 = vadd.f32 %v1166, %v1221
        %v1238 = vadd.f32 %v1210, %v1222
        %v1239 = vadd.f32 %v1213, %v1223
        %vm1240 = vcmask 130048
        %v1241 = vsel %vm1240, %v1224, -inf
        %1242 = vmax.xlane.f32.xlu0 %v1241
        %v1243 = vpop.xlane.xlu0 %1242
        %v1244 = vsel %vm1240, %v1225, -inf
        %1245 = vmax.xlane.f32.xlu0 %v1244
        %v1246 = vpop.xlane.xlu0 %1245
        %v1247 = vsel %vm1240, %v1226, -inf
        %1248 = vmax.xlane.f32.xlu0 %v1247
        %v1249 = vpop.xlane.xlu0 %1248
        %v1250 = vsel %vm1240, %v1227, -inf
        %1251 = vmax.xlane.f32.xlu0 %v1250
        %v1252 = vpop.xlane.xlu0 %1251
        %v1253 = vsel %vm1240, %v1228, -inf
        %1254 = vmax.xlane.f32.xlu0 %v1253
        %v1255 = vpop.xlane.xlu0 %1254
        %v1256 = vsel %vm1240, %v1229, -inf
        %1257 = vmax.xlane.f32.xlu0 %v1256
        %v1258 = vpop.xlane.xlu0 %1257
        %v1259 = vsel %vm1240, %v1230, -inf
        %1260 = vmax.xlane.f32.xlu0 %v1259
        %v1261 = vpop.xlane.xlu0 %1260
        %v1262 = vsel %vm1240, %v1231, -inf
        %1263 = vmax.xlane.f32.xlu0 %v1262
        %v1264 = vpop.xlane.xlu0 %1263
        %v1265 = vsel %vm1240, %v1232, -inf
        %1266 = vmax.xlane.f32.xlu0 %v1265
        %v1267 = vpop.xlane.xlu0 %1266
        %v1268 = vsel %vm1240, %v1233, -inf
        %1269 = vmax.xlane.f32.xlu0 %v1268
        %v1270 = vpop.xlane.xlu0 %1269
        %v1271 = vsel %vm1240, %v1234, -inf
        %1272 = vmax.xlane.f32.xlu0 %v1271
        %v1273 = vpop.xlane.xlu0 %1272
        %v1274 = vsel %vm1240, %v1235, -inf
        %1275 = vmax.xlane.f32.xlu0 %v1274
        %v1276 = vpop.xlane.xlu0 %1275
        %v1277 = vsel %vm1240, %v1236, -inf
        %1278 = vmax.xlane.f32.xlu0 %v1277
        %v1279 = vpop.xlane.xlu0 %1278
        %v1280 = vsel %vm1240, %v1237, -inf
        %1281 = vmax.xlane.f32.xlu0 %v1280
        %v1282 = vpop.xlane.xlu0 %1281
        %v1283 = vsel %vm1240, %v1238, -inf
        %1284 = vmax.xlane.f32.xlu0 %v1283
        %v1285 = vpop.xlane.xlu0 %1284
        %v1286 = vsel %vm1240, %v1239, -inf
        %1287 = vmax.xlane.f32.xlu0 %v1286
        %v1288 = vpop.xlane.xlu0 %1287
        %v1289 = vsub.f32 %v1224, %v1243
        %v1290 = vsub.f32 %v1225, %v1246
        %v1291 = vsub.f32 %v1226, %v1249
        %v1292 = vsub.f32 %v1227, %v1252
        %v1293 = vsub.f32 %v1228, %v1255
        %v1294 = vsub.f32 %v1229, %v1258
        %v1295 = vsub.f32 %v1230, %v1261
        %v1296 = vsub.f32 %v1231, %v1264
        %v1297 = vsub.f32 %v1232, %v1267
        %v1298 = vsub.f32 %v1233, %v1270
        %v1299 = vsub.f32 %v1234, %v1273
        %v1300 = vsub.f32 %v1235, %v1276
        %v1301 = vsub.f32 %v1236, %v1279
        %v1302 = vsub.f32 %v1237, %v1282
        %v1303 = vsub.f32 %v1238, %v1285
        %v1304 = vsub.f32 %v1239, %v1288
        %v1305 = vmul.f32 %v1289, 1.442695
        %v1306 = vpow.pop %v1305
        %v1307 = vmul.f32 %v1290, 1.442695
        %v1308 = vpow.pop %v1307
        %v1309 = vmul.f32 %v1291, 1.442695
        %v1310 = vpow.pop %v1309
        %v1311 = vmul.f32 %v1292, 1.442695
        %v1312 = vpow.pop %v1311
        %v1313 = vmul.f32 %v1293, 1.442695
        %v1314 = vpow.pop %v1313
        %v1315 = vmul.f32 %v1294, 1.442695
        %v1316 = vpow.pop %v1315
        %v1317 = vmul.f32 %v1295, 1.442695
        %v1318 = vpow.pop %v1317
        %v1319 = vmul.f32 %v1296, 1.442695
        %v1320 = vpow.pop %v1319
        %v1321 = vmul.f32 %v1297, 1.442695
        %v1322 = vpow.pop %v1321
        %v1323 = vmul.f32 %v1298, 1.442695
        %v1324 = vpow.pop %v1323
        %v1325 = vmul.f32 %v1299, 1.442695
        %v1326 = vpow.pop %v1325
        %v1327 = vmul.f32 %v1300, 1.442695
        %v1328 = vpow.pop %v1327
        %v1329 = vmul.f32 %v1301, 1.442695
        %v1330 = vpow.pop %v1329
        %v1331 = vmul.f32 %v1302, 1.442695
        %v1332 = vpow.pop %v1331
        %v1333 = vmul.f32 %v1303, 1.442695
        %v1334 = vpow.pop %v1333
        %v1335 = vmul.f32 %v1304, 1.442695
        %v1336 = vpow.pop %v1335
        %v1337 = vsel %vm1240, %v1306, 0.0
        %1338 = vadd.xlane.f32.xlu0 %v1337
        %v1339 = vpop.xlane.xlu0 %1338
        %v1340 = vsel %vm1240, %v1308, 0.0
        %1341 = vadd.xlane.f32.xlu0 %v1340
        %v1342 = vpop.xlane.xlu0 %1341
        %v1343 = vsel %vm1240, %v1310, 0.0
        %1344 = vadd.xlane.f32.xlu0 %v1343
        %v1345 = vpop.xlane.xlu0 %1344
        %v1346 = vsel %vm1240, %v1312, 0.0
        %1347 = vadd.xlane.f32.xlu0 %v1346
        %v1348 = vpop.xlane.xlu0 %1347
        %v1349 = vsel %vm1240, %v1314, 0.0
        %1350 = vadd.xlane.f32.xlu0 %v1349
        %v1351 = vpop.xlane.xlu0 %1350
        %v1352 = vsel %vm1240, %v1316, 0.0
        %1353 = vadd.xlane.f32.xlu0 %v1352
        %v1354 = vpop.xlane.xlu0 %1353
        %v1355 = vsel %vm1240, %v1318, 0.0
        %1356 = vadd.xlane.f32.xlu0 %v1355
        %v1357 = vpop.xlane.xlu0 %1356
        %v1358 = vsel %vm1240, %v1320, 0.0
        %1359 = vadd.xlane.f32.xlu0 %v1358
        %v1360 = vpop.xlane.xlu0 %1359
        %v1361 = vsel %vm1240, %v1322, 0.0
        %1362 = vadd.xlane.f32.xlu0 %v1361
        %v1363 = vpop.xlane.xlu0 %1362
        %v1364 = vsel %vm1240, %v1324, 0.0
        %1365 = vadd.xlane.f32.xlu0 %v1364
        %v1366 = vpop.xlane.xlu0 %1365
        %v1367 = vsel %vm1240, %v1326, 0.0
        %1368 = vadd.xlane.f32.xlu0 %v1367
        %v1369 = vpop.xlane.xlu0 %1368
        %v1370 = vsel %vm1240, %v1328, 0.0
        %1371 = vadd.xlane.f32.xlu0 %v1370
        %v1372 = vpop.xlane.xlu0 %1371
        %v1373 = vsel %vm1240, %v1330, 0.0
        %1374 = vadd.xlane.f32.xlu0 %v1373
        %v1375 = vpop.xlane.xlu0 %1374
        %v1376 = vsel %vm1240, %v1332, 0.0
        %1377 = vadd.xlane.f32.xlu0 %v1376
        %v1378 = vpop.xlane.xlu0 %1377
        %v1379 = vsel %vm1240, %v1334, 0.0
        %1380 = vadd.xlane.f32.xlu0 %v1379
        %v1381 = vpop.xlane.xlu0 %1380
        %v1382 = vsel %vm1240, %v1336, 0.0
        %1383 = vadd.xlane.f32.xlu0 %v1382
        %v1384 = vpop.xlane.xlu0 %1383
        %v1385 = vrcp.pop %v1339
        %v1386 = vrcp.pop %v1342
        %v1387 = vrcp.pop %v1345
        %v1388 = vrcp.pop %v1348
        %v1389 = vrcp.pop %v1351
        %v1390 = vrcp.pop %v1354
        %v1391 = vrcp.pop %v1357
        %v1392 = vrcp.pop %v1360
        %v1393 = vrcp.pop %v1363
        %v1394 = vrcp.pop %v1366
        %v1395 = vrcp.pop %v1369
        %v1396 = vrcp.pop %v1372
        %v1397 = vrcp.pop %v1375
        %v1398 = vrcp.pop %v1378
        %v1399 = vrcp.pop %v1381
        %v1400 = vrcp.pop %v1384
        %v1401 = vmul.f32 %v1306, %v1385
        %v1402 = vmul.f32 %v1308, %v1386
        %v1403 = vmul.f32 %v1310, %v1387
        %v1404 = vmul.f32 %v1312, %v1388
        %v1405 = vmul.f32 %v1314, %v1389
        %v1406 = vmul.f32 %v1316, %v1390
        %v1407 = vmul.f32 %v1318, %v1391
        %v1408 = vmul.f32 %v1320, %v1392
        %v1409 = vmul.f32 %v1322, %v1393
        %v1410 = vmul.f32 %v1324, %v1394
        %v1411 = vmul.f32 %v1326, %v1395
        %v1412 = vmul.f32 %v1328, %v1396
        %v1413 = vmul.f32 %v1330, %v1397
        %v1414 = vmul.f32 %v1332, %v1398
        %v1415 = vmul.f32 %v1334, %v1399
        %v1416 = vmul.f32 %v1336, %v1400
        %v1417 = vpack.c.bf16 %v1402, %v1401
        %v1418 = vpack.c.bf16 %v1404, %v1403
        %v1419 = vpack.c.bf16 %v1406, %v1405
        %v1420 = vpack.c.bf16 %v1408, %v1407
        %v1421 = vpack.c.bf16 %v1410, %v1409
        %v1422 = vpack.c.bf16 %v1412, %v1411
        %v1423 = vpack.c.bf16 %v1414, %v1413
        %v1424 = vpack.c.bf16 %v1416, %v1415
        %v1426 = vsel %vm1240, %v1417, 0
        %1428 = vmatprep.subr.bf16.mxu0 0
        %1429 = vmatpush1.bf16.msra.mxu0 %v831
        %1430 = vmatprep.subr.bf16.mxu0 0
        %1431 = vmatpush1.bf16.msra.mxu0 0
        %1432 = vmatprep.subr.bf16.mxu0 0
        %1433 = vmatpush1.bf16.msra.mxu0 0
        %1434 = vmatprep.subr.bf16.mxu0 0
        %1435 = vmatpush1.bf16.msra.mxu0 0
        %1436 = vmatprep.subr.bf16.mxu0 0
        %1437 = vmatpush1.bf16.msra.mxu0 0
        %1438 = vmatprep.subr.bf16.mxu0 0
        %1439 = vmatpush1.bf16.msra.mxu0 0
        %1440 = vmatprep.subr.bf16.mxu0 0
        %1441 = vmatpush1.bf16.msra.mxu0 0
        %1442 = vmatprep.subr.bf16.mxu0 0
        %1443 = vmatpush1.bf16.msra.mxu0 0
        %1444 = vmatprep.subr.bf16.mxu0 0
        %1445 = vmatpush1.bf16.msra.mxu0 0
        %1446 = vmatprep.subr.bf16.mxu0 0
        %1447 = vmatpush1.bf16.msra.mxu0 0
        %1448 = vmatprep.subr.bf16.mxu0 0
        %1449 = vmatpush1.bf16.msra.mxu0 0
        %1450 = vmatprep.subr.bf16.mxu0 0
        %1451 = vmatpush1.bf16.msra.mxu0 0
        %1452 = vmatprep.subr.bf16.mxu0 0
        %1453 = vmatpush1.bf16.msra.mxu0 0
        %1454 = vmatprep.subr.bf16.mxu0 0
        %1455 = vmatpush1.bf16.msra.mxu0 0
        %1456 = vmatprep.subr.bf16.mxu0 0
        %1457 = vmatpush1.bf16.msra.mxu0 0
        %1458 = vmatprep.subr.bf16.mxu0 0
        %1459 = vmatpush1.bf16.msra.mxu0 0
        %1460 = vmatprep.mubr.bf16.mxu0 0
        %1461 = vmatmul.mubr.bf16.gmra.mrb[0].mxu0 %v1426
        %v1462 = vpop.f32.mrb[0].mxu0
        %v1463 = vadd.f32 0.0, %v1462
        %v1464 = vpop.f32.mrb[0].mxu0
        %v1465 = vpop.f32.mrb[0].mxu0
        %v1466 = vadd.f32 0.0, %v1465
        %v1467 = vpop.f32.mrb[0].mxu0
        %1468 = vdwg.mxu0
        %v1470 = vsel %vm1240, %v1418, 0
        %1472 = vmatprep.subr.bf16.mxu0 0
        %1473 = vmatpush1.bf16.msra.mxu0 %v832
        %1474 = vmatprep.subr.bf16.mxu0 0
        %1475 = vmatpush1.bf16.msra.mxu0 0
        %1476 = vmatprep.subr.bf16.mxu0 0
        %1477 = vmatpush1.bf16.msra.mxu0 0
        %1478 = vmatprep.subr.bf16.mxu0 0
        %1479 = vmatpush1.bf16.msra.mxu0 0
        %1480 = vmatprep.subr.bf16.mxu0 0
        %1481 = vmatpush1.bf16.msra.mxu0 0
        %1482 = vmatprep.subr.bf16.mxu0 0
        %1483 = vmatpush1.bf16.msra.mxu0 0
        %1484 = vmatprep.subr.bf16.mxu0 0
        %1485 = vmatpush1.bf16.msra.mxu0 0
        %1486 = vmatprep.subr.bf16.mxu0 0
        %1487 = vmatpush1.bf16.msra.mxu0 0
        %1488 = vmatprep.subr.bf16.mxu0 0
        %1489 = vmatpush1.bf16.msra.mxu0 0
        %1490 = vmatprep.subr.bf16.mxu0 0
        %1491 = vmatpush1.bf16.msra.mxu0 0
        %1492 = vmatprep.subr.bf16.mxu0 0
        %1493 = vmatpush1.bf16.msra.mxu0 0
        %1494 = vmatprep.subr.bf16.mxu0 0
        %1495 = vmatpush1.bf16.msra.mxu0 0
        %1496 = vmatprep.subr.bf16.mxu0 0
        %1497 = vmatpush1.bf16.msra.mxu0 0
        %1498 = vmatprep.subr.bf16.mxu0 0
        %1499 = vmatpush1.bf16.msra.mxu0 0
        %1500 = vmatprep.subr.bf16.mxu0 0
        %1501 = vmatpush1.bf16.msra.mxu0 0
        %1502 = vmatprep.subr.bf16.mxu0 0
        %1503 = vmatpush1.bf16.msra.mxu0 0
        %1504 = vmatprep.mubr.bf16.mxu0 0
        %1505 = vmatmul.mubr.bf16.gmra.mrb[0].mxu0 %v1470
        %v1506 = vpop.f32.mrb[0].mxu0
        %v1507 = vadd.f32 0.0, %v1506
        %v1508 = vpop.f32.mrb[0].mxu0
        %v1509 = vpop.f32.mrb[0].mxu0
        %v1510 = vadd.f32 0.0, %v1509
        %v1511 = vpop.f32.mrb[0].mxu0
        %1512 = vdwg.mxu0
        %v1514 = vsel %vm1240, %v1419, 0
        %1516 = vmatprep.subr.bf16.mxu0 0
        %1517 = vmatpush1.bf16.msra.mxu0 %v833
        %1518 = vmatprep.subr.bf16.mxu0 0
        %1519 = vmatpush1.bf16.msra.mxu0 0
        %1520 = vmatprep.subr.bf16.mxu0 0
        %1521 = vmatpush1.bf16.msra.mxu0 0
        %1522 = vmatprep.subr.bf16.mxu0 0
        %1523 = vmatpush1.bf16.msra.mxu0 0
        %1524 = vmatprep.subr.bf16.mxu0 0
        %1525 = vmatpush1.bf16.msra.mxu0 0
        %1526 = vmatprep.subr.bf16.mxu0 0
        %1527 = vmatpush1.bf16.msra.mxu0 0
        %1528 = vmatprep.subr.bf16.mxu0 0
        %1529 = vmatpush1.bf16.msra.mxu0 0
        %1530 = vmatprep.subr.bf16.mxu0 0
        %1531 = vmatpush1.bf16.msra.mxu0 0
        %1532 = vmatprep.subr.bf16.mxu0 0
        %1533 = vmatpush1.bf16.msra.mxu0 0
        %1534 = vmatprep.subr.bf16.mxu0 0
        %1535 = vmatpush1.bf16.msra.mxu0 0
        %1536 = vmatprep.subr.bf16.mxu0 0
        %1537 = vmatpush1.bf16.msra.mxu0 0
        %1538 = vmatprep.subr.bf16.mxu0 0
        %1539 = vmatpush1.bf16.msra.mxu0 0
        %1540 = vmatprep.subr.bf16.mxu0 0
        %1541 = vmatpush1.bf16.msra.mxu0 0
        %1542 = vmatprep.subr.bf16.mxu0 0
        %1543 = vmatpush1.bf16.msra.mxu0 0
        %1544 = vmatprep.subr.bf16.mxu0 0
        %1545 = vmatpush1.bf16.msra.mxu0 0
        %1546 = vmatprep.subr.bf16.mxu0 0
        %1547 = vmatpush1.bf16.msra.mxu0 0
        %1548 = vmatprep.mubr.bf16.mxu0 0
        %1549 = vmatmul.mubr.bf16.gmra.mrb[0].mxu0 %v1514
        %v1550 = vpop.f32.mrb[0].mxu0
        %v1551 = vadd.f32 0.0, %v1550
        %v1552 = vpop.f32.mrb[0].mxu0
        %v1553 = vpop.f32.mrb[0].mxu0
        %v1554 = vadd.f32 0.0, %v1553
        %v1555 = vpop.f32.mrb[0].mxu0
        %1556 = vdwg.mxu0
        %v1558 = vsel %vm1240, %v1420, 0
        %1560 = vmatprep.subr.bf16.mxu0 0
        %1561 = vmatpush1.bf16.msra.mxu0 %v834
        %1562 = vmatprep.subr.bf16.mxu0 0
        %1563 = vmatpush1.bf16.msra.mxu0 0
        %1564 = vmatprep.subr.bf16.mxu0 0
        %1565 = vmatpush1.bf16.msra.mxu0 0
        %1566 = vmatprep.subr.bf16.mxu0 0
        %1567 = vmatpush1.bf16.msra.mxu0 0
        %1568 = vmatprep.subr.bf16.mxu0 0
        %1569 = vmatpush1.bf16.msra.mxu0 0
        %1570 = vmatprep.subr.bf16.mxu0 0
        %1571 = vmatpush1.bf16.msra.mxu0 0
        %1572 = vmatprep.subr.bf16.mxu0 0
        %1573 = vmatpush1.bf16.msra.mxu0 0
        %1574 = vmatprep.subr.bf16.mxu0 0
        %1575 = vmatpush1.bf16.msra.mxu0 0
        %1576 = vmatprep.subr.bf16.mxu0 0
        %1577 = vmatpush1.bf16.msra.mxu0 0
        %1578 = vmatprep.subr.bf16.mxu0 0
        %1579 = vmatpush1.bf16.msra.mxu0 0
        %1580 = vmatprep.subr.bf16.mxu0 0
        %1581 = vmatpush1.bf16.msra.mxu0 0
        %1582 = vmatprep.subr.bf16.mxu0 0
        %1583 = vmatpush1.bf16.msra.mxu0 0
        %1584 = vmatprep.subr.bf16.mxu0 0
        %1585 = vmatpush1.bf16.msra.mxu0 0
        %1586 = vmatprep.subr.bf16.mxu0 0
        %1587 = vmatpush1.bf16.msra.mxu0 0
        %1588 = vmatprep.subr.bf16.mxu0 0
        %1589 = vmatpush1.bf16.msra.mxu0 0
        %1590 = vmatprep.subr.bf16.mxu0 0
        %1591 = vmatpush1.bf16.msra.mxu0 0
        %1592 = vmatprep.mubr.bf16.mxu0 0
        %1593 = vmatmul.mubr.bf16.gmra.mrb[0].mxu0 %v1558
        %v1594 = vpop.f32.mrb[0].mxu0
        %v1595 = vadd.f32 0.0, %v1594
        %v1596 = vpop.f32.mrb[0].mxu0
        %v1597 = vpop.f32.mrb[0].mxu0
        %v1598 = vadd.f32 0.0, %v1597
        %v1599 = vpop.f32.mrb[0].mxu0
        %1600 = vdwg.mxu0
        %v1602 = vsel %vm1240, %v1421, 0
        %1604 = vmatprep.subr.bf16.mxu0 0
        %1605 = vmatpush1.bf16.msra.mxu0 %v835
        %1606 = vmatprep.subr.bf16.mxu0 0
        %1607 = vmatpush1.bf16.msra.mxu0 0
        %1608 = vmatprep.subr.bf16.mxu0 0
        %1609 = vmatpush1.bf16.msra.mxu0 0
        %1610 = vmatprep.subr.bf16.mxu0 0
        %1611 = vmatpush1.bf16.msra.mxu0 0
        %1612 = vmatprep.subr.bf16.mxu0 0
        %1613 = vmatpush1.bf16.msra.mxu0 0
        %1614 = vmatprep.subr.bf16.mxu0 0
        %1615 = vmatpush1.bf16.msra.mxu0 0
        %1616 = vmatprep.subr.bf16.mxu0 0
        %1617 = vmatpush1.bf16.msra.mxu0 0
        %1618 = vmatprep.subr.bf16.mxu0 0
        %1619 = vmatpush1.bf16.msra.mxu0 0
        %1620 = vmatprep.subr.bf16.mxu0 0
        %1621 = vmatpush1.bf16.msra.mxu0 0
        %1622 = vmatprep.subr.bf16.mxu0 0
        %1623 = vmatpush1.bf16.msra.mxu0 0
        %1624 = vmatprep.subr.bf16.mxu0 0
        %1625 = vmatpush1.bf16.msra.mxu0 0
        %1626 = vmatprep.subr.bf16.mxu0 0
        %1627 = vmatpush1.bf16.msra.mxu0 0
        %1628 = vmatprep.subr.bf16.mxu0 0
        %1629 = vmatpush1.bf16.msra.mxu0 0
        %1630 = vmatprep.subr.bf16.mxu0 0
        %1631 = vmatpush1.bf16.msra.mxu0 0
        %1632 = vmatprep.subr.bf16.mxu0 0
        %1633 = vmatpush1.bf16.msra.mxu0 0
        %1634 = vmatprep.subr.bf16.mxu0 0
        %1635 = vmatpush1.bf16.msra.mxu0 0
        %1636 = vmatprep.mubr.bf16.mxu0 0
        %1637 = vmatmul.mubr.bf16.gmra.mrb[0].mxu0 %v1602
        %v1638 = vpop.f32.mrb[0].mxu0
        %v1639 = vadd.f32 0.0, %v1638
        %v1640 = vpop.f32.mrb[0].mxu0
        %v1641 = vpop.f32.mrb[0].mxu0
        %v1642 = vadd.f32 0.0, %v1641
        %v1643 = vpop.f32.mrb[0].mxu0
        %1644 = vdwg.mxu0
        %v1646 = vsel %vm1240, %v1422, 0
        %1648 = vmatprep.subr.bf16.mxu0 0
        %1649 = vmatpush1.bf16.msra.mxu0 %v836
        %1650 = vmatprep.subr.bf16.mxu0 0
        %1651 = vmatpush1.bf16.msra.mxu0 0
        %1652 = vmatprep.subr.bf16.mxu0 0
        %1653 = vmatpush1.bf16.msra.mxu0 0
        %1654 = vmatprep.subr.bf16.mxu0 0
        %1655 = vmatpush1.bf16.msra.mxu0 0
        %1656 = vmatprep.subr.bf16.mxu0 0
        %1657 = vmatpush1.bf16.msra.mxu0 0
        %1658 = vmatprep.subr.bf16.mxu0 0
        %1659 = vmatpush1.bf16.msra.mxu0 0
        %1660 = vmatprep.subr.bf16.mxu0 0
        %1661 = vmatpush1.bf16.msra.mxu0 0
        %1662 = vmatprep.subr.bf16.mxu0 0
        %1663 = vmatpush1.bf16.msra.mxu0 0
        %1664 = vmatprep.subr.bf16.mxu0 0
        %1665 = vmatpush1.bf16.msra.mxu0 0
        %1666 = vmatprep.subr.bf16.mxu0 0
        %1667 = vmatpush1.bf16.msra.mxu0 0
        %1668 = vmatprep.subr.bf16.mxu0 0
        %1669 = vmatpush1.bf16.msra.mxu0 0
        %1670 = vmatprep.subr.bf16.mxu0 0
        %1671 = vmatpush1.bf16.msra.mxu0 0
        %1672 = vmatprep.subr.bf16.mxu0 0
        %1673 = vmatpush1.bf16.msra.mxu0 0
        %1674 = vmatprep.subr.bf16.mxu0 0
        %1675 = vmatpush1.bf16.msra.mxu0 0
        %1676 = vmatprep.subr.bf16.mxu0 0
        %1677 = vmatpush1.bf16.msra.mxu0 0
        %1678 = vmatprep.subr.bf16.mxu0 0
        %1679 = vmatpush1.bf16.msra.mxu0 0
        %1680 = vmatprep.mubr.bf16.mxu0 0
        %1681 = vmatmul.mubr.bf16.gmra.mrb[0].mxu0 %v1646
        %v1682 = vpop.f32.mrb[0].mxu0
        %v1683 = vadd.f32 0.0, %v1682
        %v1684 = vpop.f32.mrb[0].mxu0
        %v1685 = vpop.f32.mrb[0].mxu0
        %v1686 = vadd.f32 0.0, %v1685
        %v1687 = vpop.f32.mrb[0].mxu0
        %1688 = vdwg.mxu0
        %v1690 = vsel %vm1240, %v1423, 0
        %1692 = vmatprep.subr.bf16.mxu0 0
        %1693 = vmatpush1.bf16.msra.mxu0 %v837
        %1694 = vmatprep.subr.bf16.mxu0 0
        %1695 = vmatpush1.bf16.msra.mxu0 0
        %1696 = vmatprep.subr.bf16.mxu0 0
        %1697 = vmatpush1.bf16.msra.mxu0 0
        %1698 = vmatprep.subr.bf16.mxu0 0
        %1699 = vmatpush1.bf16.msra.mxu0 0
        %1700 = vmatprep.subr.bf16.mxu0 0
        %1701 = vmatpush1.bf16.msra.mxu0 0
        %1702 = vmatprep.subr.bf16.mxu0 0
        %1703 = vmatpush1.bf16.msra.mxu0 0
        %1704 = vmatprep.subr.bf16.mxu0 0
        %1705 = vmatpush1.bf16.msra.mxu0 0
        %1706 = vmatprep.subr.bf16.mxu0 0
        %1707 = vmatpush1.bf16.msra.mxu0 0
        %1708 = vmatprep.subr.bf16.mxu0 0
        %1709 = vmatpush1.bf16.msra.mxu0 0
        %1710 = vmatprep.subr.bf16.mxu0 0
        %1711 = vmatpush1.bf16.msra.mxu0 0
        %1712 = vmatprep.subr.bf16.mxu0 0
        %1713 = vmatpush1.bf16.msra.mxu0 0
        %1714 = vmatprep.subr.bf16.mxu0 0
        %1715 = vmatpush1.bf16.msra.mxu0 0
        %1716 = vmatprep.subr.bf16.mxu0 0
        %1717 = vmatpush1.bf16.msra.mxu0 0
        %1718 = vmatprep.subr.bf16.mxu0 0
        %1719 = vmatpush1.bf16.msra.mxu0 0
        %1720 = vmatprep.subr.bf16.mxu0 0
        %1721 = vmatpush1.bf16.msra.mxu0 0
        %1722 = vmatprep.subr.bf16.mxu0 0
        %1723 = vmatpush1.bf16.msra.mxu0 0
        %1724 = vmatprep.mubr.bf16.mxu0 0
        %1725 = vmatmul.mubr.bf16.gmra.mrb[0].mxu0 %v1690
        %v1726 = vpop.f32.mrb[0].mxu0
        %v1727 = vadd.f32 0.0, %v1726
        %v1728 = vpop.f32.mrb[0].mxu0
        %v1729 = vpop.f32.mrb[0].mxu0
        %v1730 = vadd.f32 0.0, %v1729
        %v1731 = vpop.f32.mrb[0].mxu0
        %1732 = vdwg.mxu0
        %v1734 = vsel %vm1240, %v1424, 0
        %1736 = vmatprep.subr.bf16.mxu0 0
        %1737 = vmatpush1.bf16.msra.mxu0 %v838
        %1738 = vmatprep.subr.bf16.mxu0 0
        %1739 = vmatpush1.bf16.msra.mxu0 0
        %1740 = vmatprep.subr.bf16.mxu0 0
        %1741 = vmatpush1.bf16.msra.mxu0 0
        %1742 = vmatprep.subr.bf16.mxu0 0
        %1743 = vmatpush1.bf16.msra.mxu0 0
        %1744 = vmatprep.subr.bf16.mxu0 0
        %1745 = vmatpush1.bf16.msra.mxu0 0
        %1746 = vmatprep.subr.bf16.mxu0 0
        %1747 = vmatpush1.bf16.msra.mxu0 0
        %1748 = vmatprep.subr.bf16.mxu0 0
        %1749 = vmatpush1.bf16.msra.mxu0 0
        %1750 = vmatprep.subr.bf16.mxu0 0
        %1751 = vmatpush1.bf16.msra.mxu0 0
        %1752 = vmatprep.subr.bf16.mxu0 0
        %1753 = vmatpush1.bf16.msra.mxu0 0
        %1754 = vmatprep.subr.bf16.mxu0 0
        %1755 = vmatpush1.bf16.msra.mxu0 0
        %1756 = vmatprep.subr.bf16.mxu0 0
        %1757 = vmatpush1.bf16.msra.mxu0 0
        %1758 = vmatprep.subr.bf16.mxu0 0
        %1759 = vmatpush1.bf16.msra.mxu0 0
        %1760 = vmatprep.subr.bf16.mxu0 0
        %1761 = vmatpush1.bf16.msra.mxu0 0
        %1762 = vmatprep.subr.bf16.mxu0 0
        %1763 = vmatpush1.bf16.msra.mxu0 0
        %1764 = vmatprep.subr.bf16.mxu0 0
        %1765 = vmatpush1.bf16.msra.mxu0 0
        %1766 = vmatprep.subr.bf16.mxu0 0
        %1767 = vmatpush1.bf16.msra.mxu0 0
        %1768 = vmatprep.mubr.bf16.mxu0 0
        %1769 = vmatmul.mubr.bf16.gmra.mrb[0].mxu0 %v1734
        %v1770 = vpop.f32.mrb[0].mxu0
        %v1771 = vadd.f32 0.0, %v1770
        %v1772 = vpop.f32.mrb[0].mxu0
        %v1773 = vpop.f32.mrb[0].mxu0
        %v1774 = vadd.f32 0.0, %v1773
        %v1775 = vpop.f32.mrb[0].mxu0
        %1776 = vdwg.mxu0
        %v1777 = vpack.c.bf16 %v1466, %v1463
        %v1778 = vpack.c.bf16 %v1510, %v1507
        %v1779 = vpack.c.bf16 %v1554, %v1551
        %v1780 = vpack.c.bf16 %v1598, %v1595
        %v1781 = vpack.c.bf16 %v1642, %v1639
        %v1782 = vpack.c.bf16 %v1686, %v1683
        %v1783 = vpack.c.bf16 %v1730, %v1727
        %v1784 = vpack.c.bf16 %v1774, %v1771
        %v1785 = vld [vmem:[#allocation10] sm:$0xf]
        %1787 = vrot.lane.b32.xlu0 %v815, 120
        %v1788 = vpop.permute.xlu0 %1787
        %1790 = vrot.lane.b32.xlu0 %v823, 120
        %v1791 = vpop.permute.xlu0 %1790
        %v1793 = vsel %vm839, %v1788, 0
        %v1796 = vsel %vm839, %v1791, 0
        %1798 = vmatprep.subr.bf16.mxu0 0
        %1799 = vmatpush1.bf16.xpose.msra.mxu0 %v1796
        %1800 = vmatprep.subr.bf16.mxu0 0
        %1801 = vmatpush1.bf16.xpose.msra.mxu0 0
        %1802 = vmatprep.subr.bf16.mxu0 0
        %1803 = vmatpush1.bf16.xpose.msra.mxu0 0
        %1804 = vmatprep.subr.bf16.mxu0 0
        %1805 = vmatpush1.bf16.xpose.msra.mxu0 0
        %1806 = vmatprep.subr.bf16.mxu0 0
        %1807 = vmatpush1.bf16.xpose.msra.mxu0 0
        %1808 = vmatprep.subr.bf16.mxu0 0
        %1809 = vmatpush1.bf16.xpose.msra.mxu0 0
        %1810 = vmatprep.subr.bf16.mxu0 0
        %1811 = vmatpush1.bf16.xpose.msra.mxu0 0
        %1812 = vmatprep.subr.bf16.mxu0 0
        %1813 = vmatpush1.bf16.xpose.msra.mxu0 0
        %1814 = vmatprep.subr.bf16.mxu0 0
        %1815 = vmatpush1.bf16.xpose.msra.mxu0 0
        %1816 = vmatprep.subr.bf16.mxu0 0
        %1817 = vmatpush1.bf16.xpose.msra.mxu0 0
        %1818 = vmatprep.subr.bf16.mxu0 0
        %1819 = vmatpush1.bf16.xpose.msra.mxu0 0
        %1820 = vmatprep.subr.bf16.mxu0 0
        %1821 = vmatpush1.bf16.xpose.msra.mxu0 0
        %1822 = vmatprep.subr.bf16.mxu0 0
        %1823 = vmatpush1.bf16.xpose.msra.mxu0 0
        %1824 = vmatprep.subr.bf16.mxu0 0
        %1825 = vmatpush1.bf16.xpose.msra.mxu0 0
        %1826 = vmatprep.subr.bf16.mxu0 0
        %1827 = vmatpush1.bf16.xpose.msra.mxu0 0
        %1828 = vmatprep.subr.bf16.mxu0 0
        %1829 = vmatpush1.bf16.xpose.msra.mxu0 0
        %1830 = vmatprep.mubr.bf16.mxu0 0
        %1831 = vmatmul.mubr.bf16.gmra.mrb[0].mxu0 %v1793
        %v1832 = vpop.f32.mrb[0].mxu0
        %v1833 = vadd.f32 0.0, %v1832
        %v1834 = vpop.f32.mrb[0].mxu0
        %v1835 = vpop.f32.mrb[0].mxu0
        %v1836 = vadd.f32 0.0, %v1835
        %v1837 = vpop.f32.mrb[0].mxu0
        %1838 = vdwg.mxu0
        %1840 = vrot.lane.b32.xlu0 %v816, 120
        %v1841 = vpop.permute.xlu0 %1840
        %1843 = vrot.lane.b32.xlu0 %v824, 120
        %v1844 = vpop.permute.xlu0 %1843
        %v1846 = vsel %vm839, %v1841, 0
        %v1849 = vsel %vm839, %v1844, 0
        %1851 = vmatprep.subr.bf16.mxu0 0
        %1852 = vmatpush1.bf16.xpose.msra.mxu0 %v1849
        %1853 = vmatprep.subr.bf16.mxu0 0
        %1854 = vmatpush1.bf16.xpose.msra.mxu0 0
        %1855 = vmatprep.subr.bf16.mxu0 0
        %1856 = vmatpush1.bf16.xpose.msra.mxu0 0
        %1857 = vmatprep.subr.bf16.mxu0 0
        %1858 = vmatpush1.bf16.xpose.msra.mxu0 0
        %1859 = vmatprep.subr.bf16.mxu0 0
        %1860 = vmatpush1.bf16.xpose.msra.mxu0 0
        %1861 = vmatprep.subr.bf16.mxu0 0
        %1862 = vmatpush1.bf16.xpose.msra.mxu0 0
        %1863 = vmatprep.subr.bf16.mxu0 0
        %1864 = vmatpush1.bf16.xpose.msra.mxu0 0
        %1865 = vmatprep.subr.bf16.mxu0 0
        %1866 = vmatpush1.bf16.xpose.msra.mxu0 0
        %1867 = vmatprep.subr.bf16.mxu0 0
        %1868 = vmatpush1.bf16.xpose.msra.mxu0 0
        %1869 = vmatprep.subr.bf16.mxu0 0
        %1870 = vmatpush1.bf16.xpose.msra.mxu0 0
        %1871 = vmatprep.subr.bf16.mxu0 0
        %1872 = vmatpush1.bf16.xpose.msra.mxu0 0
        %1873 = vmatprep.subr.bf16.mxu0 0
        %1874 = vmatpush1.bf16.xpose.msra.mxu0 0
        %1875 = vmatprep.subr.bf16.mxu0 0
        %1876 = vmatpush1.bf16.xpose.msra.mxu0 0
        %1877 = vmatprep.subr.bf16.mxu0 0
        %1878 = vmatpush1.bf16.xpose.msra.mxu0 0
        %1879 = vmatprep.subr.bf16.mxu0 0
        %1880 = vmatpush1.bf16.xpose.msra.mxu0 0
        %1881 = vmatprep.subr.bf16.mxu0 0
        %1882 = vmatpush1.bf16.xpose.msra.mxu0 0
        %1883 = vmatprep.mubr.bf16.mxu0 0
        %1884 = vmatmul.mubr.bf16.gmra.mrb[0].mxu0 %v1846
        %v1885 = vpop.f32.mrb[0].mxu0
        %v1886 = vadd.f32 0.0, %v1885
        %v1887 = vpop.f32.mrb[0].mxu0
        %v1888 = vpop.f32.mrb[0].mxu0
        %v1889 = vadd.f32 0.0, %v1888
        %v1890 = vpop.f32.mrb[0].mxu0
        %1891 = vdwg.mxu0
        %1893 = vrot.lane.b32.xlu0 %v817, 120
        %v1894 = vpop.permute.xlu0 %1893
        %1896 = vrot.lane.b32.xlu0 %v825, 120
        %v1897 = vpop.permute.xlu0 %1896
        %v1899 = vsel %vm839, %v1894, 0
        %v1902 = vsel %vm839, %v1897, 0
        %1904 = vmatprep.subr.bf16.mxu0 0
        %1905 = vmatpush1.bf16.xpose.msra.mxu0 %v1902
        %1906 = vmatprep.subr.bf16.mxu0 0
        %1907 = vmatpush1.bf16.xpose.msra.mxu0 0
        %1908 = vmatprep.subr.bf16.mxu0 0
        %1909 = vmatpush1.bf16.xpose.msra.mxu0 0
        %1910 = vmatprep.subr.bf16.mxu0 0
        %1911 = vmatpush1.bf16.xpose.msra.mxu0 0
        %1912 = vmatprep.subr.bf16.mxu0 0
        %1913 = vmatpush1.bf16.xpose.msra.mxu0 0
        %1914 = vmatprep.subr.bf16.mxu0 0
        %1915 = vmatpush1.bf16.xpose.msra.mxu0 0
        %1916 = vmatprep.subr.bf16.mxu0 0
        %1917 = vmatpush1.bf16.xpose.msra.mxu0 0
        %1918 = vmatprep.subr.bf16.mxu0 0
        %1919 = vmatpush1.bf16.xpose.msra.mxu0 0
        %1920 = vmatprep.subr.bf16.mxu0 0
        %1921 = vmatpush1.bf16.xpose.msra.mxu0 0
        %1922 = vmatprep.subr.bf16.mxu0 0
        %1923 = vmatpush1.bf16.xpose.msra.mxu0 0
        %1924 = vmatprep.subr.bf16.mxu0 0
        %1925 = vmatpush1.bf16.xpose.msra.mxu0 0
        %1926 = vmatprep.subr.bf16.mxu0 0
        %1927 = vmatpush1.bf16.xpose.msra.mxu0 0
        %1928 = vmatprep.subr.bf16.mxu0 0
        %1929 = vmatpush1.bf16.xpose.msra.mxu0 0
        %1930 = vmatprep.subr.bf16.mxu0 0
        %1931 = vmatpush1.bf16.xpose.msra.mxu0 0
        %1932 = vmatprep.subr.bf16.mxu0 0
        %1933 = vmatpush1.bf16.xpose.msra.mxu0 0
        %1934 = vmatprep.subr.bf16.mxu0 0
        %1935 = vmatpush1.bf16.xpose.msra.mxu0 0
        %1936 = vmatprep.mubr.bf16.mxu0 0
        %1937 = vmatmul.mubr.bf16.gmra.mrb[0].mxu0 %v1899
        %v1938 = vpop.f32.mrb[0].mxu0
        %v1939 = vadd.f32 0.0, %v1938
        %v1940 = vpop.f32.mrb[0].mxu0
        %v1941 = vpop.f32.mrb[0].mxu0
        %v1942 = vadd.f32 0.0, %v1941
        %v1943 = vpop.f32.mrb[0].mxu0
        %1944 = vdwg.mxu0
        %1946 = vrot.lane.b32.xlu0 %v818, 120
        %v1947 = vpop.permute.xlu0 %1946
        %1949 = vrot.lane.b32.xlu0 %v826, 120
        %v1950 = vpop.permute.xlu0 %1949
        %v1952 = vsel %vm839, %v1947, 0
        %v1955 = vsel %vm839, %v1950, 0
        %1957 = vmatprep.subr.bf16.mxu0 0
        %1958 = vmatpush1.bf16.xpose.msra.mxu0 %v1955
        %1959 = vmatprep.subr.bf16.mxu0 0
        %1960 = vmatpush1.bf16.xpose.msra.mxu0 0
        %1961 = vmatprep.subr.bf16.mxu0 0
        %1962 = vmatpush1.bf16.xpose.msra.mxu0 0
        %1963 = vmatprep.subr.bf16.mxu0 0
        %1964 = vmatpush1.bf16.xpose.msra.mxu0 0
        %1965 = vmatprep.subr.bf16.mxu0 0
        %1966 = vmatpush1.bf16.xpose.msra.mxu0 0
        %1967 = vmatprep.subr.bf16.mxu0 0
        %1968 = vmatpush1.bf16.xpose.msra.mxu0 0
        %1969 = vmatprep.subr.bf16.mxu0 0
        %1970 = vmatpush1.bf16.xpose.msra.mxu0 0
        %1971 = vmatprep.subr.bf16.mxu0 0
        %1972 = vmatpush1.bf16.xpose.msra.mxu0 0
        %1973 = vmatprep.subr.bf16.mxu0 0
        %1974 = vmatpush1.bf16.xpose.msra.mxu0 0
        %1975 = vmatprep.subr.bf16.mxu0 0
        %1976 = vmatpush1.bf16.xpose.msra.mxu0 0
        %1977 = vmatprep.subr.bf16.mxu0 0
        %1978 = vmatpush1.bf16.xpose.msra.mxu0 0
        %1979 = vmatprep.subr.bf16.mxu0 0
        %1980 = vmatpush1.bf16.xpose.msra.mxu0 0
        %1981 = vmatprep.subr.bf16.mxu0 0
        %1982 = vmatpush1.bf16.xpose.msra.mxu0 0
        %1983 = vmatprep.subr.bf16.mxu0 0
        %1984 = vmatpush1.bf16.xpose.msra.mxu0 0
        %1985 = vmatprep.subr.bf16.mxu0 0
        %1986 = vmatpush1.bf16.xpose.msra.mxu0 0
        %1987 = vmatprep.subr.bf16.mxu0 0
        %1988 = vmatpush1.bf16.xpose.msra.mxu0 0
        %1989 = vmatprep.mubr.bf16.mxu0 0
        %1990 = vmatmul.mubr.bf16.gmra.mrb[0].mxu0 %v1952
        %v1991 = vpop.f32.mrb[0].mxu0
        %v1992 = vadd.f32 0.0, %v1991
        %v1993 = vpop.f32.mrb[0].mxu0
        %v1994 = vpop.f32.mrb[0].mxu0
        %v1995 = vadd.f32 0.0, %v1994
        %v1996 = vpop.f32.mrb[0].mxu0
        %1997 = vdwg.mxu0
        %1999 = vrot.lane.b32.xlu0 %v819, 120
        %v2000 = vpop.permute.xlu0 %1999
        %2002 = vrot.lane.b32.xlu0 %v827, 120
        %v2003 = vpop.permute.xlu0 %2002
        %v2005 = vsel %vm839, %v2000, 0
        %v2008 = vsel %vm839, %v2003, 0
        %2010 = vmatprep.subr.bf16.mxu0 0
        %2011 = vmatpush1.bf16.xpose.msra.mxu0 %v2008
        %2012 = vmatprep.subr.bf16.mxu0 0
        %2013 = vmatpush1.bf16.xpose.msra.mxu0 0
        %2014 = vmatprep.subr.bf16.mxu0 0
        %2015 = vmatpush1.bf16.xpose.msra.mxu0 0
        %2016 = vmatprep.subr.bf16.mxu0 0
        %2017 = vmatpush1.bf16.xpose.msra.mxu0 0
        %2018 = vmatprep.subr.bf16.mxu0 0
        %2019 = vmatpush1.bf16.xpose.msra.mxu0 0
        %2020 = vmatprep.subr.bf16.mxu0 0
        %2021 = vmatpush1.bf16.xpose.msra.mxu0 0
        %2022 = vmatprep.subr.bf16.mxu0 0
        %2023 = vmatpush1.bf16.xpose.msra.mxu0 0
        %2024 = vmatprep.subr.bf16.mxu0 0
        %2025 = vmatpush1.bf16.xpose.msra.mxu0 0
        %2026 = vmatprep.subr.bf16.mxu0 0
        %2027 = vmatpush1.bf16.xpose.msra.mxu0 0
        %2028 = vmatprep.subr.bf16.mxu0 0
        %2029 = vmatpush1.bf16.xpose.msra.mxu0 0
        %2030 = vmatprep.subr.bf16.mxu0 0
        %2031 = vmatpush1.bf16.xpose.msra.mxu0 0
        %2032 = vmatprep.subr.bf16.mxu0 0
        %2033 = vmatpush1.bf16.xpose.msra.mxu0 0
        %2034 = vmatprep.subr.bf16.mxu0 0
        %2035 = vmatpush1.bf16.xpose.msra.mxu0 0
        %2036 = vmatprep.subr.bf16.mxu0 0
        %2037 = vmatpush1.bf16.xpose.msra.mxu0 0
        %2038 = vmatprep.subr.bf16.mxu0 0
        %2039 = vmatpush1.bf16.xpose.msra.mxu0 0
        %2040 = vmatprep.subr.bf16.mxu0 0
        %2041 = vmatpush1.bf16.xpose.msra.mxu0 0
        %2042 = vmatprep.mubr.bf16.mxu0 0
        %2043 = vmatmul.mubr.bf16.gmra.mrb[0].mxu0 %v2005
        %v2044 = vpop.f32.mrb[0].mxu0
        %v2045 = vadd.f32 0.0, %v2044
        %v2046 = vpop.f32.mrb[0].mxu0
        %v2047 = vpop.f32.mrb[0].mxu0
        %v2048 = vadd.f32 0.0, %v2047
        %v2049 = vpop.f32.mrb[0].mxu0
        %2050 = vdwg.mxu0
        %2052 = vrot.lane.b32.xlu0 %v820, 120
        %v2053 = vpop.permute.xlu0 %2052
        %2055 = vrot.lane.b32.xlu0 %v828, 120
        %v2056 = vpop.permute.xlu0 %2055
        %v2058 = vsel %vm839, %v2053, 0
        %v2061 = vsel %vm839, %v2056, 0
        %2063 = vmatprep.subr.bf16.mxu0 0
        %2064 = vmatpush1.bf16.xpose.msra.mxu0 %v2061
        %2065 = vmatprep.subr.bf16.mxu0 0
        %2066 = vmatpush1.bf16.xpose.msra.mxu0 0
        %2067 = vmatprep.subr.bf16.mxu0 0
        %2068 = vmatpush1.bf16.xpose.msra.mxu0 0
        %2069 = vmatprep.subr.bf16.mxu0 0
        %2070 = vmatpush1.bf16.xpose.msra.mxu0 0
        %2071 = vmatprep.subr.bf16.mxu0 0
        %2072 = vmatpush1.bf16.xpose.msra.mxu0 0
        %2073 = vmatprep.subr.bf16.mxu0 0
        %2074 = vmatpush1.bf16.xpose.msra.mxu0 0
        %2075 = vmatprep.subr.bf16.mxu0 0
        %2076 = vmatpush1.bf16.xpose.msra.mxu0 0
        %2077 = vmatprep.subr.bf16.mxu0 0
        %2078 = vmatpush1.bf16.xpose.msra.mxu0 0
        %2079 = vmatprep.subr.bf16.mxu0 0
        %2080 = vmatpush1.bf16.xpose.msra.mxu0 0
        %2081 = vmatprep.subr.bf16.mxu0 0
        %2082 = vmatpush1.bf16.xpose.msra.mxu0 0
        %2083 = vmatprep.subr.bf16.mxu0 0
        %2084 = vmatpush1.bf16.xpose.msra.mxu0 0
        %2085 = vmatprep.subr.bf16.mxu0 0
        %2086 = vmatpush1.bf16.xpose.msra.mxu0 0
        %2087 = vmatprep.subr.bf16.mxu0 0
        %2088 = vmatpush1.bf16.xpose.msra.mxu0 0
        %2089 = vmatprep.subr.bf16.mxu0 0
        %2090 = vmatpush1.bf16.xpose.msra.mxu0 0
        %2091 = vmatprep.subr.bf16.mxu0 0
        %2092 = vmatpush1.bf16.xpose.msra.mxu0 0
        %2093 = vmatprep.subr.bf16.mxu0 0
        %2094 = vmatpush1.bf16.xpose.msra.mxu0 0
        %2095 = vmatprep.mubr.bf16.mxu0 0
        %2096 = vmatmul.mubr.bf16.gmra.mrb[0].mxu0 %v2058
        %v2097 = vpop.f32.mrb[0].mxu0
        %v2098 = vadd.f32 0.0, %v2097
        %v2099 = vpop.f32.mrb[0].mxu0
        %v2100 = vpop.f32.mrb[0].mxu0
        %v2101 = vadd.f32 0.0, %v2100
        %v2102 = vpop.f32.mrb[0].mxu0
        %2103 = vdwg.mxu0
        %2105 = vrot.lane.b32.xlu0 %v821, 120
        %v2106 = vpop.permute.xlu0 %2105
        %2108 = vrot.lane.b32.xlu0 %v829, 120
        %v2109 = vpop.permute.xlu0 %2108
        %v2111 = vsel %vm839, %v2106, 0
        %v2114 = vsel %vm839, %v2109, 0
        %2116 = vmatprep.subr.bf16.mxu0 0
        %2117 = vmatpush1.bf16.xpose.msra.mxu0 %v2114
        %2118 = vmatprep.subr.bf16.mxu0 0
        %2119 = vmatpush1.bf16.xpose.msra.mxu0 0
        %2120 = vmatprep.subr.bf16.mxu0 0
        %2121 = vmatpush1.bf16.xpose.msra.mxu0 0
        %2122 = vmatprep.subr.bf16.mxu0 0
        %2123 = vmatpush1.bf16.xpose.msra.mxu0 0
        %2124 = vmatprep.subr.bf16.mxu0 0
        %2125 = vmatpush1.bf16.xpose.msra.mxu0 0
        %2126 = vmatprep.subr.bf16.mxu0 0
        %2127 = vmatpush1.bf16.xpose.msra.mxu0 0
        %2128 = vmatprep.subr.bf16.mxu0 0
        %2129 = vmatpush1.bf16.xpose.msra.mxu0 0
        %2130 = vmatprep.subr.bf16.mxu0 0
        %2131 = vmatpush1.bf16.xpose.msra.mxu0 0
        %2132 = vmatprep.subr.bf16.mxu0 0
        %2133 = vmatpush1.bf16.xpose.msra.mxu0 0
        %2134 = vmatprep.subr.bf16.mxu0 0
        %2135 = vmatpush1.bf16.xpose.msra.mxu0 0
        %2136 = vmatprep.subr.bf16.mxu0 0
        %2137 = vmatpush1.bf16.xpose.msra.mxu0 0
        %2138 = vmatprep.subr.bf16.mxu0 0
        %2139 = vmatpush1.bf16.xpose.msra.mxu0 0
        %2140 = vmatprep.subr.bf16.mxu0 0
        %2141 = vmatpush1.bf16.xpose.msra.mxu0 0
        %2142 = vmatprep.subr.bf16.mxu0 0
        %2143 = vmatpush1.bf16.xpose.msra.mxu0 0
        %2144 = vmatprep.subr.bf16.mxu0 0
        %2145 = vmatpush1.bf16.xpose.msra.mxu0 0
        %2146 = vmatprep.subr.bf16.mxu0 0
        %2147 = vmatpush1.bf16.xpose.msra.mxu0 0
        %2148 = vmatprep.mubr.bf16.mxu0 0
        %2149 = vmatmul.mubr.bf16.gmra.mrb[0].mxu0 %v2111
        %v2150 = vpop.f32.mrb[0].mxu0
        %v2151 = vadd.f32 0.0, %v2150
        %v2152 = vpop.f32.mrb[0].mxu0
        %v2153 = vpop.f32.mrb[0].mxu0
        %v2154 = vadd.f32 0.0, %v2153
        %v2155 = vpop.f32.mrb[0].mxu0
        %2156 = vdwg.mxu0
        %2158 = vrot.lane.b32.xlu0 %v822, 120
        %v2159 = vpop.permute.xlu0 %2158
        %2161 = vrot.lane.b32.xlu0 %v830, 120
        %v2162 = vpop.permute.xlu0 %2161
        %v2164 = vsel %vm839, %v2159, 0
        %v2167 = vsel %vm839, %v2162, 0
        %2169 = vmatprep.subr.bf16.mxu0 0
        %2170 = vmatpush1.bf16.xpose.msra.mxu0 %v2167
        %2171 = vmatprep.subr.bf16.mxu0 0
        %2172 = vmatpush1.bf16.xpose.msra.mxu0 0
        %2173 = vmatprep.subr.bf16.mxu0 0
        %2174 = vmatpush1.bf16.xpose.msra.mxu0 0
        %2175 = vmatprep.subr.bf16.mxu0 0
        %2176 = vmatpush1.bf16.xpose.msra.mxu0 0
        %2177 = vmatprep.subr.bf16.mxu0 0
        %2178 = vmatpush1.bf16.xpose.msra.mxu0 0
        %2179 = vmatprep.subr.bf16.mxu0 0
        %2180 = vmatpush1.bf16.xpose.msra.mxu0 0
        %2181 = vmatprep.subr.bf16.mxu0 0
        %2182 = vmatpush1.bf16.xpose.msra.mxu0 0
        %2183 = vmatprep.subr.bf16.mxu0 0
        %2184 = vmatpush1.bf16.xpose.msra.mxu0 0
        %2185 = vmatprep.subr.bf16.mxu0 0
        %2186 = vmatpush1.bf16.xpose.msra.mxu0 0
        %2187 = vmatprep.subr.bf16.mxu0 0
        %2188 = vmatpush1.bf16.xpose.msra.mxu0 0
        %2189 = vmatprep.subr.bf16.mxu0 0
        %2190 = vmatpush1.bf16.xpose.msra.mxu0 0
        %2191 = vmatprep.subr.bf16.mxu0 0
        %2192 = vmatpush1.bf16.xpose.msra.mxu0 0
        %2193 = vmatprep.subr.bf16.mxu0 0
        %2194 = vmatpush1.bf16.xpose.msra.mxu0 0
        %2195 = vmatprep.subr.bf16.mxu0 0
        %2196 = vmatpush1.bf16.xpose.msra.mxu0 0
        %2197 = vmatprep.subr.bf16.mxu0 0
        %2198 = vmatpush1.bf16.xpose.msra.mxu0 0
        %2199 = vmatprep.subr.bf16.mxu0 0
        %2200 = vmatpush1.bf16.xpose.msra.mxu0 0
        %2201 = vmatprep.mubr.bf16.mxu0 0
        %2202 = vmatmul.mubr.bf16.gmra.mrb[0].mxu0 %v2164
        %v2203 = vpop.f32.mrb[0].mxu0
        %v2204 = vadd.f32 0.0, %v2203
        %v2205 = vpop.f32.mrb[0].mxu0
        %v2206 = vpop.f32.mrb[0].mxu0
        %v2207 = vadd.f32 0.0, %v2206
        %v2208 = vpop.f32.mrb[0].mxu0
        %2209 = vdwg.mxu0
        %s2210 = scalar_lea.vmem [#allocation5], 64
        %v2211 = vld [vmem:[%s2210] sm:$0xff]
        %v2212 = vld [vmem:[%s2210 + $0x8] sm:$0xff]
        %v2213 = vld [vmem:[%s2210 + $0x10] sm:$0xff]
        %v2214 = vld [vmem:[%s2210 + $0x18] sm:$0xff]
        %v2215 = vld [vmem:[%s2210 + $0x20] sm:$0xff]
        %v2216 = vld [vmem:[%s2210 + $0x28] sm:$0xff]
        %v2217 = vld [vmem:[%s2210 + $0x30] sm:$0xff]
        %v2218 = vld [vmem:[%s2210 + $0x38] sm:$0xff]
        %v2219 = vadd.f32 %v1833, %v2211
        %v2220 = vadd.f32 %v1836, %v2212
        %v2221 = vadd.f32 %v1886, %v2213
        %v2222 = vadd.f32 %v1889, %v2214
        %v2223 = vadd.f32 %v1939, %v2215
        %v2224 = vadd.f32 %v1942, %v2216
        %v2225 = vadd.f32 %v1992, %v2217
        %v2226 = vadd.f32 %v1995, %v2218
        %v2227 = vadd.f32 %v2045, %v2211
        %v2228 = vadd.f32 %v2048, %v2212
        %v2229 = vadd.f32 %v2098, %v2213
        %v2230 = vadd.f32 %v2101, %v2214
        %v2231 = vadd.f32 %v2151, %v2215
        %v2232 = vadd.f32 %v2154, %v2216
        %v2233 = vadd.f32 %v2204, %v2217
        %v2234 = vadd.f32 %v2207, %v2218
        %v2235 = vsel %vm1240, %v2219, -inf
        %2236 = vmax.xlane.f32.xlu0 %v2235
        %v2237 = vpop.xlane.xlu0 %2236
        %v2238 = vsel %vm1240, %v2220, -inf
        %2239 = vmax.xlane.f32.xlu0 %v2238
        %v2240 = vpop.xlane.xlu0 %2239
        %v2241 = vsel %vm1240, %v2221, -inf
        %2242 = vmax.xlane.f32.xlu0 %v2241
        %v2243 = vpop.xlane.xlu0 %2242
        %v2244 = vsel %vm1240, %v2222, -inf
        %2245 = vmax.xlane.f32.xlu0 %v2244
        %v2246 = vpop.xlane.xlu0 %2245
        %v2247 = vsel %vm1240, %v2223, -inf
        %2248 = vmax.xlane.f32.xlu0 %v2247
        %v2249 = vpop.xlane.xlu0 %2248
        %v2250 = vsel %vm1240, %v2224, -inf
        %2251 = vmax.xlane.f32.xlu0 %v2250
        %v2252 = vpop.xlane.xlu0 %2251
        %v2253 = vsel %vm1240, %v2225, -inf
        %2254 = vmax.xlane.f32.xlu0 %v2253
        %v2255 = vpop.xlane.xlu0 %2254
        %v2256 = vsel %vm1240, %v2226, -inf
        %2257 = vmax.xlane.f32.xlu0 %v2256
        %v2258 = vpop.xlane.xlu0 %2257
        %v2259 = vsel %vm1240, %v2227, -inf
        %2260 = vmax.xlane.f32.xlu0 %v2259
        %v2261 = vpop.xlane.xlu0 %2260
        %v2262 = vsel %vm1240, %v2228, -inf
        %2263 = vmax.xlane.f32.xlu0 %v2262
        %v2264 = vpop.xlane.xlu0 %2263
        %v2265 = vsel %vm1240, %v2229, -inf
        %2266 = vmax.xlane.f32.xlu0 %v2265
        %v2267 = vpop.xlane.xlu0 %2266
        %v2268 = vsel %vm1240, %v2230, -inf
        %2269 = vmax.xlane.f32.xlu0 %v2268
        %v2270 = vpop.xlane.xlu0 %2269
        %v2271 = vsel %vm1240, %v2231, -inf
        %2272 = vmax.xlane.f32.xlu0 %v2271
        %v2273 = vpop.xlane.xlu0 %2272
        %v2274 = vsel %vm1240, %v2232, -inf
        %2275 = vmax.xlane.f32.xlu0 %v2274
        %v2276 = vpop.xlane.xlu0 %2275
        %v2277 = vsel %vm1240, %v2233, -inf
        %2278 = vmax.xlane.f32.xlu0 %v2277
        %v2279 = vpop.xlane.xlu0 %2278
        %v2280 = vsel %vm1240, %v2234, -inf
        %2281 = vmax.xlane.f32.xlu0 %v2280
        %v2282 = vpop.xlane.xlu0 %2281
        %v2283 = vsub.f32 %v2219, %v2237
        %v2284 = vsub.f32 %v2220, %v2240
        %v2285 = vsub.f32 %v2221, %v2243
        %v2286 = vsub.f32 %v2222, %v2246
        %v2287 = vsub.f32 %v2223, %v2249
        %v2288 = vsub.f32 %v2224, %v2252
        %v2289 = vsub.f32 %v2225, %v2255
        %v2290 = vsub.f32 %v2226, %v2258
        %v2291 = vsub.f32 %v2227, %v2261
        %v2292 = vsub.f32 %v2228, %v2264
        %v2293 = vsub.f32 %v2229, %v2267
        %v2294 = vsub.f32 %v2230, %v2270
        %v2295 = vsub.f32 %v2231, %v2273
        %v2296 = vsub.f32 %v2232, %v2276
        %v2297 = vsub.f32 %v2233, %v2279
        %v2298 = vsub.f32 %v2234, %v2282
        %v2299 = vmul.f32 %v2283, 1.442695
        %v2300 = vpow.pop %v2299
        %v2301 = vmul.f32 %v2284, 1.442695
        %v2302 = vpow.pop %v2301
        %v2303 = vmul.f32 %v2285, 1.442695
        %v2304 = vpow.pop %v2303
        %v2305 = vmul.f32 %v2286, 1.442695
        %v2306 = vpow.pop %v2305
        %v2307 = vmul.f32 %v2287, 1.442695
        %v2308 = vpow.pop %v2307
        %v2309 = vmul.f32 %v2288, 1.442695
        %v2310 = vpow.pop %v2309
        %v2311 = vmul.f32 %v2289, 1.442695
        %v2312 = vpow.pop %v2311
        %v2313 = vmul.f32 %v2290, 1.442695
        %v2314 = vpow.pop %v2313
        %v2315 = vmul.f32 %v2291, 1.442695
        %v2316 = vpow.pop %v2315
        %v2317 = vmul.f32 %v2292, 1.442695
        %v2318 = vpow.pop %v2317
        %v2319 = vmul.f32 %v2293, 1.442695
        %v2320 = vpow.pop %v2319
        %v2321 = vmul.f32 %v2294, 1.442695
        %v2322 = vpow.pop %v2321
        %v2323 = vmul.f32 %v2295, 1.442695
        %v2324 = vpow.pop %v2323
        %v2325 = vmul.f32 %v2296, 1.442695
        %v2326 = vpow.pop %v2325
        %v2327 = vmul.f32 %v2297, 1.442695
        %v2328 = vpow.pop %v2327
        %v2329 = vmul.f32 %v2298, 1.442695
        %v2330 = vpow.pop %v2329
        %v2331 = vsel %vm1240, %v2300, 0.0
        %2332 = vadd.xlane.f32.xlu0 %v2331
        %v2333 = vpop.xlane.xlu0 %2332
        %v2334 = vsel %vm1240, %v2302, 0.0
        %2335 = vadd.xlane.f32.xlu0 %v2334
        %v2336 = vpop.xlane.xlu0 %2335
        %v2337 = vsel %vm1240, %v2304, 0.0
        %2338 = vadd.xlane.f32.xlu0 %v2337
        %v2339 = vpop.xlane.xlu0 %2338
        %v2340 = vsel %vm1240, %v2306, 0.0
        %2341 = vadd.xlane.f32.xlu0 %v2340
        %v2342 = vpop.xlane.xlu0 %2341
        %v2343 = vsel %vm1240, %v2308, 0.0
        %2344 = vadd.xlane.f32.xlu0 %v2343
        %v2345 = vpop.xlane.xlu0 %2344
        %v2346 = vsel %vm1240, %v2310, 0.0
        %2347 = vadd.xlane.f32.xlu0 %v2346
        %v2348 = vpop.xlane.xlu0 %2347
        %v2349 = vsel %vm1240, %v2312, 0.0
        %2350 = vadd.xlane.f32.xlu0 %v2349
        %v2351 = vpop.xlane.xlu0 %2350
        %v2352 = vsel %vm1240, %v2314, 0.0
        %2353 = vadd.xlane.f32.xlu0 %v2352
        %v2354 = vpop.xlane.xlu0 %2353
        %v2355 = vsel %vm1240, %v2316, 0.0
        %2356 = vadd.xlane.f32.xlu0 %v2355
        %v2357 = vpop.xlane.xlu0 %2356
        %v2358 = vsel %vm1240, %v2318, 0.0
        %2359 = vadd.xlane.f32.xlu0 %v2358
        %v2360 = vpop.xlane.xlu0 %2359
        %v2361 = vsel %vm1240, %v2320, 0.0
        %2362 = vadd.xlane.f32.xlu0 %v2361
        %v2363 = vpop.xlane.xlu0 %2362
        %v2364 = vsel %vm1240, %v2322, 0.0
        %2365 = vadd.xlane.f32.xlu0 %v2364
        %v2366 = vpop.xlane.xlu0 %2365
        %v2367 = vsel %vm1240, %v2324, 0.0
        %2368 = vadd.xlane.f32.xlu0 %v2367
        %v2369 = vpop.xlane.xlu0 %2368
        %v2370 = vsel %vm1240, %v2326, 0.0
        %2371 = vadd.xlane.f32.xlu0 %v2370
        %v2372 = vpop.xlane.xlu0 %2371
        %v2373 = vsel %vm1240, %v2328, 0.0
        %2374 = vadd.xlane.f32.xlu0 %v2373
        %v2375 = vpop.xlane.xlu0 %2374
        %v2376 = vsel %vm1240, %v2330, 0.0
        %2377 = vadd.xlane.f32.xlu0 %v2376
        %v2378 = vpop.xlane.xlu0 %2377
        %v2379 = vrcp.pop %v2333
        %v2380 = vrcp.pop %v2336
        %v2381 = vrcp.pop %v2339
        %v2382 = vrcp.pop %v2342
        %v2383 = vrcp.pop %v2345
        %v2384 = vrcp.pop %v2348
        %v2385 = vrcp.pop %v2351
        %v2386 = vrcp.pop %v2354
        %v2387 = vrcp.pop %v2357
        %v2388 = vrcp.pop %v2360
        %v2389 = vrcp.pop %v2363
        %v2390 = vrcp.pop %v2366
        %v2391 = vrcp.pop %v2369
        %v2392 = vrcp.pop %v2372
        %v2393 = vrcp.pop %v2375
        %v2394 = vrcp.pop %v2378
        %v2395 = vmul.f32 %v2300, %v2379
        %v2396 = vmul.f32 %v2302, %v2380
        %v2397 = vmul.f32 %v2304, %v2381
        %v2398 = vmul.f32 %v2306, %v2382
        %v2399 = vmul.f32 %v2308, %v2383
        %v2400 = vmul.f32 %v2310, %v2384
        %v2401 = vmul.f32 %v2312, %v2385
        %v2402 = vmul.f32 %v2314, %v2386
        %v2403 = vmul.f32 %v2316, %v2387
        %v2404 = vmul.f32 %v2318, %v2388
        %v2405 = vmul.f32 %v2320, %v2389
        %v2406 = vmul.f32 %v2322, %v2390
        %v2407 = vmul.f32 %v2324, %v2391
        %v2408 = vmul.f32 %v2326, %v2392
        %v2409 = vmul.f32 %v2328, %v2393
        %v2410 = vmul.f32 %v2330, %v2394
        %v2411 = vpack.c.bf16 %v2396, %v2395
        %v2412 = vpack.c.bf16 %v2398, %v2397
        %v2413 = vpack.c.bf16 %v2400, %v2399
        %v2414 = vpack.c.bf16 %v2402, %v2401
        %v2415 = vpack.c.bf16 %v2404, %v2403
        %v2416 = vpack.c.bf16 %v2406, %v2405
        %v2417 = vpack.c.bf16 %v2408, %v2407
        %v2418 = vpack.c.bf16 %v2410, %v2409
        %2420 = vrot.lane.b32.xlu0 %v831, 120
        %v2421 = vpop.permute.xlu0 %2420
        %v2424 = vsel %vm1240, %v2411, 0
        %2426 = vmatprep.subr.bf16.mxu0 0
        %2427 = vmatpush1.bf16.msra.mxu0 %v2421
        %2428 = vmatprep.subr.bf16.mxu0 0
        %2429 = vmatpush1.bf16.msra.mxu0 0
        %2430 = vmatprep.subr.bf16.mxu0 0
        %2431 = vmatpush1.bf16.msra.mxu0 0
        %2432 = vmatprep.subr.bf16.mxu0 0
        %2433 = vmatpush1.bf16.msra.mxu0 0
        %2434 = vmatprep.subr.bf16.mxu0 0
        %2435 = vmatpush1.bf16.msra.mxu0 0
        %2436 = vmatprep.subr.bf16.mxu0 0
        %2437 = vmatpush1.bf16.msra.mxu0 0
        %2438 = vmatprep.subr.bf16.mxu0 0
        %2439 = vmatpush1.bf16.msra.mxu0 0
        %2440 = vmatprep.subr.bf16.mxu0 0
        %2441 = vmatpush1.bf16.msra.mxu0 0
        %2442 = vmatprep.subr.bf16.mxu0 0
        %2443 = vmatpush1.bf16.msra.mxu0 0
        %2444 = vmatprep.subr.bf16.mxu0 0
        %2445 = vmatpush1.bf16.msra.mxu0 0
        %2446 = vmatprep.subr.bf16.mxu0 0
        %2447 = vmatpush1.bf16.msra.mxu0 0
        %2448 = vmatprep.subr.bf16.mxu0 0
        %2449 = vmatpush1.bf16.msra.mxu0 0
        %2450 = vmatprep.subr.bf16.mxu0 0
        %2451 = vmatpush1.bf16.msra.mxu0 0
        %2452 = vmatprep.subr.bf16.mxu0 0
        %2453 = vmatpush1.bf16.msra.mxu0 0
        %2454 = vmatprep.subr.bf16.mxu0 0
        %2455 = vmatpush1.bf16.msra.mxu0 0
        %2456 = vmatprep.subr.bf16.mxu0 0
        %2457 = vmatpush1.bf16.msra.mxu0 0
        %2458 = vmatprep.mubr.bf16.mxu0 0
        %2459 = vmatmul.mubr.bf16.gmra.mrb[0].mxu0 %v2424
        %v2460 = vpop.f32.mrb[0].mxu0
        %v2461 = vadd.f32 0.0, %v2460
        %v2462 = vpop.f32.mrb[0].mxu0
        %v2463 = vpop.f32.mrb[0].mxu0
        %v2464 = vadd.f32 0.0, %v2463
        %v2465 = vpop.f32.mrb[0].mxu0
        %2466 = vdwg.mxu0
        %2468 = vrot.lane.b32.xlu0 %v832, 120
        %v2469 = vpop.permute.xlu0 %2468
        %v2472 = vsel %vm1240, %v2412, 0
        %2474 = vmatprep.subr.bf16.mxu0 0
        %2475 = vmatpush1.bf16.msra.mxu0 %v2469
        %2476 = vmatprep.subr.bf16.mxu0 0
        %2477 = vmatpush1.bf16.msra.mxu0 0
        %2478 = vmatprep.subr.bf16.mxu0 0
        %2479 = vmatpush1.bf16.msra.mxu0 0
        %2480 = vmatprep.subr.bf16.mxu0 0
        %2481 = vmatpush1.bf16.msra.mxu0 0
        %2482 = vmatprep.subr.bf16.mxu0 0
        %2483 = vmatpush1.bf16.msra.mxu0 0
        %2484 = vmatprep.subr.bf16.mxu0 0
        %2485 = vmatpush1.bf16.msra.mxu0 0
        %2486 = vmatprep.subr.bf16.mxu0 0
        %2487 = vmatpush1.bf16.msra.mxu0 0
        %2488 = vmatprep.subr.bf16.mxu0 0
        %2489 = vmatpush1.bf16.msra.mxu0 0
        %2490 = vmatprep.subr.bf16.mxu0 0
        %2491 = vmatpush1.bf16.msra.mxu0 0
        %2492 = vmatprep.subr.bf16.mxu0 0
        %2493 = vmatpush1.bf16.msra.mxu0 0
        %2494 = vmatprep.subr.bf16.mxu0 0
        %2495 = vmatpush1.bf16.msra.mxu0 0
        %2496 = vmatprep.subr.bf16.mxu0 0
        %2497 = vmatpush1.bf16.msra.mxu0 0
        %2498 = vmatprep.subr.bf16.mxu0 0
        %2499 = vmatpush1.bf16.msra.mxu0 0
        %2500 = vmatprep.subr.bf16.mxu0 0
        %2501 = vmatpush1.bf16.msra.mxu0 0
        %2502 = vmatprep.subr.bf16.mxu0 0
        %2503 = vmatpush1.bf16.msra.mxu0 0
        %2504 = vmatprep.subr.bf16.mxu0 0
        %2505 = vmatpush1.bf16.msra.mxu0 0
        %2506 = vmatprep.mubr.bf16.mxu0 0
        %2507 = vmatmul.mubr.bf16.gmra.mrb[0].mxu0 %v2472
        %v2508 = vpop.f32.mrb[0].mxu0
        %v2509 = vadd.f32 0.0, %v2508
        %v2510 = vpop.f32.mrb[0].mxu0
        %v2511 = vpop.f32.mrb[0].mxu0
        %v2512 = vadd.f32 0.0, %v2511
        %v2513 = vpop.f32.mrb[0].mxu0
        %2514 = vdwg.mxu0
        %2516 = vrot.lane.b32.xlu0 %v833, 120
        %v2517 = vpop.permute.xlu0 %2516
        %v2520 = vsel %vm1240, %v2413, 0
        %2522 = vmatprep.subr.bf16.mxu0 0
        %2523 = vmatpush1.bf16.msra.mxu0 %v2517
        %2524 = vmatprep.subr.bf16.mxu0 0
        %2525 = vmatpush1.bf16.msra.mxu0 0
        %2526 = vmatprep.subr.bf16.mxu0 0
        %2527 = vmatpush1.bf16.msra.mxu0 0
        %2528 = vmatprep.subr.bf16.mxu0 0
        %2529 = vmatpush1.bf16.msra.mxu0 0
        %2530 = vmatprep.subr.bf16.mxu0 0
        %2531 = vmatpush1.bf16.msra.mxu0 0
        %2532 = vmatprep.subr.bf16.mxu0 0
        %2533 = vmatpush1.bf16.msra.mxu0 0
        %2534 = vmatprep.subr.bf16.mxu0 0
        %2535 = vmatpush1.bf16.msra.mxu0 0
        %2536 = vmatprep.subr.bf16.mxu0 0
        %2537 = vmatpush1.bf16.msra.mxu0 0
        %2538 = vmatprep.subr.bf16.mxu0 0
        %2539 = vmatpush1.bf16.msra.mxu0 0
        %2540 = vmatprep.subr.bf16.mxu0 0
        %2541 = vmatpush1.bf16.msra.mxu0 0
        %2542 = vmatprep.subr.bf16.mxu0 0
        %2543 = vmatpush1.bf16.msra.mxu0 0
        %2544 = vmatprep.subr.bf16.mxu0 0
        %2545 = vmatpush1.bf16.msra.mxu0 0
        %2546 = vmatprep.subr.bf16.mxu0 0
        %2547 = vmatpush1.bf16.msra.mxu0 0
        %2548 = vmatprep.subr.bf16.mxu0 0
        %2549 = vmatpush1.bf16.msra.mxu0 0
        %2550 = vmatprep.subr.bf16.mxu0 0
        %2551 = vmatpush1.bf16.msra.mxu0 0
        %2552 = vmatprep.subr.bf16.mxu0 0
        %2553 = vmatpush1.bf16.msra.mxu0 0
        %2554 = vmatprep.mubr.bf16.mxu0 0
        %2555 = vmatmul.mubr.bf16.gmra.mrb[0].mxu0 %v2520
        %v2556 = vpop.f32.mrb[0].mxu0
        %v2557 = vadd.f32 0.0, %v2556
        %v2558 = vpop.f32.mrb[0].mxu0
        %v2559 = vpop.f32.mrb[0].mxu0
        %v2560 = vadd.f32 0.0, %v2559
        %v2561 = vpop.f32.mrb[0].mxu0
        %2562 = vdwg.mxu0
        %2564 = vrot.lane.b32.xlu0 %v834, 120
        %v2565 = vpop.permute.xlu0 %2564
        %v2568 = vsel %vm1240, %v2414, 0
        %2570 = vmatprep.subr.bf16.mxu0 0
        %2571 = vmatpush1.bf16.msra.mxu0 %v2565
        %2572 = vmatprep.subr.bf16.mxu0 0
        %2573 = vmatpush1.bf16.msra.mxu0 0
        %2574 = vmatprep.subr.bf16.mxu0 0
        %2575 = vmatpush1.bf16.msra.mxu0 0
        %2576 = vmatprep.subr.bf16.mxu0 0
        %2577 = vmatpush1.bf16.msra.mxu0 0
        %2578 = vmatprep.subr.bf16.mxu0 0
        %2579 = vmatpush1.bf16.msra.mxu0 0
        %2580 = vmatprep.subr.bf16.mxu0 0
        %2581 = vmatpush1.bf16.msra.mxu0 0
        %2582 = vmatprep.subr.bf16.mxu0 0
        %2583 = vmatpush1.bf16.msra.mxu0 0
        %2584 = vmatprep.subr.bf16.mxu0 0
        %2585 = vmatpush1.bf16.msra.mxu0 0
        %2586 = vmatprep.subr.bf16.mxu0 0
        %2587 = vmatpush1.bf16.msra.mxu0 0
        %2588 = vmatprep.subr.bf16.mxu0 0
        %2589 = vmatpush1.bf16.msra.mxu0 0
        %2590 = vmatprep.subr.bf16.mxu0 0
        %2591 = vmatpush1.bf16.msra.mxu0 0
        %2592 = vmatprep.subr.bf16.mxu0 0
        %2593 = vmatpush1.bf16.msra.mxu0 0
        %2594 = vmatprep.subr.bf16.mxu0 0
        %2595 = vmatpush1.bf16.msra.mxu0 0
        %2596 = vmatprep.subr.bf16.mxu0 0
        %2597 = vmatpush1.bf16.msra.mxu0 0
        %2598 = vmatprep.subr.bf16.mxu0 0
        %2599 = vmatpush1.bf16.msra.mxu0 0
        %2600 = vmatprep.subr.bf16.mxu0 0
        %2601 = vmatpush1.bf16.msra.mxu0 0
        %2602 = vmatprep.mubr.bf16.mxu0 0
        %2603 = vmatmul.mubr.bf16.gmra.mrb[0].mxu0 %v2568
        %v2604 = vpop.f32.mrb[0].mxu0
        %v2605 = vadd.f32 0.0, %v2604
        %v2606 = vpop.f32.mrb[0].mxu0
        %v2607 = vpop.f32.mrb[0].mxu0
        %v2608 = vadd.f32 0.0, %v2607
        %v2609 = vpop.f32.mrb[0].mxu0
        %2610 = vdwg.mxu0
        %2612 = vrot.lane.b32.xlu0 %v835, 120
        %v2613 = vpop.permute.xlu0 %2612
        %v2616 = vsel %vm1240, %v2415, 0
        %2618 = vmatprep.subr.bf16.mxu0 0
        %2619 = vmatpush1.bf16.msra.mxu0 %v2613
        %2620 = vmatprep.subr.bf16.mxu0 0
        %2621 = vmatpush1.bf16.msra.mxu0 0
        %2622 = vmatprep.subr.bf16.mxu0 0
        %2623 = vmatpush1.bf16.msra.mxu0 0
        %2624 = vmatprep.subr.bf16.mxu0 0
        %2625 = vmatpush1.bf16.msra.mxu0 0
        %2626 = vmatprep.subr.bf16.mxu0 0
        %2627 = vmatpush1.bf16.msra.mxu0 0
        %2628 = vmatprep.subr.bf16.mxu0 0
        %2629 = vmatpush1.bf16.msra.mxu0 0
        %2630 = vmatprep.subr.bf16.mxu0 0
        %2631 = vmatpush1.bf16.msra.mxu0 0
        %2632 = vmatprep.subr.bf16.mxu0 0
        %2633 = vmatpush1.bf16.msra.mxu0 0
        %2634 = vmatprep.subr.bf16.mxu0 0
        %2635 = vmatpush1.bf16.msra.mxu0 0
        %2636 = vmatprep.subr.bf16.mxu0 0
        %2637 = vmatpush1.bf16.msra.mxu0 0
        %2638 = vmatprep.subr.bf16.mxu0 0
        %2639 = vmatpush1.bf16.msra.mxu0 0
        %2640 = vmatprep.subr.bf16.mxu0 0
        %2641 = vmatpush1.bf16.msra.mxu0 0
        %2642 = vmatprep.subr.bf16.mxu0 0
        %2643 = vmatpush1.bf16.msra.mxu0 0
        %2644 = vmatprep.subr.bf16.mxu0 0
        %2645 = vmatpush1.bf16.msra.mxu0 0
        %2646 = vmatprep.subr.bf16.mxu0 0
        %2647 = vmatpush1.bf16.msra.mxu0 0
        %2648 = vmatprep.subr.bf16.mxu0 0
        %2649 = vmatpush1.bf16.msra.mxu0 0
        %2650 = vmatprep.mubr.bf16.mxu0 0
        %2651 = vmatmul.mubr.bf16.gmra.mrb[0].mxu0 %v2616
        %v2652 = vpop.f32.mrb[0].mxu0
        %v2653 = vadd.f32 0.0, %v2652
        %v2654 = vpop.f32.mrb[0].mxu0
        %v2655 = vpop.f32.mrb[0].mxu0
        %v2656 = vadd.f32 0.0, %v2655
        %v2657 = vpop.f32.mrb[0].mxu0
        %2658 = vdwg.mxu0
        %2660 = vrot.lane.b32.xlu0 %v836, 120
        %v2661 = vpop.permute.xlu0 %2660
        %v2664 = vsel %vm1240, %v2416, 0
        %2666 = vmatprep.subr.bf16.mxu0 0
        %2667 = vmatpush1.bf16.msra.mxu0 %v2661
        %2668 = vmatprep.subr.bf16.mxu0 0
        %2669 = vmatpush1.bf16.msra.mxu0 0
        %2670 = vmatprep.subr.bf16.mxu0 0
        %2671 = vmatpush1.bf16.msra.mxu0 0
        %2672 = vmatprep.subr.bf16.mxu0 0
        %2673 = vmatpush1.bf16.msra.mxu0 0
        %2674 = vmatprep.subr.bf16.mxu0 0
        %2675 = vmatpush1.bf16.msra.mxu0 0
        %2676 = vmatprep.subr.bf16.mxu0 0
        %2677 = vmatpush1.bf16.msra.mxu0 0
        %2678 = vmatprep.subr.bf16.mxu0 0
        %2679 = vmatpush1.bf16.msra.mxu0 0
        %2680 = vmatprep.subr.bf16.mxu0 0
        %2681 = vmatpush1.bf16.msra.mxu0 0
        %2682 = vmatprep.subr.bf16.mxu0 0
        %2683 = vmatpush1.bf16.msra.mxu0 0
        %2684 = vmatprep.subr.bf16.mxu0 0
        %2685 = vmatpush1.bf16.msra.mxu0 0
        %2686 = vmatprep.subr.bf16.mxu0 0
        %2687 = vmatpush1.bf16.msra.mxu0 0
        %2688 = vmatprep.subr.bf16.mxu0 0
        %2689 = vmatpush1.bf16.msra.mxu0 0
        %2690 = vmatprep.subr.bf16.mxu0 0
        %2691 = vmatpush1.bf16.msra.mxu0 0
        %2692 = vmatprep.subr.bf16.mxu0 0
        %2693 = vmatpush1.bf16.msra.mxu0 0
        %2694 = vmatprep.subr.bf16.mxu0 0
        %2695 = vmatpush1.bf16.msra.mxu0 0
        %2696 = vmatprep.subr.bf16.mxu0 0
        %2697 = vmatpush1.bf16.msra.mxu0 0
        %2698 = vmatprep.mubr.bf16.mxu0 0
        %2699 = vmatmul.mubr.bf16.gmra.mrb[0].mxu0 %v2664
        %v2700 = vpop.f32.mrb[0].mxu0
        %v2701 = vadd.f32 0.0, %v2700
        %v2702 = vpop.f32.mrb[0].mxu0
        %v2703 = vpop.f32.mrb[0].mxu0
        %v2704 = vadd.f32 0.0, %v2703
        %v2705 = vpop.f32.mrb[0].mxu0
        %2706 = vdwg.mxu0
        %2708 = vrot.lane.b32.xlu0 %v837, 120
        %v2709 = vpop.permute.xlu0 %2708
        %v2712 = vsel %vm1240, %v2417, 0
        %2714 = vmatprep.subr.bf16.mxu0 0
        %2715 = vmatpush1.bf16.msra.mxu0 %v2709
        %2716 = vmatprep.subr.bf16.mxu0 0
        %2717 = vmatpush1.bf16.msra.mxu0 0
        %2718 = vmatprep.subr.bf16.mxu0 0
        %2719 = vmatpush1.bf16.msra.mxu0 0
        %2720 = vmatprep.subr.bf16.mxu0 0
        %2721 = vmatpush1.bf16.msra.mxu0 0
        %2722 = vmatprep.subr.bf16.mxu0 0
        %2723 = vmatpush1.bf16.msra.mxu0 0
        %2724 = vmatprep.subr.bf16.mxu0 0
        %2725 = vmatpush1.bf16.msra.mxu0 0
        %2726 = vmatprep.subr.bf16.mxu0 0
        %2727 = vmatpush1.bf16.msra.mxu0 0
        %2728 = vmatprep.subr.bf16.mxu0 0
        %2729 = vmatpush1.bf16.msra.mxu0 0
        %2730 = vmatprep.subr.bf16.mxu0 0
        %2731 = vmatpush1.bf16.msra.mxu0 0
        %2732 = vmatprep.subr.bf16.mxu0 0
        %2733 = vmatpush1.bf16.msra.mxu0 0
        %2734 = vmatprep.subr.bf16.mxu0 0
        %2735 = vmatpush1.bf16.msra.mxu0 0
        %2736 = vmatprep.subr.bf16.mxu0 0
        %2737 = vmatpush1.bf16.msra.mxu0 0
        %2738 = vmatprep.subr.bf16.mxu0 0
        %2739 = vmatpush1.bf16.msra.mxu0 0
        %2740 = vmatprep.subr.bf16.mxu0 0
        %2741 = vmatpush1.bf16.msra.mxu0 0
        %2742 = vmatprep.subr.bf16.mxu0 0
        %2743 = vmatpush1.bf16.msra.mxu0 0
        %2744 = vmatprep.subr.bf16.mxu0 0
        %2745 = vmatpush1.bf16.msra.mxu0 0
        %2746 = vmatprep.mubr.bf16.mxu0 0
        %2747 = vmatmul.mubr.bf16.gmra.mrb[0].mxu0 %v2712
        %v2748 = vpop.f32.mrb[0].mxu0
        %v2749 = vadd.f32 0.0, %v2748
        %v2750 = vpop.f32.mrb[0].mxu0
        %v2751 = vpop.f32.mrb[0].mxu0
        %v2752 = vadd.f32 0.0, %v2751
        %v2753 = vpop.f32.mrb[0].mxu0
        %2754 = vdwg.mxu0
        %2756 = vrot.lane.b32.xlu0 %v838, 120
        %v2757 = vpop.permute.xlu0 %2756
        %v2760 = vsel %vm1240, %v2418, 0
        %2762 = vmatprep.subr.bf16.mxu0 0
        %2763 = vmatpush1.bf16.msra.mxu0 %v2757
        %2764 = vmatprep.subr.bf16.mxu0 0
        %2765 = vmatpush1.bf16.msra.mxu0 0
        %2766 = vmatprep.subr.bf16.mxu0 0
        %2767 = vmatpush1.bf16.msra.mxu0 0
        %2768 = vmatprep.subr.bf16.mxu0 0
        %2769 = vmatpush1.bf16.msra.mxu0 0
        %2770 = vmatprep.subr.bf16.mxu0 0
        %2771 = vmatpush1.bf16.msra.mxu0 0
        %2772 = vmatprep.subr.bf16.mxu0 0
        %2773 = vmatpush1.bf16.msra.mxu0 0
        %2774 = vmatprep.subr.bf16.mxu0 0
        %2775 = vmatpush1.bf16.msra.mxu0 0
        %2776 = vmatprep.subr.bf16.mxu0 0
        %2777 = vmatpush1.bf16.msra.mxu0 0
        %2778 = vmatprep.subr.bf16.mxu0 0
        %2779 = vmatpush1.bf16.msra.mxu0 0
        %2780 = vmatprep.subr.bf16.mxu0 0
        %2781 = vmatpush1.bf16.msra.mxu0 0
        %2782 = vmatprep.subr.bf16.mxu0 0
        %2783 = vmatpush1.bf16.msra.mxu0 0
        %2784 = vmatprep.subr.bf16.mxu0 0
        %2785 = vmatpush1.bf16.msra.mxu0 0
        %2786 = vmatprep.subr.bf16.mxu0 0
        %2787 = vmatpush1.bf16.msra.mxu0 0
        %2788 = vmatprep.subr.bf16.mxu0 0
        %2789 = vmatpush1.bf16.msra.mxu0 0
        %2790 = vmatprep.subr.bf16.mxu0 0
        %2791 = vmatpush1.bf16.msra.mxu0 0
        %2792 = vmatprep.subr.bf16.mxu0 0
        %2793 = vmatpush1.bf16.msra.mxu0 0
        %2794 = vmatprep.mubr.bf16.mxu0 0
        %2795 = vmatmul.mubr.bf16.gmra.mrb[0].mxu0 %v2760
        %v2796 = vpop.f32.mrb[0].mxu0
        %v2797 = vadd.f32 0.0, %v2796
        %v2798 = vpop.f32.mrb[0].mxu0
        %v2799 = vpop.f32.mrb[0].mxu0
        %v2800 = vadd.f32 0.0, %v2799
        %v2801 = vpop.f32.mrb[0].mxu0
        %2802 = vdwg.mxu0
        %v2803 = vpack.c.bf16 %v2464, %v2461
        %v2804 = vpack.c.bf16 %v2512, %v2509
        %v2805 = vpack.c.bf16 %v2560, %v2557
        %v2806 = vpack.c.bf16 %v2608, %v2605
        %v2807 = vpack.c.bf16 %v2656, %v2653
        %v2808 = vpack.c.bf16 %v2704, %v2701
        %v2809 = vpack.c.bf16 %v2752, %v2749
        %v2810 = vpack.c.bf16 %v2800, %v2797
        %v2811 = vld [vmem:[#allocation10 + $0x4] sm:$0xf]
        %v2813 = vsel %vm839, %v2803, 0
        %v2816 = vsel %vm839, %v2804, 0
        %v2819 = vsel %vm839, %v2805, 0
        %v2822 = vsel %vm839, %v2806, 0
        %v2825 = vsel %vm839, %v2807, 0
        %v2828 = vsel %vm839, %v2808, 0
        %v2831 = vsel %vm839, %v2809, 0
        %v2834 = vsel %vm839, %v2810, 0
        %vm2836 = vcmask 1043456
        %v2838 = vsel %vm2836, %v2811, 0
        %2840 = vmatprep.subr.bf16.mxu0 0
        %2841 = vmatpush1.bf16.msra.mxu0 %v2838
        %2842 = vmatprep.subr.bf16.mxu0 0
        %2843 = vmatpush1.bf16.msra.mxu0 0
        %2844 = vmatprep.subr.bf16.mxu0 0
        %2845 = vmatpush1.bf16.msra.mxu0 0
        %2846 = vmatprep.subr.bf16.mxu0 0
        %2847 = vmatpush1.bf16.msra.mxu0 0
        %2848 = vmatprep.subr.bf16.mxu0 0
        %2849 = vmatpush1.bf16.msra.mxu0 0
        %2850 = vmatprep.subr.bf16.mxu0 0
        %2851 = vmatpush1.bf16.msra.mxu0 0
        %2852 = vmatprep.subr.bf16.mxu0 0
        %2853 = vmatpush1.bf16.msra.mxu0 0
        %2854 = vmatprep.subr.bf16.mxu0 0
        %2855 = vmatpush1.bf16.msra.mxu0 0
        %2856 = vmatprep.subr.bf16.mxu0 0
        %2857 = vmatpush1.bf16.msra.mxu0 0
        %2858 = vmatprep.subr.bf16.mxu0 0
        %2859 = vmatpush1.bf16.msra.mxu0 0
        %2860 = vmatprep.subr.bf16.mxu0 0
        %2861 = vmatpush1.bf16.msra.mxu0 0
        %2862 = vmatprep.subr.bf16.mxu0 0
        %2863 = vmatpush1.bf16.msra.mxu0 0
        %2864 = vmatprep.subr.bf16.mxu0 0
        %2865 = vmatpush1.bf16.msra.mxu0 0
        %2866 = vmatprep.subr.bf16.mxu0 0
        %2867 = vmatpush1.bf16.msra.mxu0 0
        %2868 = vmatprep.subr.bf16.mxu0 0
        %2869 = vmatpush1.bf16.msra.mxu0 0
        %2870 = vmatprep.subr.bf16.mxu0 0
        %2871 = vmatpush1.bf16.msra.mxu0 0
        %2872 = vmatprep.mubr.bf16.mxu0 0
        %2873 = vmatmul.mubr.bf16.gmra.mrb[0].mxu0 %v2813
        %v2874 = vpop.f32.mrb[0].mxu0
        %v2875 = vadd.f32 0.0, %v2874
        %v2876 = vpop.f32.mrb[0].mxu0
        %v2877 = vpop.f32.mrb[0].mxu0
        %v2878 = vadd.f32 0.0, %v2877
        %v2879 = vpop.f32.mrb[0].mxu0
        %2880 = vmatprep.mubr.bf16.mxu0 0
        %2881 = vmatmul.mubr.bf16.gmra.mrb[0].mxu0 %v2816
        %v2882 = vpop.f32.mrb[0].mxu0
        %v2883 = vadd.f32 0.0, %v2882
        %v2884 = vpop.f32.mrb[0].mxu0
        %v2885 = vpop.f32.mrb[0].mxu0
        %v2886 = vadd.f32 0.0, %v2885
        %v2887 = vpop.f32.mrb[0].mxu0
        %2888 = vmatprep.mubr.bf16.mxu0 0
        %2889 = vmatmul.mubr.bf16.gmra.mrb[0].mxu0 %v2819
        %v2890 = vpop.f32.mrb[0].mxu0
        %v2891 = vadd.f32 0.0, %v2890
        %v2892 = vpop.f32.mrb[0].mxu0
        %v2893 = vpop.f32.mrb[0].mxu0
        %v2894 = vadd.f32 0.0, %v2893
        %v2895 = vpop.f32.mrb[0].mxu0
        %2896 = vmatprep.mubr.bf16.mxu0 0
        %2897 = vmatmul.mubr.bf16.gmra.mrb[0].mxu0 %v2822
        %v2898 = vpop.f32.mrb[0].mxu0
        %v2899 = vadd.f32 0.0, %v2898
        %v2900 = vpop.f32.mrb[0].mxu0
        %v2901 = vpop.f32.mrb[0].mxu0
        %v2902 = vadd.f32 0.0, %v2901
        %v2903 = vpop.f32.mrb[0].mxu0
        %2904 = vmatprep.mubr.bf16.mxu0 0
        %2905 = vmatmul.mubr.bf16.gmra.mrb[0].mxu0 %v2825
        %v2906 = vpop.f32.mrb[0].mxu0
        %v2907 = vadd.f32 0.0, %v2906
        %v2908 = vpop.f32.mrb[0].mxu0
        %v2909 = vpop.f32.mrb[0].mxu0
        %v2910 = vadd.f32 0.0, %v2909
        %v2911 = vpop.f32.mrb[0].mxu0
        %2912 = vmatprep.mubr.bf16.mxu0 0
        %2913 = vmatmul.mubr.bf16.gmra.mrb[0].mxu0 %v2828
        %v2914 = vpop.f32.mrb[0].mxu0
        %v2915 = vadd.f32 0.0, %v2914
        %v2916 = vpop.f32.mrb[0].mxu0
        %v2917 = vpop.f32.mrb[0].mxu0
        %v2918 = vadd.f32 0.0, %v2917
        %v2919 = vpop.f32.mrb[0].mxu0
        %2920 = vmatprep.mubr.bf16.mxu0 0
        %2921 = vmatmul.mubr.bf16.gmra.mrb[0].mxu0 %v2831
        %v2922 = vpop.f32.mrb[0].mxu0
        %v2923 = vadd.f32 0.0, %v2922
        %v2924 = vpop.f32.mrb[0].mxu0
        %v2925 = vpop.f32.mrb[0].mxu0
        %v2926 = vadd.f32 0.0, %v2925
        %v2927 = vpop.f32.mrb[0].mxu0
        %2928 = vmatprep.mubr.bf16.mxu0 0
        %2929 = vmatmul.mubr.bf16.gmra.mrb[0].mxu0 %v2834
        %v2930 = vpop.f32.mrb[0].mxu0
        %v2931 = vadd.f32 0.0, %v2930
        %v2932 = vpop.f32.mrb[0].mxu0
        %v2933 = vpop.f32.mrb[0].mxu0
        %v2934 = vadd.f32 0.0, %v2933
        %v2935 = vpop.f32.mrb[0].mxu0
        %2936 = vdwg.mxu0
        %v2938 = vsel %vm839, %v1777, 0
        %v2941 = vsel %vm839, %v1778, 0
        %v2944 = vsel %vm839, %v1779, 0
        %v2947 = vsel %vm839, %v1780, 0
        %v2950 = vsel %vm839, %v1781, 0
        %v2953 = vsel %vm839, %v1782, 0
        %v2956 = vsel %vm839, %v1783, 0
        %v2959 = vsel %vm839, %v1784, 0
        %v2962 = vsel %vm2836, %v1785, 0
        %2964 = vmatprep.subr.bf16.mxu0 0
        %2965 = vmatpush1.bf16.msra.mxu0 %v2962
        %2966 = vmatprep.subr.bf16.mxu0 0
        %2967 = vmatpush1.bf16.msra.mxu0 0
        %2968 = vmatprep.subr.bf16.mxu0 0
        %2969 = vmatpush1.bf16.msra.mxu0 0
        %2970 = vmatprep.subr.bf16.mxu0 0
        %2971 = vmatpush1.bf16.msra.mxu0 0
        %2972 = vmatprep.subr.bf16.mxu0 0
        %2973 = vmatpush1.bf16.msra.mxu0 0
        %2974 = vmatprep.subr.bf16.mxu0 0
        %2975 = vmatpush1.bf16.msra.mxu0 0
        %2976 = vmatprep.subr.bf16.mxu0 0
        %2977 = vmatpush1.bf16.msra.mxu0 0
        %2978 = vmatprep.subr.bf16.mxu0 0
        %2979 = vmatpush1.bf16.msra.mxu0 0
        %2980 = vmatprep.subr.bf16.mxu0 0
        %2981 = vmatpush1.bf16.msra.mxu0 0
        %2982 = vmatprep.subr.bf16.mxu0 0
        %2983 = vmatpush1.bf16.msra.mxu0 0
        %2984 = vmatprep.subr.bf16.mxu0 0
        %2985 = vmatpush1.bf16.msra.mxu0 0
        %2986 = vmatprep.subr.bf16.mxu0 0
        %2987 = vmatpush1.bf16.msra.mxu0 0
        %2988 = vmatprep.subr.bf16.mxu0 0
        %2989 = vmatpush1.bf16.msra.mxu0 0
        %2990 = vmatprep.subr.bf16.mxu0 0
        %2991 = vmatpush1.bf16.msra.mxu0 0
        %2992 = vmatprep.subr.bf16.mxu0 0
        %2993 = vmatpush1.bf16.msra.mxu0 0
        %2994 = vmatprep.subr.bf16.mxu0 0
        %2995 = vmatpush1.bf16.msra.mxu0 0
        %2996 = vmatprep.mubr.bf16.mxu0 0
        %2997 = vmatmul.mubr.bf16.gmra.mrb[0].mxu0 %v2938
        %v2998 = vpop.f32.mrb[0].mxu0
        %v2999 = vadd.f32 %v2875, %v2998
        %v3000 = vpop.f32.mrb[0].mxu0
        %v3001 = vpop.f32.mrb[0].mxu0
        %v3002 = vadd.f32 %v2878, %v3001
        %v3003 = vpop.f32.mrb[0].mxu0
        %3004 = vmatprep.mubr.bf16.mxu0 0
        %3005 = vmatmul.mubr.bf16.gmra.mrb[0].mxu0 %v2941
        %v3006 = vpop.f32.mrb[0].mxu0
        %v3007 = vadd.f32 %v2883, %v3006
        %v3008 = vpop.f32.mrb[0].mxu0
        %v3009 = vpop.f32.mrb[0].mxu0
        %v3010 = vadd.f32 %v2886, %v3009
        %v3011 = vpop.f32.mrb[0].mxu0
        %3012 = vmatprep.mubr.bf16.mxu0 0
        %3013 = vmatmul.mubr.bf16.gmra.mrb[0].mxu0 %v2944
        %v3014 = vpop.f32.mrb[0].mxu0
        %v3015 = vadd.f32 %v2891, %v3014
        %v3016 = vpop.f32.mrb[0].mxu0
        %v3017 = vpop.f32.mrb[0].mxu0
        %v3018 = vadd.f32 %v2894, %v3017
        %v3019 = vpop.f32.mrb[0].mxu0
        %3020 = vmatprep.mubr.bf16.mxu0 0
        %3021 = vmatmul.mubr.bf16.gmra.mrb[0].mxu0 %v2947
        %v3022 = vpop.f32.mrb[0].mxu0
        %v3023 = vadd.f32 %v2899, %v3022
        %v3024 = vpop.f32.mrb[0].mxu0
        %v3025 = vpop.f32.mrb[0].mxu0
        %v3026 = vadd.f32 %v2902, %v3025
        %v3027 = vpop.f32.mrb[0].mxu0
        %3028 = vmatprep.mubr.bf16.mxu0 0
        %3029 = vmatmul.mubr.bf16.gmra.mrb[0].mxu0 %v2950
        %v3030 = vpop.f32.mrb[0].mxu0
        %v3031 = vadd.f32 %v2907, %v3030
        %v3032 = vpop.f32.mrb[0].mxu0
        %v3033 = vpop.f32.mrb[0].mxu0
        %v3034 = vadd.f32 %v2910, %v3033
        %v3035 = vpop.f32.mrb[0].mxu0
        %3036 = vmatprep.mubr.bf16.mxu0 0
        %3037 = vmatmul.mubr.bf16.gmra.mrb[0].mxu0 %v2953
        %v3038 = vpop.f32.mrb[0].mxu0
        %v3039 = vadd.f32 %v2915, %v3038
        %v3040 = vpop.f32.mrb[0].mxu0
        %v3041 = vpop.f32.mrb[0].mxu0
        %v3042 = vadd.f32 %v2918, %v3041
        %v3043 = vpop.f32.mrb[0].mxu0
        %3044 = vmatprep.mubr.bf16.mxu0 0
        %3045 = vmatmul.mubr.bf16.gmra.mrb[0].mxu0 %v2956
        %v3046 = vpop.f32.mrb[0].mxu0
        %v3047 = vadd.f32 %v2923, %v3046
        %v3048 = vpop.f32.mrb[0].mxu0
        %v3049 = vpop.f32.mrb[0].mxu0
        %v3050 = vadd.f32 %v2926, %v3049
        %v3051 = vpop.f32.mrb[0].mxu0
        %3052 = vmatprep.mubr.bf16.mxu0 0
        %3053 = vmatmul.mubr.bf16.gmra.mrb[0].mxu0 %v2959
        %v3054 = vpop.f32.mrb[0].mxu0
        %v3055 = vadd.f32 %v2931, %v3054
        %v3056 = vpop.f32.mrb[0].mxu0
        %v3057 = vpop.f32.mrb[0].mxu0
        %v3058 = vadd.f32 %v2934, %v3057
        %v3059 = vpop.f32.mrb[0].mxu0
        %3060 = vdwg.mxu0
        %3061 = vrot.lane.b32.xlu0 %v815, 112
        %v3062 = vpop.permute.xlu0 %3061
        %3063 = vrot.lane.b32.xlu0 %v823, 112
        %v3064 = vpop.permute.xlu0 %3063
        %v3066 = vsel %vm839, %v3062, 0
        %v3069 = vsel %vm839, %v3064, 0
        %3071 = vmatprep.subr.bf16.mxu0 0
        %3072 = vmatpush1.bf16.xpose.msra.mxu0 %v3069
        %3073 = vmatprep.subr.bf16.mxu0 0
        %3074 = vmatpush1.bf16.xpose.msra.mxu0 0
        %3075 = vmatprep.subr.bf16.mxu0 0
        %3076 = vmatpush1.bf16.xpose.msra.mxu0 0
        %3077 = vmatprep.subr.bf16.mxu0 0
        %3078 = vmatpush1.bf16.xpose.msra.mxu0 0
        %3079 = vmatprep.subr.bf16.mxu0 0
        %3080 = vmatpush1.bf16.xpose.msra.mxu0 0
        %3081 = vmatprep.subr.bf16.mxu0 0
        %3082 = vmatpush1.bf16.xpose.msra.mxu0 0
        %3083 = vmatprep.subr.bf16.mxu0 0
        %3084 = vmatpush1.bf16.xpose.msra.mxu0 0
        %3085 = vmatprep.subr.bf16.mxu0 0
        %3086 = vmatpush1.bf16.xpose.msra.mxu0 0
        %3087 = vmatprep.subr.bf16.mxu0 0
        %3088 = vmatpush1.bf16.xpose.msra.mxu0 0
        %3089 = vmatprep.subr.bf16.mxu0 0
        %3090 = vmatpush1.bf16.xpose.msra.mxu0 0
        %3091 = vmatprep.subr.bf16.mxu0 0
        %3092 = vmatpush1.bf16.xpose.msra.mxu0 0
        %3093 = vmatprep.subr.bf16.mxu0 0
        %3094 = vmatpush1.bf16.xpose.msra.mxu0 0
        %3095 = vmatprep.subr.bf16.mxu0 0
        %3096 = vmatpush1.bf16.xpose.msra.mxu0 0
        %3097 = vmatprep.subr.bf16.mxu0 0
        %3098 = vmatpush1.bf16.xpose.msra.mxu0 0
        %3099 = vmatprep.subr.bf16.mxu0 0
        %3100 = vmatpush1.bf16.xpose.msra.mxu0 0
        %3101 = vmatprep.subr.bf16.mxu0 0
        %3102 = vmatpush1.bf16.xpose.msra.mxu0 0
        %3103 = vmatprep.mubr.bf16.mxu0 0
        %3104 = vmatmul.mubr.bf16.gmra.mrb[0].mxu0 %v3066
        %v3105 = vpop.f32.mrb[0].mxu0
        %v3106 = vadd.f32 0.0, %v3105
        %v3107 = vpop.f32.mrb[0].mxu0
        %v3108 = vpop.f32.mrb[0].mxu0
        %v3109 = vadd.f32 0.0, %v3108
        %v3110 = vpop.f32.mrb[0].mxu0
        %3111 = vdwg.mxu0
        %3112 = vrot.lane.b32.xlu0 %v816, 112
        %v3113 = vpop.permute.xlu0 %3112
        %3114 = vrot.lane.b32.xlu0 %v824, 112
        %v3115 = vpop.permute.xlu0 %3114
        %v3117 = vsel %vm839, %v3113, 0
        %v3120 = vsel %vm839, %v3115, 0
        %3122 = vmatprep.subr.bf16.mxu0 0
        %3123 = vmatpush1.bf16.xpose.msra.mxu0 %v3120
        %3124 = vmatprep.subr.bf16.mxu0 0
        %3125 = vmatpush1.bf16.xpose.msra.mxu0 0
        %3126 = vmatprep.subr.bf16.mxu0 0
        %3127 = vmatpush1.bf16.xpose.msra.mxu0 0
        %3128 = vmatprep.subr.bf16.mxu0 0
        %3129 = vmatpush1.bf16.xpose.msra.mxu0 0
        %3130 = vmatprep.subr.bf16.mxu0 0
        %3131 = vmatpush1.bf16.xpose.msra.mxu0 0
        %3132 = vmatprep.subr.bf16.mxu0 0
        %3133 = vmatpush1.bf16.xpose.msra.mxu0 0
        %3134 = vmatprep.subr.bf16.mxu0 0
        %3135 = vmatpush1.bf16.xpose.msra.mxu0 0
        %3136 = vmatprep.subr.bf16.mxu0 0
        %3137 = vmatpush1.bf16.xpose.msra.mxu0 0
        %3138 = vmatprep.subr.bf16.mxu0 0
        %3139 = vmatpush1.bf16.xpose.msra.mxu0 0
        %3140 = vmatprep.subr.bf16.mxu0 0
        %3141 = vmatpush1.bf16.xpose.msra.mxu0 0
        %3142 = vmatprep.subr.bf16.mxu0 0
        %3143 = vmatpush1.bf16.xpose.msra.mxu0 0
        %3144 = vmatprep.subr.bf16.mxu0 0
        %3145 = vmatpush1.bf16.xpose.msra.mxu0 0
        %3146 = vmatprep.subr.bf16.mxu0 0
        %3147 = vmatpush1.bf16.xpose.msra.mxu0 0
        %3148 = vmatprep.subr.bf16.mxu0 0
        %3149 = vmatpush1.bf16.xpose.msra.mxu0 0
        %3150 = vmatprep.subr.bf16.mxu0 0
        %3151 = vmatpush1.bf16.xpose.msra.mxu0 0
        %3152 = vmatprep.subr.bf16.mxu0 0
        %3153 = vmatpush1.bf16.xpose.msra.mxu0 0
        %3154 = vmatprep.mubr.bf16.mxu0 0
        %3155 = vmatmul.mubr.bf16.gmra.mrb[0].mxu0 %v3117
        %v3156 = vpop.f32.mrb[0].mxu0
        %v3157 = vadd.f32 0.0, %v3156
        %v3158 = vpop.f32.mrb[0].mxu0
        %v3159 = vpop.f32.mrb[0].mxu0
        %v3160 = vadd.f32 0.0, %v3159
        %v3161 = vpop.f32.mrb[0].mxu0
        %3162 = vdwg.mxu0
        %3163 = vrot.lane.b32.xlu0 %v817, 112
        %v3164 = vpop.permute.xlu0 %3163
        %3165 = vrot.lane.b32.xlu0 %v825, 112
        %v3166 = vpop.permute.xlu0 %3165
        %v3168 = vsel %vm839, %v3164, 0
        %v3171 = vsel %vm839, %v3166, 0
        %3173 = vmatprep.subr.bf16.mxu0 0
        %3174 = vmatpush1.bf16.xpose.msra.mxu0 %v3171
        %3175 = vmatprep.subr.bf16.mxu0 0
        %3176 = vmatpush1.bf16.xpose.msra.mxu0 0
        %3177 = vmatprep.subr.bf16.mxu0 0
        %3178 = vmatpush1.bf16.xpose.msra.mxu0 0
        %3179 = vmatprep.subr.bf16.mxu0 0
        %3180 = vmatpush1.bf16.xpose.msra.mxu0 0
        %3181 = vmatprep.subr.bf16.mxu0 0
        %3182 = vmatpush1.bf16.xpose.msra.mxu0 0
        %3183 = vmatprep.subr.bf16.mxu0 0
        %3184 = vmatpush1.bf16.xpose.msra.mxu0 0
        %3185 = vmatprep.subr.bf16.mxu0 0
        %3186 = vmatpush1.bf16.xpose.msra.mxu0 0
        %3187 = vmatprep.subr.bf16.mxu0 0
        %3188 = vmatpush1.bf16.xpose.msra.mxu0 0
        %3189 = vmatprep.subr.bf16.mxu0 0
        %3190 = vmatpush1.bf16.xpose.msra.mxu0 0
        %3191 = vmatprep.subr.bf16.mxu0 0
        %3192 = vmatpush1.bf16.xpose.msra.mxu0 0
        %3193 = vmatprep.subr.bf16.mxu0 0
        %3194 = vmatpush1.bf16.xpose.msra.mxu0 0
        %3195 = vmatprep.subr.bf16.mxu0 0
        %3196 = vmatpush1.bf16.xpose.msra.mxu0 0
        %3197 = vmatprep.subr.bf16.mxu0 0
        %3198 = vmatpush1.bf16.xpose.msra.mxu0 0
        %3199 = vmatprep.subr.bf16.mxu0 0
        %3200 = vmatpush1.bf16.xpose.msra.mxu0 0
        %3201 = vmatprep.subr.bf16.mxu0 0
        %3202 = vmatpush1.bf16.xpose.msra.mxu0 0
        %3203 = vmatprep.subr.bf16.mxu0 0
        %3204 = vmatpush1.bf16.xpose.msra.mxu0 0
        %3205 = vmatprep.mubr.bf16.mxu0 0
        %3206 = vmatmul.mubr.bf16.gmra.mrb[0].mxu0 %v3168
        %v3207 = vpop.f32.mrb[0].mxu0
        %v3208 = vadd.f32 0.0, %v3207
        %v3209 = vpop.f32.mrb[0].mxu0
        %v3210 = vpop.f32.mrb[0].mxu0
        %v3211 = vadd.f32 0.0, %v3210
        %v3212 = vpop.f32.mrb[0].mxu0
        %3213 = vdwg.mxu0
        %3214 = vrot.lane.b32.xlu0 %v818, 112
        %v3215 = vpop.permute.xlu0 %3214
        %3216 = vrot.lane.b32.xlu0 %v826, 112
        %v3217 = vpop.permute.xlu0 %3216
        %v3219 = vsel %vm839, %v3215, 0
        %v3222 = vsel %vm839, %v3217, 0
        %3224 = vmatprep.subr.bf16.mxu0 0
        %3225 = vmatpush1.bf16.xpose.msra.mxu0 %v3222
        %3226 = vmatprep.subr.bf16.mxu0 0
        %3227 = vmatpush1.bf16.xpose.msra.mxu0 0
        %3228 = vmatprep.subr.bf16.mxu0 0
        %3229 = vmatpush1.bf16.xpose.msra.mxu0 0
        %3230 = vmatprep.subr.bf16.mxu0 0
        %3231 = vmatpush1.bf16.xpose.msra.mxu0 0
        %3232 = vmatprep.subr.bf16.mxu0 0
        %3233 = vmatpush1.bf16.xpose.msra.mxu0 0
        %3234 = vmatprep.subr.bf16.mxu0 0
        %3235 = vmatpush1.bf16.xpose.msra.mxu0 0
        %3236 = vmatprep.subr.bf16.mxu0 0
        %3237 = vmatpush1.bf16.xpose.msra.mxu0 0
        %3238 = vmatprep.subr.bf16.mxu0 0
        %3239 = vmatpush1.bf16.xpose.msra.mxu0 0
        %3240 = vmatprep.subr.bf16.mxu0 0
        %3241 = vmatpush1.bf16.xpose.msra.mxu0 0
        %3242 = vmatprep.subr.bf16.mxu0 0
        %3243 = vmatpush1.bf16.xpose.msra.mxu0 0
        %3244 = vmatprep.subr.bf16.mxu0 0
        %3245 = vmatpush1.bf16.xpose.msra.mxu0 0
        %3246 = vmatprep.subr.bf16.mxu0 0
        %3247 = vmatpush1.bf16.xpose.msra.mxu0 0
        %3248 = vmatprep.subr.bf16.mxu0 0
        %3249 = vmatpush1.bf16.xpose.msra.mxu0 0
        %3250 = vmatprep.subr.bf16.mxu0 0
        %3251 = vmatpush1.bf16.xpose.msra.mxu0 0
        %3252 = vmatprep.subr.bf16.mxu0 0
        %3253 = vmatpush1.bf16.xpose.msra.mxu0 0
        %3254 = vmatprep.subr.bf16.mxu0 0
        %3255 = vmatpush1.bf16.xpose.msra.mxu0 0
        %3256 = vmatprep.mubr.bf16.mxu0 0
        %3257 = vmatmul.mubr.bf16.gmra.mrb[0].mxu0 %v3219
        %v3258 = vpop.f32.mrb[0].mxu0
        %v3259 = vadd.f32 0.0, %v3258
        %v3260 = vpop.f32.mrb[0].mxu0
        %v3261 = vpop.f32.mrb[0].mxu0
        %v3262 = vadd.f32 0.0, %v3261
        %v3263 = vpop.f32.mrb[0].mxu0
        %3264 = vdwg.mxu0
        %3265 = vrot.lane.b32.xlu0 %v819, 112
        %v3266 = vpop.permute.xlu0 %3265
        %3267 = vrot.lane.b32.xlu0 %v827, 112
        %v3268 = vpop.permute.xlu0 %3267
        %v3270 = vsel %vm839, %v3266, 0
        %v3273 = vsel %vm839, %v3268, 0
        %3275 = vmatprep.subr.bf16.mxu0 0
        %3276 = vmatpush1.bf16.xpose.msra.mxu0 %v3273
        %3277 = vmatprep.subr.bf16.mxu0 0
        %3278 = vmatpush1.bf16.xpose.msra.mxu0 0
        %3279 = vmatprep.subr.bf16.mxu0 0
        %3280 = vmatpush1.bf16.xpose.msra.mxu0 0
        %3281 = vmatprep.subr.bf16.mxu0 0
        %3282 = vmatpush1.bf16.xpose.msra.mxu0 0
        %3283 = vmatprep.subr.bf16.mxu0 0
        %3284 = vmatpush1.bf16.xpose.msra.mxu0 0
        %3285 = vmatprep.subr.bf16.mxu0 0
        %3286 = vmatpush1.bf16.xpose.msra.mxu0 0
        %3287 = vmatprep.subr.bf16.mxu0 0
        %3288 = vmatpush1.bf16.xpose.msra.mxu0 0
        %3289 = vmatprep.subr.bf16.mxu0 0
        %3290 = vmatpush1.bf16.xpose.msra.mxu0 0
        %3291 = vmatprep.subr.bf16.mxu0 0
        %3292 = vmatpush1.bf16.xpose.msra.mxu0 0
        %3293 = vmatprep.subr.bf16.mxu0 0
        %3294 = vmatpush1.bf16.xpose.msra.mxu0 0
        %3295 = vmatprep.subr.bf16.mxu0 0
        %3296 = vmatpush1.bf16.xpose.msra.mxu0 0
        %3297 = vmatprep.subr.bf16.mxu0 0
        %3298 = vmatpush1.bf16.xpose.msra.mxu0 0
        %3299 = vmatprep.subr.bf16.mxu0 0
        %3300 = vmatpush1.bf16.xpose.msra.mxu0 0
        %3301 = vmatprep.subr.bf16.mxu0 0
        %3302 = vmatpush1.bf16.xpose.msra.mxu0 0
        %3303 = vmatprep.subr.bf16.mxu0 0
        %3304 = vmatpush1.bf16.xpose.msra.mxu0 0
        %3305 = vmatprep.subr.bf16.mxu0 0
        %3306 = vmatpush1.bf16.xpose.msra.mxu0 0
        %3307 = vmatprep.mubr.bf16.mxu0 0
        %3308 = vmatmul.mubr.bf16.gmra.mrb[0].mxu0 %v3270
        %v3309 = vpop.f32.mrb[0].mxu0
        %v3310 = vadd.f32 0.0, %v3309
        %v3311 = vpop.f32.mrb[0].mxu0
        %v3312 = vpop.f32.mrb[0].mxu0
        %v3313 = vadd.f32 0.0, %v3312
        %v3314 = vpop.f32.mrb[0].mxu0
        %3315 = vdwg.mxu0
        %3316 = vrot.lane.b32.xlu0 %v820, 112
        %v3317 = vpop.permute.xlu0 %3316
        %3318 = vrot.lane.b32.xlu0 %v828, 112
        %v3319 = vpop.permute.xlu0 %3318
        %v3321 = vsel %vm839, %v3317, 0
        %v3324 = vsel %vm839, %v3319, 0
        %3326 = vmatprep.subr.bf16.mxu0 0
        %3327 = vmatpush1.bf16.xpose.msra.mxu0 %v3324
        %3328 = vmatprep.subr.bf16.mxu0 0
        %3329 = vmatpush1.bf16.xpose.msra.mxu0 0
        %3330 = vmatprep.subr.bf16.mxu0 0
        %3331 = vmatpush1.bf16.xpose.msra.mxu0 0
        %3332 = vmatprep.subr.bf16.mxu0 0
        %3333 = vmatpush1.bf16.xpose.msra.mxu0 0
        %3334 = vmatprep.subr.bf16.mxu0 0
        %3335 = vmatpush1.bf16.xpose.msra.mxu0 0
        %3336 = vmatprep.subr.bf16.mxu0 0
        %3337 = vmatpush1.bf16.xpose.msra.mxu0 0
        %3338 = vmatprep.subr.bf16.mxu0 0
        %3339 = vmatpush1.bf16.xpose.msra.mxu0 0
        %3340 = vmatprep.subr.bf16.mxu0 0
        %3341 = vmatpush1.bf16.xpose.msra.mxu0 0
        %3342 = vmatprep.subr.bf16.mxu0 0
        %3343 = vmatpush1.bf16.xpose.msra.mxu0 0
        %3344 = vmatprep.subr.bf16.mxu0 0
        %3345 = vmatpush1.bf16.xpose.msra.mxu0 0
        %3346 = vmatprep.subr.bf16.mxu0 0
        %3347 = vmatpush1.bf16.xpose.msra.mxu0 0
        %3348 = vmatprep.subr.bf16.mxu0 0
        %3349 = vmatpush1.bf16.xpose.msra.mxu0 0
        %3350 = vmatprep.subr.bf16.mxu0 0
        %3351 = vmatpush1.bf16.xpose.msra.mxu0 0
        %3352 = vmatprep.subr.bf16.mxu0 0
        %3353 = vmatpush1.bf16.xpose.msra.mxu0 0
        %3354 = vmatprep.subr.bf16.mxu0 0
        %3355 = vmatpush1.bf16.xpose.msra.mxu0 0
        %3356 = vmatprep.subr.bf16.mxu0 0
        %3357 = vmatpush1.bf16.xpose.msra.mxu0 0
        %3358 = vmatprep.mubr.bf16.mxu0 0
        %3359 = vmatmul.mubr.bf16.gmra.mrb[0].mxu0 %v3321
        %v3360 = vpop.f32.mrb[0].mxu0
        %v3361 = vadd.f32 0.0, %v3360
        %v3362 = vpop.f32.mrb[0].mxu0
        %v3363 = vpop.f32.mrb[0].mxu0
        %v3364 = vadd.f32 0.0, %v3363
        %v3365 = vpop.f32.mrb[0].mxu0
        %3366 = vdwg.mxu0
        %3367 = vrot.lane.b32.xlu0 %v821, 112
        %v3368 = vpop.permute.xlu0 %3367
        %3369 = vrot.lane.b32.xlu0 %v829, 112
        %v3370 = vpop.permute.xlu0 %3369
        %v3372 = vsel %vm839, %v3368, 0
        %v3375 = vsel %vm839, %v3370, 0
        %3377 = vmatprep.subr.bf16.mxu0 0
        %3378 = vmatpush1.bf16.xpose.msra.mxu0 %v3375
        %3379 = vmatprep.subr.bf16.mxu0 0
        %3380 = vmatpush1.bf16.xpose.msra.mxu0 0
        %3381 = vmatprep.subr.bf16.mxu0 0
        %3382 = vmatpush1.bf16.xpose.msra.mxu0 0
        %3383 = vmatprep.subr.bf16.mxu0 0
        %3384 = vmatpush1.bf16.xpose.msra.mxu0 0
        %3385 = vmatprep.subr.bf16.mxu0 0
        %3386 = vmatpush1.bf16.xpose.msra.mxu0 0
        %3387 = vmatprep.subr.bf16.mxu0 0
        %3388 = vmatpush1.bf16.xpose.msra.mxu0 0
        %3389 = vmatprep.subr.bf16.mxu0 0
        %3390 = vmatpush1.bf16.xpose.msra.mxu0 0
        %3391 = vmatprep.subr.bf16.mxu0 0
        %3392 = vmatpush1.bf16.xpose.msra.mxu0 0
        %3393 = vmatprep.subr.bf16.mxu0 0
        %3394 = vmatpush1.bf16.xpose.msra.mxu0 0
        %3395 = vmatprep.subr.bf16.mxu0 0
        %3396 = vmatpush1.bf16.xpose.msra.mxu0 0
        %3397 = vmatprep.subr.bf16.mxu0 0
        %3398 = vmatpush1.bf16.xpose.msra.mxu0 0
        %3399 = vmatprep.subr.bf16.mxu0 0
        %3400 = vmatpush1.bf16.xpose.msra.mxu0 0
        %3401 = vmatprep.subr.bf16.mxu0 0
        %3402 = vmatpush1.bf16.xpose.msra.mxu0 0
        %3403 = vmatprep.subr.bf16.mxu0 0
        %3404 = vmatpush1.bf16.xpose.msra.mxu0 0
        %3405 = vmatprep.subr.bf16.mxu0 0
        %3406 = vmatpush1.bf16.xpose.msra.mxu0 0
        %3407 = vmatprep.subr.bf16.mxu0 0
        %3408 = vmatpush1.bf16.xpose.msra.mxu0 0
        %3409 = vmatprep.mubr.bf16.mxu0 0
        %3410 = vmatmul.mubr.bf16.gmra.mrb[0].mxu0 %v3372
        %v3411 = vpop.f32.mrb[0].mxu0
        %v3412 = vadd.f32 0.0, %v3411
        %v3413 = vpop.f32.mrb[0].mxu0
        %v3414 = vpop.f32.mrb[0].mxu0
        %v3415 = vadd.f32 0.0, %v3414
        %v3416 = vpop.f32.mrb[0].mxu0
        %3417 = vdwg.mxu0
        %3418 = vrot.lane.b32.xlu0 %v822, 112
        %v3419 = vpop.permute.xlu0 %3418
        %3420 = vrot.lane.b32.xlu0 %v830, 112
        %v3421 = vpop.permute.xlu0 %3420
        %v3423 = vsel %vm839, %v3419, 0
        %v3426 = vsel %vm839, %v3421, 0
        %3428 = vmatprep.subr.bf16.mxu0 0
        %3429 = vmatpush1.bf16.xpose.msra.mxu0 %v3426
        %3430 = vmatprep.subr.bf16.mxu0 0
        %3431 = vmatpush1.bf16.xpose.msra.mxu0 0
        %3432 = vmatprep.subr.bf16.mxu0 0
        %3433 = vmatpush1.bf16.xpose.msra.mxu0 0
        %3434 = vmatprep.subr.bf16.mxu0 0
        %3435 = vmatpush1.bf16.xpose.msra.mxu0 0
        %3436 = vmatprep.subr.bf16.mxu0 0
        %3437 = vmatpush1.bf16.xpose.msra.mxu0 0
        %3438 = vmatprep.subr.bf16.mxu0 0
        %3439 = vmatpush1.bf16.xpose.msra.mxu0 0
        %3440 = vmatprep.subr.bf16.mxu0 0
        %3441 = vmatpush1.bf16.xpose.msra.mxu0 0
        %3442 = vmatprep.subr.bf16.mxu0 0
        %3443 = vmatpush1.bf16.xpose.msra.mxu0 0
        %3444 = vmatprep.subr.bf16.mxu0 0
        %3445 = vmatpush1.bf16.xpose.msra.mxu0 0
        %3446 = vmatprep.subr.bf16.mxu0 0
        %3447 = vmatpush1.bf16.xpose.msra.mxu0 0
        %3448 = vmatprep.subr.bf16.mxu0 0
        %3449 = vmatpush1.bf16.xpose.msra.mxu0 0
        %3450 = vmatprep.subr.bf16.mxu0 0
        %3451 = vmatpush1.bf16.xpose.msra.mxu0 0
        %3452 = vmatprep.subr.bf16.mxu0 0
        %3453 = vmatpush1.bf16.xpose.msra.mxu0 0
        %3454 = vmatprep.subr.bf16.mxu0 0
        %3455 = vmatpush1.bf16.xpose.msra.mxu0 0
        %3456 = vmatprep.subr.bf16.mxu0 0
        %3457 = vmatpush1.bf16.xpose.msra.mxu0 0
        %3458 = vmatprep.subr.bf16.mxu0 0
        %3459 = vmatpush1.bf16.xpose.msra.mxu0 0
        %3460 = vmatprep.mubr.bf16.mxu0 0
        %3461 = vmatmul.mubr.bf16.gmra.mrb[0].mxu0 %v3423
        %v3462 = vpop.f32.mrb[0].mxu0
        %v3463 = vadd.f32 0.0, %v3462
        %v3464 = vpop.f32.mrb[0].mxu0
        %v3465 = vpop.f32.mrb[0].mxu0
        %v3466 = vadd.f32 0.0, %v3465
        %v3467 = vpop.f32.mrb[0].mxu0
        %3468 = vdwg.mxu0
        %s3469 = scalar_lea.vmem [#allocation5], 128
        %v3470 = vld [vmem:[%s3469] sm:$0xff]
        %v3471 = vld [vmem:[%s3469 + $0x8] sm:$0xff]
        %v3472 = vld [vmem:[%s3469 + $0x10] sm:$0xff]
        %v3473 = vld [vmem:[%s3469 + $0x18] sm:$0xff]
        %v3474 = vld [vmem:[%s3469 + $0x20] sm:$0xff]
        %v3475 = vld [vmem:[%s3469 + $0x28] sm:$0xff]
        %v3476 = vld [vmem:[%s3469 + $0x30] sm:$0xff]
        %v3477 = vld [vmem:[%s3469 + $0x38] sm:$0xff]
        %v3478 = vadd.f32 %v3106, %v3470
        %v3479 = vadd.f32 %v3109, %v3471
        %v3480 = vadd.f32 %v3157, %v3472
        %v3481 = vadd.f32 %v3160, %v3473
        %v3482 = vadd.f32 %v3208, %v3474
        %v3483 = vadd.f32 %v3211, %v3475
        %v3484 = vadd.f32 %v3259, %v3476
        %v3485 = vadd.f32 %v3262, %v3477
        %v3486 = vadd.f32 %v3310, %v3470
        %v3487 = vadd.f32 %v3313, %v3471
        %v3488 = vadd.f32 %v3361, %v3472
        %v3489 = vadd.f32 %v3364, %v3473
        %v3490 = vadd.f32 %v3412, %v3474
        %v3491 = vadd.f32 %v3415, %v3475
        %v3492 = vadd.f32 %v3463, %v3476
        %v3493 = vadd.f32 %v3466, %v3477
        %v3494 = vsel %vm1240, %v3478, -inf
        %3495 = vmax.xlane.f32.xlu0 %v3494
        %v3496 = vpop.xlane.xlu0 %3495
        %v3497 = vsel %vm1240, %v3479, -inf
        %3498 = vmax.xlane.f32.xlu0 %v3497
        %v3499 = vpop.xlane.xlu0 %3498
        %v3500 = vsel %vm1240, %v3480, -inf
        %3501 = vmax.xlane.f32.xlu0 %v3500
        %v3502 = vpop.xlane.xlu0 %3501
        %v3503 = vsel %vm1240, %v3481, -inf
        %3504 = vmax.xlane.f32.xlu0 %v3503
        %v3505 = vpop.xlane.xlu0 %3504
        %v3506 = vsel %vm1240, %v3482, -inf
        %3507 = vmax.xlane.f32.xlu0 %v3506
        %v3508 = vpop.xlane.xlu0 %3507
        %v3509 = vsel %vm1240, %v3483, -inf
        %3510 = vmax.xlane.f32.xlu0 %v3509
        %v3511 = vpop.xlane.xlu0 %3510
        %v3512 = vsel %vm1240, %v3484, -inf
        %3513 = vmax.xlane.f32.xlu0 %v3512
        %v3514 = vpop.xlane.xlu0 %3513
        %v3515 = vsel %vm1240, %v3485, -inf
        %3516 = vmax.xlane.f32.xlu0 %v3515
        %v3517 = vpop.xlane.xlu0 %3516
        %v3518 = vsel %vm1240, %v3486, -inf
        %3519 = vmax.xlane.f32.xlu0 %v3518
        %v3520 = vpop.xlane.xlu0 %3519
        %v3521 = vsel %vm1240, %v3487, -inf
        %3522 = vmax.xlane.f32.xlu0 %v3521
        %v3523 = vpop.xlane.xlu0 %3522
        %v3524 = vsel %vm1240, %v3488, -inf
        %3525 = vmax.xlane.f32.xlu0 %v3524
        %v3526 = vpop.xlane.xlu0 %3525
        %v3527 = vsel %vm1240, %v3489, -inf
        %3528 = vmax.xlane.f32.xlu0 %v3527
        %v3529 = vpop.xlane.xlu0 %3528
        %v3530 = vsel %vm1240, %v3490, -inf
        %3531 = vmax.xlane.f32.xlu0 %v3530
        %v3532 = vpop.xlane.xlu0 %3531
        %v3533 = vsel %vm1240, %v3491, -inf
        %3534 = vmax.xlane.f32.xlu0 %v3533
        %v3535 = vpop.xlane.xlu0 %3534
        %v3536 = vsel %vm1240, %v3492, -inf
        %3537 = vmax.xlane.f32.xlu0 %v3536
        %v3538 = vpop.xlane.xlu0 %3537
        %v3539 = vsel %vm1240, %v3493, -inf
        %3540 = vmax.xlane.f32.xlu0 %v3539
        %v3541 = vpop.xlane.xlu0 %3540
        %v3542 = vsub.f32 %v3478, %v3496
        %v3543 = vsub.f32 %v3479, %v3499
        %v3544 = vsub.f32 %v3480, %v3502
        %v3545 = vsub.f32 %v3481, %v3505
        %v3546 = vsub.f32 %v3482, %v3508
        %v3547 = vsub.f32 %v3483, %v3511
        %v3548 = vsub.f32 %v3484, %v3514
        %v3549 = vsub.f32 %v3485, %v3517
        %v3550 = vsub.f32 %v3486, %v3520
        %v3551 = vsub.f32 %v3487, %v3523
        %v3552 = vsub.f32 %v3488, %v3526
        %v3553 = vsub.f32 %v3489, %v3529
        %v3554 = vsub.f32 %v3490, %v3532
        %v3555 = vsub.f32 %v3491, %v3535
        %v3556 = vsub.f32 %v3492, %v3538
        %v3557 = vsub.f32 %v3493, %v3541
        %v3558 = vmul.f32 %v3542, 1.442695
        %v3559 = vpow.pop %v3558
        %v3560 = vmul.f32 %v3543, 1.442695
        %v3561 = vpow.pop %v3560
        %v3562 = vmul.f32 %v3544, 1.442695
        %v3563 = vpow.pop %v3562
        %v3564 = vmul.f32 %v3545, 1.442695
        %v3565 = vpow.pop %v3564
        %v3566 = vmul.f32 %v3546, 1.442695
        %v3567 = vpow.pop %v3566
        %v3568 = vmul.f32 %v3547, 1.442695
        %v3569 = vpow.pop %v3568
        %v3570 = vmul.f32 %v3548, 1.442695
        %v3571 = vpow.pop %v3570
        %v3572 = vmul.f32 %v3549, 1.442695
        %v3573 = vpow.pop %v3572
        %v3574 = vmul.f32 %v3550, 1.442695
        %v3575 = vpow.pop %v3574
        %v3576 = vmul.f32 %v3551, 1.442695
        %v3577 = vpow.pop %v3576
        %v3578 = vmul.f32 %v3552, 1.442695
        %v3579 = vpow.pop %v3578
        %v3580 = vmul.f32 %v3553, 1.442695
        %v3581 = vpow.pop %v3580
        %v3582 = vmul.f32 %v3554, 1.442695
        %v3583 = vpow.pop %v3582
        %v3584 = vmul.f32 %v3555, 1.442695
        %v3585 = vpow.pop %v3584
        %v3586 = vmul.f32 %v3556, 1.442695
        %v3587 = vpow.pop %v3586
        %v3588 = vmul.f32 %v3557, 1.442695
        %v3589 = vpow.pop %v3588
        %v3590 = vsel %vm1240, %v3559, 0.0
        %3591 = vadd.xlane.f32.xlu0 %v3590
        %v3592 = vpop.xlane.xlu0 %3591
        %v3593 = vsel %vm1240, %v3561, 0.0
        %3594 = vadd.xlane.f32.xlu0 %v3593
        %v3595 = vpop.xlane.xlu0 %3594
        %v3596 = vsel %vm1240, %v3563, 0.0
        %3597 = vadd.xlane.f32.xlu0 %v3596
        %v3598 = vpop.xlane.xlu0 %3597
        %v3599 = vsel %vm1240, %v3565, 0.0
        %3600 = vadd.xlane.f32.xlu0 %v3599
        %v3601 = vpop.xlane.xlu0 %3600
        %v3602 = vsel %vm1240, %v3567, 0.0
        %3603 = vadd.xlane.f32.xlu0 %v3602
        %v3604 = vpop.xlane.xlu0 %3603
        %v3605 = vsel %vm1240, %v3569, 0.0
        %3606 = vadd.xlane.f32.xlu0 %v3605
        %v3607 = vpop.xlane.xlu0 %3606
        %v3608 = vsel %vm1240, %v3571, 0.0
        %3609 = vadd.xlane.f32.xlu0 %v3608
        %v3610 = vpop.xlane.xlu0 %3609
        %v3611 = vsel %vm1240, %v3573, 0.0
        %3612 = vadd.xlane.f32.xlu0 %v3611
        %v3613 = vpop.xlane.xlu0 %3612
        %v3614 = vsel %vm1240, %v3575, 0.0
        %3615 = vadd.xlane.f32.xlu0 %v3614
        %v3616 = vpop.xlane.xlu0 %3615
        %v3617 = vsel %vm1240, %v3577, 0.0
        %3618 = vadd.xlane.f32.xlu0 %v3617
        %v3619 = vpop.xlane.xlu0 %3618
        %v3620 = vsel %vm1240, %v3579, 0.0
        %3621 = vadd.xlane.f32.xlu0 %v3620
        %v3622 = vpop.xlane.xlu0 %3621
        %v3623 = vsel %vm1240, %v3581, 0.0
        %3624 = vadd.xlane.f32.xlu0 %v3623
        %v3625 = vpop.xlane.xlu0 %3624
        %v3626 = vsel %vm1240, %v3583, 0.0
        %3627 = vadd.xlane.f32.xlu0 %v3626
        %v3628 = vpop.xlane.xlu0 %3627
        %v3629 = vsel %vm1240, %v3585, 0.0
        %3630 = vadd.xlane.f32.xlu0 %v3629
        %v3631 = vpop.xlane.xlu0 %3630
        %v3632 = vsel %vm1240, %v3587, 0.0
        %3633 = vadd.xlane.f32.xlu0 %v3632
        %v3634 = vpop.xlane.xlu0 %3633
        %v3635 = vsel %vm1240, %v3589, 0.0
        %3636 = vadd.xlane.f32.xlu0 %v3635
        %v3637 = vpop.xlane.xlu0 %3636
        %v3638 = vrcp.pop %v3592
        %v3639 = vrcp.pop %v3595
        %v3640 = vrcp.pop %v3598
        %v3641 = vrcp.pop %v3601
        %v3642 = vrcp.pop %v3604
        %v3643 = vrcp.pop %v3607
        %v3644 = vrcp.pop %v3610
        %v3645 = vrcp.pop %v3613
        %v3646 = vrcp.pop %v3616
        %v3647 = vrcp.pop %v3619
        %v3648 = vrcp.pop %v3622
        %v3649 = vrcp.pop %v3625
        %v3650 = vrcp.pop %v3628
        %v3651 = vrcp.pop %v3631
        %v3652 = vrcp.pop %v3634
        %v3653 = vrcp.pop %v3637
        %v3654 = vmul.f32 %v3559, %v3638
        %v3655 = vmul.f32 %v3561, %v3639
        %v3656 = vmul.f32 %v3563, %v3640
        %v3657 = vmul.f32 %v3565, %v3641
        %v3658 = vmul.f32 %v3567, %v3642
        %v3659 = vmul.f32 %v3569, %v3643
        %v3660 = vmul.f32 %v3571, %v3644
        %v3661 = vmul.f32 %v3573, %v3645
        %v3662 = vmul.f32 %v3575, %v3646
        %v3663 = vmul.f32 %v3577, %v3647
        %v3664 = vmul.f32 %v3579, %v3648
        %v3665 = vmul.f32 %v3581, %v3649
        %v3666 = vmul.f32 %v3583, %v3650
        %v3667 = vmul.f32 %v3585, %v3651
        %v3668 = vmul.f32 %v3587, %v3652
        %v3669 = vmul.f32 %v3589, %v3653
        %v3670 = vpack.c.bf16 %v3655, %v3654
        %v3671 = vpack.c.bf16 %v3657, %v3656
        %v3672 = vpack.c.bf16 %v3659, %v3658
        %v3673 = vpack.c.bf16 %v3661, %v3660
        %v3674 = vpack.c.bf16 %v3663, %v3662
        %v3675 = vpack.c.bf16 %v3665, %v3664
        %v3676 = vpack.c.bf16 %v3667, %v3666
        %v3677 = vpack.c.bf16 %v3669, %v3668
        %3678 = vrot.lane.b32.xlu0 %v831, 112
        %v3679 = vpop.permute.xlu0 %3678
        %v3682 = vsel %vm1240, %v3670, 0
        %3684 = vmatprep.subr.bf16.mxu0 0
        %3685 = vmatpush1.bf16.msra.mxu0 %v3679
        %3686 = vmatprep.subr.bf16.mxu0 0
        %3687 = vmatpush1.bf16.msra.mxu0 0
        %3688 = vmatprep.subr.bf16.mxu0 0
        %3689 = vmatpush1.bf16.msra.mxu0 0
        %3690 = vmatprep.subr.bf16.mxu0 0
        %3691 = vmatpush1.bf16.msra.mxu0 0
        %3692 = vmatprep.subr.bf16.mxu0 0
        %3693 = vmatpush1.bf16.msra.mxu0 0
        %3694 = vmatprep.subr.bf16.mxu0 0
        %3695 = vmatpush1.bf16.msra.mxu0 0
        %3696 = vmatprep.subr.bf16.mxu0 0
        %3697 = vmatpush1.bf16.msra.mxu0 0
        %3698 = vmatprep.subr.bf16.mxu0 0
        %3699 = vmatpush1.bf16.msra.mxu0 0
        %3700 = vmatprep.subr.bf16.mxu0 0
        %3701 = vmatpush1.bf16.msra.mxu0 0
        %3702 = vmatprep.subr.bf16.mxu0 0
        %3703 = vmatpush1.bf16.msra.mxu0 0
        %3704 = vmatprep.subr.bf16.mxu0 0
        %3705 = vmatpush1.bf16.msra.mxu0 0
        %3706 = vmatprep.subr.bf16.mxu0 0
        %3707 = vmatpush1.bf16.msra.mxu0 0
        %3708 = vmatprep.subr.bf16.mxu0 0
        %3709 = vmatpush1.bf16.msra.mxu0 0
        %3710 = vmatprep.subr.bf16.mxu0 0
        %3711 = vmatpush1.bf16.msra.mxu0 0
        %3712 = vmatprep.subr.bf16.mxu0 0
        %3713 = vmatpush1.bf16.msra.mxu0 0
        %3714 = vmatprep.subr.bf16.mxu0 0
        %3715 = vmatpush1.bf16.msra.mxu0 0
        %3716 = vmatprep.mubr.bf16.mxu0 0
        %3717 = vmatmul.mubr.bf16.gmra.mrb[0].mxu0 %v3682
        %v3718 = vpop.f32.mrb[0].mxu0
        %v3719 = vadd.f32 0.0, %v3718
        %v3720 = vpop.f32.mrb[0].mxu0
        %v3721 = vpop.f32.mrb[0].mxu0
        %v3722 = vadd.f32 0.0, %v3721
        %v3723 = vpop.f32.mrb[0].mxu0
        %3724 = vdwg.mxu0
        %3725 = vrot.lane.b32.xlu0 %v832, 112
        %v3726 = vpop.permute.xlu0 %3725
        %v3729 = vsel %vm1240, %v3671, 0
        %3731 = vmatprep.subr.bf16.mxu0 0
        %3732 = vmatpush1.bf16.msra.mxu0 %v3726
        %3733 = vmatprep.subr.bf16.mxu0 0
        %3734 = vmatpush1.bf16.msra.mxu0 0
        %3735 = vmatprep.subr.bf16.mxu0 0
        %3736 = vmatpush1.bf16.msra.mxu0 0
        %3737 = vmatprep.subr.bf16.mxu0 0
        %3738 = vmatpush1.bf16.msra.mxu0 0
        %3739 = vmatprep.subr.bf16.mxu0 0
        %3740 = vmatpush1.bf16.msra.mxu0 0
        %3741 = vmatprep.subr.bf16.mxu0 0
        %3742 = vmatpush1.bf16.msra.mxu0 0
        %3743 = vmatprep.subr.bf16.mxu0 0
        %3744 = vmatpush1.bf16.msra.mxu0 0
        %3745 = vmatprep.subr.bf16.mxu0 0
        %3746 = vmatpush1.bf16.msra.mxu0 0
        %3747 = vmatprep.subr.bf16.mxu0 0
        %3748 = vmatpush1.bf16.msra.mxu0 0
        %3749 = vmatprep.subr.bf16.mxu0 0
        %3750 = vmatpush1.bf16.msra.mxu0 0
        %3751 = vmatprep.subr.bf16.mxu0 0
        %3752 = vmatpush1.bf16.msra.mxu0 0
        %3753 = vmatprep.subr.bf16.mxu0 0
        %3754 = vmatpush1.bf16.msra.mxu0 0
        %3755 = vmatprep.subr.bf16.mxu0 0
        %3756 = vmatpush1.bf16.msra.mxu0 0
        %3757 = vmatprep.subr.bf16.mxu0 0
        %3758 = vmatpush1.bf16.msra.mxu0 0
        %3759 = vmatprep.subr.bf16.mxu0 0
        %3760 = vmatpush1.bf16.msra.mxu0 0
        %3761 = vmatprep.subr.bf16.mxu0 0
        %3762 = vmatpush1.bf16.msra.mxu0 0
        %3763 = vmatprep.mubr.bf16.mxu0 0
        %3764 = vmatmul.mubr.bf16.gmra.mrb[0].mxu0 %v3729
        %v3765 = vpop.f32.mrb[0].mxu0
        %v3766 = vadd.f32 0.0, %v3765
        %v3767 = vpop.f32.mrb[0].mxu0
        %v3768 = vpop.f32.mrb[0].mxu0
        %v3769 = vadd.f32 0.0, %v3768
        %v3770 = vpop.f32.mrb[0].mxu0
        %3771 = vdwg.mxu0
        %3772 = vrot.lane.b32.xlu0 %v833, 112
        %v3773 = vpop.permute.xlu0 %3772
        %v3776 = vsel %vm1240, %v3672, 0
        %3778 = vmatprep.subr.bf16.mxu0 0
        %3779 = vmatpush1.bf16.msra.mxu0 %v3773
        %3780 = vmatprep.subr.bf16.mxu0 0
        %3781 = vmatpush1.bf16.msra.mxu0 0
        %3782 = vmatprep.subr.bf16.mxu0 0
        %3783 = vmatpush1.bf16.msra.mxu0 0
        %3784 = vmatprep.subr.bf16.mxu0 0
        %3785 = vmatpush1.bf16.msra.mxu0 0
        %3786 = vmatprep.subr.bf16.mxu0 0
        %3787 = vmatpush1.bf16.msra.mxu0 0
        %3788 = vmatprep.subr.bf16.mxu0 0
        %3789 = vmatpush1.bf16.msra.mxu0 0
        %3790 = vmatprep.subr.bf16.mxu0 0
        %3791 = vmatpush1.bf16.msra.mxu0 0
        %3792 = vmatprep.subr.bf16.mxu0 0
        %3793 = vmatpush1.bf16.msra.mxu0 0
        %3794 = vmatprep.subr.bf16.mxu0 0
        %3795 = vmatpush1.bf16.msra.mxu0 0
        %3796 = vmatprep.subr.bf16.mxu0 0
        %3797 = vmatpush1.bf16.msra.mxu0 0
        %3798 = vmatprep.subr.bf16.mxu0 0
        %3799 = vmatpush1.bf16.msra.mxu0 0
        %3800 = vmatprep.subr.bf16.mxu0 0
        %3801 = vmatpush1.bf16.msra.mxu0 0
        %3802 = vmatprep.subr.bf16.mxu0 0
        %3803 = vmatpush1.bf16.msra.mxu0 0
        %3804 = vmatprep.subr.bf16.mxu0 0
        %3805 = vmatpush1.bf16.msra.mxu0 0
        %3806 = vmatprep.subr.bf16.mxu0 0
        %3807 = vmatpush1.bf16.msra.mxu0 0
        %3808 = vmatprep.subr.bf16.mxu0 0
        %3809 = vmatpush1.bf16.msra.mxu0 0
        %3810 = vmatprep.mubr.bf16.mxu0 0
        %3811 = vmatmul.mubr.bf16.gmra.mrb[0].mxu0 %v3776
        %v3812 = vpop.f32.mrb[0].mxu0
        %v3813 = vadd.f32 0.0, %v3812
        %v3814 = vpop.f32.mrb[0].mxu0
        %v3815 = vpop.f32.mrb[0].mxu0
        %v3816 = vadd.f32 0.0, %v3815
        %v3817 = vpop.f32.mrb[0].mxu0
        %3818 = vdwg.mxu0
        %3819 = vrot.lane.b32.xlu0 %v834, 112
        %v3820 = vpop.permute.xlu0 %3819
        %v3823 = vsel %vm1240, %v3673, 0
        %3825 = vmatprep.subr.bf16.mxu0 0
        %3826 = vmatpush1.bf16.msra.mxu0 %v3820
        %3827 = vmatprep.subr.bf16.mxu0 0
        %3828 = vmatpush1.bf16.msra.mxu0 0
        %3829 = vmatprep.subr.bf16.mxu0 0
        %3830 = vmatpush1.bf16.msra.mxu0 0
        %3831 = vmatprep.subr.bf16.mxu0 0
        %3832 = vmatpush1.bf16.msra.mxu0 0
        %3833 = vmatprep.subr.bf16.mxu0 0
        %3834 = vmatpush1.bf16.msra.mxu0 0
        %3835 = vmatprep.subr.bf16.mxu0 0
        %3836 = vmatpush1.bf16.msra.mxu0 0
        %3837 = vmatprep.subr.bf16.mxu0 0
        %3838 = vmatpush1.bf16.msra.mxu0 0
        %3839 = vmatprep.subr.bf16.mxu0 0
        %3840 = vmatpush1.bf16.msra.mxu0 0
        %3841 = vmatprep.subr.bf16.mxu0 0
        %3842 = vmatpush1.bf16.msra.mxu0 0
        %3843 = vmatprep.subr.bf16.mxu0 0
        %3844 = vmatpush1.bf16.msra.mxu0 0
        %3845 = vmatprep.subr.bf16.mxu0 0
        %3846 = vmatpush1.bf16.msra.mxu0 0
        %3847 = vmatprep.subr.bf16.mxu0 0
        %3848 = vmatpush1.bf16.msra.mxu0 0
        %3849 = vmatprep.subr.bf16.mxu0 0
        %3850 = vmatpush1.bf16.msra.mxu0 0
        %3851 = vmatprep.subr.bf16.mxu0 0
        %3852 = vmatpush1.bf16.msra.mxu0 0
        %3853 = vmatprep.subr.bf16.mxu0 0
        %3854 = vmatpush1.bf16.msra.mxu0 0
        %3855 = vmatprep.subr.bf16.mxu0 0
        %3856 = vmatpush1.bf16.msra.mxu0 0
        %3857 = vmatprep.mubr.bf16.mxu0 0
        %3858 = vmatmul.mubr.bf16.gmra.mrb[0].mxu0 %v3823
        %v3859 = vpop.f32.mrb[0].mxu0
        %v3860 = vadd.f32 0.0, %v3859
        %v3861 = vpop.f32.mrb[0].mxu0
        %v3862 = vpop.f32.mrb[0].mxu0
        %v3863 = vadd.f32 0.0, %v3862
        %v3864 = vpop.f32.mrb[0].mxu0
        %3865 = vdwg.mxu0
        %3866 = vrot.lane.b32.xlu0 %v835, 112
        %v3867 = vpop.permute.xlu0 %3866
        %v3870 = vsel %vm1240, %v3674, 0
        %3872 = vmatprep.subr.bf16.mxu0 0
        %3873 = vmatpush1.bf16.msra.mxu0 %v3867
        %3874 = vmatprep.subr.bf16.mxu0 0
        %3875 = vmatpush1.bf16.msra.mxu0 0
        %3876 = vmatprep.subr.bf16.mxu0 0
        %3877 = vmatpush1.bf16.msra.mxu0 0
        %3878 = vmatprep.subr.bf16.mxu0 0
        %3879 = vmatpush1.bf16.msra.mxu0 0
        %3880 = vmatprep.subr.bf16.mxu0 0
        %3881 = vmatpush1.bf16.msra.mxu0 0
        %3882 = vmatprep.subr.bf16.mxu0 0
        %3883 = vmatpush1.bf16.msra.mxu0 0
        %3884 = vmatprep.subr.bf16.mxu0 0
        %3885 = vmatpush1.bf16.msra.mxu0 0
        %3886 = vmatprep.subr.bf16.mxu0 0
        %3887 = vmatpush1.bf16.msra.mxu0 0
        %3888 = vmatprep.subr.bf16.mxu0 0
        %3889 = vmatpush1.bf16.msra.mxu0 0
        %3890 = vmatprep.subr.bf16.mxu0 0
        %3891 = vmatpush1.bf16.msra.mxu0 0
        %3892 = vmatprep.subr.bf16.mxu0 0
        %3893 = vmatpush1.bf16.msra.mxu0 0
        %3894 = vmatprep.subr.bf16.mxu0 0
        %3895 = vmatpush1.bf16.msra.mxu0 0
        %3896 = vmatprep.subr.bf16.mxu0 0
        %3897 = vmatpush1.bf16.msra.mxu0 0
        %3898 = vmatprep.subr.bf16.mxu0 0
        %3899 = vmatpush1.bf16.msra.mxu0 0
        %3900 = vmatprep.subr.bf16.mxu0 0
        %3901 = vmatpush1.bf16.msra.mxu0 0
        %3902 = vmatprep.subr.bf16.mxu0 0
        %3903 = vmatpush1.bf16.msra.mxu0 0
        %3904 = vmatprep.mubr.bf16.mxu0 0
        %3905 = vmatmul.mubr.bf16.gmra.mrb[0].mxu0 %v3870
        %v3906 = vpop.f32.mrb[0].mxu0
        %v3907 = vadd.f32 0.0, %v3906
        %v3908 = vpop.f32.mrb[0].mxu0
        %v3909 = vpop.f32.mrb[0].mxu0
        %v3910 = vadd.f32 0.0, %v3909
        %v3911 = vpop.f32.mrb[0].mxu0
        %3912 = vdwg.mxu0
        %3913 = vrot.lane.b32.xlu0 %v836, 112
        %v3914 = vpop.permute.xlu0 %3913
        %v3917 = vsel %vm1240, %v3675, 0
        %3919 = vmatprep.subr.bf16.mxu0 0
        %3920 = vmatpush1.bf16.msra.mxu0 %v3914
        %3921 = vmatprep.subr.bf16.mxu0 0
        %3922 = vmatpush1.bf16.msra.mxu0 0
        %3923 = vmatprep.subr.bf16.mxu0 0
        %3924 = vmatpush1.bf16.msra.mxu0 0
        %3925 = vmatprep.subr.bf16.mxu0 0
        %3926 = vmatpush1.bf16.msra.mxu0 0
        %3927 = vmatprep.subr.bf16.mxu0 0
        %3928 = vmatpush1.bf16.msra.mxu0 0
        %3929 = vmatprep.subr.bf16.mxu0 0
        %3930 = vmatpush1.bf16.msra.mxu0 0
        %3931 = vmatprep.subr.bf16.mxu0 0
        %3932 = vmatpush1.bf16.msra.mxu0 0
        %3933 = vmatprep.subr.bf16.mxu0 0
        %3934 = vmatpush1.bf16.msra.mxu0 0
        %3935 = vmatprep.subr.bf16.mxu0 0
        %3936 = vmatpush1.bf16.msra.mxu0 0
        %3937 = vmatprep.subr.bf16.mxu0 0
        %3938 = vmatpush1.bf16.msra.mxu0 0
        %3939 = vmatprep.subr.bf16.mxu0 0
        %3940 = vmatpush1.bf16.msra.mxu0 0
        %3941 = vmatprep.subr.bf16.mxu0 0
        %3942 = vmatpush1.bf16.msra.mxu0 0
        %3943 = vmatprep.subr.bf16.mxu0 0
        %3944 = vmatpush1.bf16.msra.mxu0 0
        %3945 = vmatprep.subr.bf16.mxu0 0
        %3946 = vmatpush1.bf16.msra.mxu0 0
        %3947 = vmatprep.subr.bf16.mxu0 0
        %3948 = vmatpush1.bf16.msra.mxu0 0
        %3949 = vmatprep.subr.bf16.mxu0 0
        %3950 = vmatpush1.bf16.msra.mxu0 0
        %3951 = vmatprep.mubr.bf16.mxu0 0
        %3952 = vmatmul.mubr.bf16.gmra.mrb[0].mxu0 %v3917
        %v3953 = vpop.f32.mrb[0].mxu0
        %v3954 = vadd.f32 0.0, %v3953
        %v3955 = vpop.f32.mrb[0].mxu0
        %v3956 = vpop.f32.mrb[0].mxu0
        %v3957 = vadd.f32 0.0, %v3956
        %v3958 = vpop.f32.mrb[0].mxu0
        %3959 = vdwg.mxu0
        %3960 = vrot.lane.b32.xlu0 %v837, 112
        %v3961 = vpop.permute.xlu0 %3960
        %v3964 = vsel %vm1240, %v3676, 0
        %3966 = vmatprep.subr.bf16.mxu0 0
        %3967 = vmatpush1.bf16.msra.mxu0 %v3961
        %3968 = vmatprep.subr.bf16.mxu0 0
        %3969 = vmatpush1.bf16.msra.mxu0 0
        %3970 = vmatprep.subr.bf16.mxu0 0
        %3971 = vmatpush1.bf16.msra.mxu0 0
        %3972 = vmatprep.subr.bf16.mxu0 0
        %3973 = vmatpush1.bf16.msra.mxu0 0
        %3974 = vmatprep.subr.bf16.mxu0 0
        %3975 = vmatpush1.bf16.msra.mxu0 0
        %3976 = vmatprep.subr.bf16.mxu0 0
        %3977 = vmatpush1.bf16.msra.mxu0 0
        %3978 = vmatprep.subr.bf16.mxu0 0
        %3979 = vmatpush1.bf16.msra.mxu0 0
        %3980 = vmatprep.subr.bf16.mxu0 0
        %3981 = vmatpush1.bf16.msra.mxu0 0
        %3982 = vmatprep.subr.bf16.mxu0 0
        %3983 = vmatpush1.bf16.msra.mxu0 0
        %3984 = vmatprep.subr.bf16.mxu0 0
        %3985 = vmatpush1.bf16.msra.mxu0 0
        %3986 = vmatprep.subr.bf16.mxu0 0
        %3987 = vmatpush1.bf16.msra.mxu0 0
        %3988 = vmatprep.subr.bf16.mxu0 0
        %3989 = vmatpush1.bf16.msra.mxu0 0
        %3990 = vmatprep.subr.bf16.mxu0 0
        %3991 = vmatpush1.bf16.msra.mxu0 0
        %3992 = vmatprep.subr.bf16.mxu0 0
        %3993 = vmatpush1.bf16.msra.mxu0 0
        %3994 = vmatprep.subr.bf16.mxu0 0
        %3995 = vmatpush1.bf16.msra.mxu0 0
        %3996 = vmatprep.subr.bf16.mxu0 0
        %3997 = vmatpush1.bf16.msra.mxu0 0
        %3998 = vmatprep.mubr.bf16.mxu0 0
        %3999 = vmatmul.mubr.bf16.gmra.mrb[0].mxu0 %v3964
        %v4000 = vpop.f32.mrb[0].mxu0
        %v4001 = vadd.f32 0.0, %v4000
        %v4002 = vpop.f32.mrb[0].mxu0
        %v4003 = vpop.f32.mrb[0].mxu0
        %v4004 = vadd.f32 0.0, %v4003
        %v4005 = vpop.f32.mrb[0].mxu0
        %4006 = vdwg.mxu0
        %4007 = vrot.lane.b32.xlu0 %v838, 112
        %v4008 = vpop.permute.xlu0 %4007
        %v4011 = vsel %vm1240, %v3677, 0
        %4013 = vmatprep.subr.bf16.mxu0 0
        %4014 = vmatpush1.bf16.msra.mxu0 %v4008
        %4015 = vmatprep.subr.bf16.mxu0 0
        %4016 = vmatpush1.bf16.msra.mxu0 0
        %4017 = vmatprep.subr.bf16.mxu0 0
        %4018 = vmatpush1.bf16.msra.mxu0 0
        %4019 = vmatprep.subr.bf16.mxu0 0
        %4020 = vmatpush1.bf16.msra.mxu0 0
        %4021 = vmatprep.subr.bf16.mxu0 0
        %4022 = vmatpush1.bf16.msra.mxu0 0
        %4023 = vmatprep.subr.bf16.mxu0 0
        %4024 = vmatpush1.bf16.msra.mxu0 0
        %4025 = vmatprep.subr.bf16.mxu0 0
        %4026 = vmatpush1.bf16.msra.mxu0 0
        %4027 = vmatprep.subr.bf16.mxu0 0
        %4028 = vmatpush1.bf16.msra.mxu0 0
        %4029 = vmatprep.subr.bf16.mxu0 0
        %4030 = vmatpush1.bf16.msra.mxu0 0
        %4031 = vmatprep.subr.bf16.mxu0 0
        %4032 = vmatpush1.bf16.msra.mxu0 0
        %4033 = vmatprep.subr.bf16.mxu0 0
        %4034 = vmatpush1.bf16.msra.mxu0 0
        %4035 = vmatprep.subr.bf16.mxu0 0
        %4036 = vmatpush1.bf16.msra.mxu0 0
        %4037 = vmatprep.subr.bf16.mxu0 0
        %4038 = vmatpush1.bf16.msra.mxu0 0
        %4039 = vmatprep.subr.bf16.mxu0 0
        %4040 = vmatpush1.bf16.msra.mxu0 0
        %4041 = vmatprep.subr.bf16.mxu0 0
        %4042 = vmatpush1.bf16.msra.mxu0 0
        %4043 = vmatprep.subr.bf16.mxu0 0
        %4044 = vmatpush1.bf16.msra.mxu0 0
        %4045 = vmatprep.mubr.bf16.mxu0 0
        %4046 = vmatmul.mubr.bf16.gmra.mrb[0].mxu0 %v4011
        %v4047 = vpop.f32.mrb[0].mxu0
        %v4048 = vadd.f32 0.0, %v4047
        %v4049 = vpop.f32.mrb[0].mxu0
        %v4050 = vpop.f32.mrb[0].mxu0
        %v4051 = vadd.f32 0.0, %v4050
        %v4052 = vpop.f32.mrb[0].mxu0
        %4053 = vdwg.mxu0
        %v4054 = vpack.c.bf16 %v3722, %v3719
        %v4055 = vpack.c.bf16 %v3769, %v3766
        %v4056 = vpack.c.bf16 %v3816, %v3813
        %v4057 = vpack.c.bf16 %v3863, %v3860
        %v4058 = vpack.c.bf16 %v3910, %v3907
        %v4059 = vpack.c.bf16 %v3957, %v3954
        %v4060 = vpack.c.bf16 %v4004, %v4001
        %v4061 = vpack.c.bf16 %v4051, %v4048
        %v4062 = vld [vmem:[#allocation10 + $0x8] sm:$0xf]
        %v4064 = vsel %vm839, %v4054, 0
        %v4067 = vsel %vm839, %v4055, 0
        %v4070 = vsel %vm839, %v4056, 0
        %v4073 = vsel %vm839, %v4057, 0
        %v4076 = vsel %vm839, %v4058, 0
        %v4079 = vsel %vm839, %v4059, 0
        %v4082 = vsel %vm839, %v4060, 0
        %v4085 = vsel %vm839, %v4061, 0
        %v4088 = vsel %vm2836, %v4062, 0
        %4090 = vmatprep.subr.bf16.mxu0 0
        %4091 = vmatpush1.bf16.msra.mxu0 %v4088
        %4092 = vmatprep.subr.bf16.mxu0 0
        %4093 = vmatpush1.bf16.msra.mxu0 0
        %4094 = vmatprep.subr.bf16.mxu0 0
        %4095 = vmatpush1.bf16.msra.mxu0 0
        %4096 = vmatprep.subr.bf16.mxu0 0
        %4097 = vmatpush1.bf16.msra.mxu0 0
        %4098 = vmatprep.subr.bf16.mxu0 0
        %4099 = vmatpush1.bf16.msra.mxu0 0
        %4100 = vmatprep.subr.bf16.mxu0 0
        %4101 = vmatpush1.bf16.msra.mxu0 0
        %4102 = vmatprep.subr.bf16.mxu0 0
        %4103 = vmatpush1.bf16.msra.mxu0 0
        %4104 = vmatprep.subr.bf16.mxu0 0
        %4105 = vmatpush1.bf16.msra.mxu0 0
        %4106 = vmatprep.subr.bf16.mxu0 0
        %4107 = vmatpush1.bf16.msra.mxu0 0
        %4108 = vmatprep.subr.bf16.mxu0 0
        %4109 = vmatpush1.bf16.msra.mxu0 0
        %4110 = vmatprep.subr.bf16.mxu0 0
        %4111 = vmatpush1.bf16.msra.mxu0 0
        %4112 = vmatprep.subr.bf16.mxu0 0
        %4113 = vmatpush1.bf16.msra.mxu0 0
        %4114 = vmatprep.subr.bf16.mxu0 0
        %4115 = vmatpush1.bf16.msra.mxu0 0
        %4116 = vmatprep.subr.bf16.mxu0 0
        %4117 = vmatpush1.bf16.msra.mxu0 0
        %4118 = vmatprep.subr.bf16.mxu0 0
        %4119 = vmatpush1.bf16.msra.mxu0 0
        %4120 = vmatprep.subr.bf16.mxu0 0
        %4121 = vmatpush1.bf16.msra.mxu0 0
        %4122 = vmatprep.mubr.bf16.mxu0 0
        %4123 = vmatmul.mubr.bf16.gmra.mrb[0].mxu0 %v4064
        %v4124 = vpop.f32.mrb[0].mxu0
        %v4125 = vadd.f32 0.0, %v4124
        %v4126 = vpop.f32.mrb[0].mxu0
        %v4127 = vpop.f32.mrb[0].mxu0
        %v4128 = vadd.f32 0.0, %v4127
        %v4129 = vpop.f32.mrb[0].mxu0
        %4130 = vmatprep.mubr.bf16.mxu0 0
        %4131 = vmatmul.mubr.bf16.gmra.mrb[0].mxu0 %v4067
        %v4132 = vpop.f32.mrb[0].mxu0
        %v4133 = vadd.f32 0.0, %v4132
        %v4134 = vpop.f32.mrb[0].mxu0
        %v4135 = vpop.f32.mrb[0].mxu0
        %v4136 = vadd.f32 0.0, %v4135
        %v4137 = vpop.f32.mrb[0].mxu0
        %4138 = vmatprep.mubr.bf16.mxu0 0
        %4139 = vmatmul.mubr.bf16.gmra.mrb[0].mxu0 %v4070
        %v4140 = vpop.f32.mrb[0].mxu0
        %v4141 = vadd.f32 0.0, %v4140
        %v4142 = vpop.f32.mrb[0].mxu0
        %v4143 = vpop.f32.mrb[0].mxu0
        %v4144 = vadd.f32 0.0, %v4143
        %v4145 = vpop.f32.mrb[0].mxu0
        %4146 = vmatprep.mubr.bf16.mxu0 0
        %4147 = vmatmul.mubr.bf16.gmra.mrb[0].mxu0 %v4073
        %v4148 = vpop.f32.mrb[0].mxu0
        %v4149 = vadd.f32 0.0, %v4148
        %v4150 = vpop.f32.mrb[0].mxu0
        %v4151 = vpop.f32.mrb[0].mxu0
        %v4152 = vadd.f32 0.0, %v4151
        %v4153 = vpop.f32.mrb[0].mxu0
        %4154 = vmatprep.mubr.bf16.mxu0 0
        %4155 = vmatmul.mubr.bf16.gmra.mrb[0].mxu0 %v4076
        %v4156 = vpop.f32.mrb[0].mxu0
        %v4157 = vadd.f32 0.0, %v4156
        %v4158 = vpop.f32.mrb[0].mxu0
        %v4159 = vpop.f32.mrb[0].mxu0
        %v4160 = vadd.f32 0.0, %v4159
        %v4161 = vpop.f32.mrb[0].mxu0
        %4162 = vmatprep.mubr.bf16.mxu0 0
        %4163 = vmatmul.mubr.bf16.gmra.mrb[0].mxu0 %v4079
        %v4164 = vpop.f32.mrb[0].mxu0
        %v4165 = vadd.f32 0.0, %v4164
        %v4166 = vpop.f32.mrb[0].mxu0
        %v4167 = vpop.f32.mrb[0].mxu0
        %v4168 = vadd.f32 0.0, %v4167
        %v4169 = vpop.f32.mrb[0].mxu0
        %4170 = vmatprep.mubr.bf16.mxu0 0
        %4171 = vmatmul.mubr.bf16.gmra.mrb[0].mxu0 %v4082
        %v4172 = vpop.f32.mrb[0].mxu0
        %v4173 = vadd.f32 0.0, %v4172
        %v4174 = vpop.f32.mrb[0].mxu0
        %v4175 = vpop.f32.mrb[0].mxu0
        %v4176 = vadd.f32 0.0, %v4175
        %v4177 = vpop.f32.mrb[0].mxu0
        %4178 = vmatprep.mubr.bf16.mxu0 0
        %4179 = vmatmul.mubr.bf16.gmra.mrb[0].mxu0 %v4085
        %v4180 = vpop.f32.mrb[0].mxu0
        %v4181 = vadd.f32 0.0, %v4180
        %v4182 = vpop.f32.mrb[0].mxu0
        %v4183 = vpop.f32.mrb[0].mxu0
        %v4184 = vadd.f32 0.0, %v4183
        %v4185 = vpop.f32.mrb[0].mxu0
        %4186 = vdwg.mxu0
        %v4187 = vadd.f32 %v2999, %v4125
        %v4188 = vadd.f32 %v3002, %v4128
        %v4189 = vadd.f32 %v3007, %v4133
        %v4190 = vadd.f32 %v3010, %v4136
        %v4191 = vadd.f32 %v3015, %v4141
        %v4192 = vadd.f32 %v3018, %v4144
        %v4193 = vadd.f32 %v3023, %v4149
        %v4194 = vadd.f32 %v3026, %v4152
        %v4195 = vadd.f32 %v3031, %v4157
        %v4196 = vadd.f32 %v3034, %v4160
        %v4197 = vadd.f32 %v3039, %v4165
        %v4198 = vadd.f32 %v3042, %v4168
        %v4199 = vadd.f32 %v3047, %v4173
        %v4200 = vadd.f32 %v3050, %v4176
        %v4201 = vadd.f32 %v3055, %v4181
        %v4202 = vadd.f32 %v3058, %v4184
        %4203 = vrot.lane.b32.xlu0 %v815, 104
        %v4204 = vpop.permute.xlu0 %4203
        %4205 = vrot.lane.b32.xlu0 %v823, 104
        %v4206 = vpop.permute.xlu0 %4205
        %v4208 = vsel %vm839, %v4204, 0
        %v4211 = vsel %vm839, %v4206, 0
        %4213 = vmatprep.subr.bf16.mxu0 0
        %4214 = vmatpush1.bf16.xpose.msra.mxu0 %v4211
        %4215 = vmatprep.subr.bf16.mxu0 0
        %4216 = vmatpush1.bf16.xpose.msra.mxu0 0
        %4217 = vmatprep.subr.bf16.mxu0 0
        %4218 = vmatpush1.bf16.xpose.msra.mxu0 0
        %4219 = vmatprep.subr.bf16.mxu0 0
        %4220 = vmatpush1.bf16.xpose.msra.mxu0 0
        %4221 = vmatprep.subr.bf16.mxu0 0
        %4222 = vmatpush1.bf16.xpose.msra.mxu0 0
        %4223 = vmatprep.subr.bf16.mxu0 0
        %4224 = vmatpush1.bf16.xpose.msra.mxu0 0
        %4225 = vmatprep.subr.bf16.mxu0 0
        %4226 = vmatpush1.bf16.xpose.msra.mxu0 0
        %4227 = vmatprep.subr.bf16.mxu0 0
        %4228 = vmatpush1.bf16.xpose.msra.mxu0 0
        %4229 = vmatprep.subr.bf16.mxu0 0
        %4230 = vmatpush1.bf16.xpose.msra.mxu0 0
        %4231 = vmatprep.subr.bf16.mxu0 0
        %4232 = vmatpush1.bf16.xpose.msra.mxu0 0
        %4233 = vmatprep.subr.bf16.mxu0 0
        %4234 = vmatpush1.bf16.xpose.msra.mxu0 0
        %4235 = vmatprep.subr.bf16.mxu0 0
        %4236 = vmatpush1.bf16.xpose.msra.mxu0 0
        %4237 = vmatprep.subr.bf16.mxu0 0
        %4238 = vmatpush1.bf16.xpose.msra.mxu0 0
        %4239 = vmatprep.subr.bf16.mxu0 0
        %4240 = vmatpush1.bf16.xpose.msra.mxu0 0
        %4241 = vmatprep.subr.bf16.mxu0 0
        %4242 = vmatpush1.bf16.xpose.msra.mxu0 0
        %4243 = vmatprep.subr.bf16.mxu0 0
        %4244 = vmatpush1.bf16.xpose.msra.mxu0 0
        %4245 = vmatprep.mubr.bf16.mxu0 0
        %4246 = vmatmul.mubr.bf16.gmra.mrb[0].mxu0 %v4208
        %v4247 = vpop.f32.mrb[0].mxu0
        %v4248 = vadd.f32 0.0, %v4247
        %v4249 = vpop.f32.mrb[0].mxu0
        %v4250 = vpop.f32.mrb[0].mxu0
        %v4251 = vadd.f32 0.0, %v4250
        %v4252 = vpop.f32.mrb[0].mxu0
        %4253 = vdwg.mxu0
        %4254 = vrot.lane.b32.xlu0 %v816, 104
        %v4255 = vpop.permute.xlu0 %4254
        %4256 = vrot.lane.b32.xlu0 %v824, 104
        %v4257 = vpop.permute.xlu0 %4256
        %v4259 = vsel %vm839, %v4255, 0
        %v4262 = vsel %vm839, %v4257, 0
        %4264 = vmatprep.subr.bf16.mxu0 0
        %4265 = vmatpush1.bf16.xpose.msra.mxu0 %v4262
        %4266 = vmatprep.subr.bf16.mxu0 0
        %4267 = vmatpush1.bf16.xpose.msra.mxu0 0
        %4268 = vmatprep.subr.bf16.mxu0 0
        %4269 = vmatpush1.bf16.xpose.msra.mxu0 0
        %4270 = vmatprep.subr.bf16.mxu0 0
        %4271 = vmatpush1.bf16.xpose.msra.mxu0 0
        %4272 = vmatprep.subr.bf16.mxu0 0
        %4273 = vmatpush1.bf16.xpose.msra.mxu0 0
        %4274 = vmatprep.subr.bf16.mxu0 0
        %4275 = vmatpush1.bf16.xpose.msra.mxu0 0
        %4276 = vmatprep.subr.bf16.mxu0 0
        %4277 = vmatpush1.bf16.xpose.msra.mxu0 0
        %4278 = vmatprep.subr.bf16.mxu0 0
        %4279 = vmatpush1.bf16.xpose.msra.mxu0 0
        %4280 = vmatprep.subr.bf16.mxu0 0
        %4281 = vmatpush1.bf16.xpose.msra.mxu0 0
        %4282 = vmatprep.subr.bf16.mxu0 0
        %4283 = vmatpush1.bf16.xpose.msra.mxu0 0
        %4284 = vmatprep.subr.bf16.mxu0 0
        %4285 = vmatpush1.bf16.xpose.msra.mxu0 0
        %4286 = vmatprep.subr.bf16.mxu0 0
        %4287 = vmatpush1.bf16.xpose.msra.mxu0 0
        %4288 = vmatprep.subr.bf16.mxu0 0
        %4289 = vmatpush1.bf16.xpose.msra.mxu0 0
        %4290 = vmatprep.subr.bf16.mxu0 0
        %4291 = vmatpush1.bf16.xpose.msra.mxu0 0
        %4292 = vmatprep.subr.bf16.mxu0 0
        %4293 = vmatpush1.bf16.xpose.msra.mxu0 0
        %4294 = vmatprep.subr.bf16.mxu0 0
        %4295 = vmatpush1.bf16.xpose.msra.mxu0 0
        %4296 = vmatprep.mubr.bf16.mxu0 0
        %4297 = vmatmul.mubr.bf16.gmra.mrb[0].mxu0 %v4259
        %v4298 = vpop.f32.mrb[0].mxu0
        %v4299 = vadd.f32 0.0, %v4298
        %v4300 = vpop.f32.mrb[0].mxu0
        %v4301 = vpop.f32.mrb[0].mxu0
        %v4302 = vadd.f32 0.0, %v4301
        %v4303 = vpop.f32.mrb[0].mxu0
        %4304 = vdwg.mxu0
        %4305 = vrot.lane.b32.xlu0 %v817, 104
        %v4306 = vpop.permute.xlu0 %4305
        %4307 = vrot.lane.b32.xlu0 %v825, 104
        %v4308 = vpop.permute.xlu0 %4307
        %v4310 = vsel %vm839, %v4306, 0
        %v4313 = vsel %vm839, %v4308, 0
        %4315 = vmatprep.subr.bf16.mxu0 0
        %4316 = vmatpush1.bf16.xpose.msra.mxu0 %v4313
        %4317 = vmatprep.subr.bf16.mxu0 0
        %4318 = vmatpush1.bf16.xpose.msra.mxu0 0
        %4319 = vmatprep.subr.bf16.mxu0 0
        %4320 = vmatpush1.bf16.xpose.msra.mxu0 0
        %4321 = vmatprep.subr.bf16.mxu0 0
        %4322 = vmatpush1.bf16.xpose.msra.mxu0 0
        %4323 = vmatprep.subr.bf16.mxu0 0
        %4324 = vmatpush1.bf16.xpose.msra.mxu0 0
        %4325 = vmatprep.subr.bf16.mxu0 0
        %4326 = vmatpush1.bf16.xpose.msra.mxu0 0
        %4327 = vmatprep.subr.bf16.mxu0 0
        %4328 = vmatpush1.bf16.xpose.msra.mxu0 0
        %4329 = vmatprep.subr.bf16.mxu0 0
        %4330 = vmatpush1.bf16.xpose.msra.mxu0 0
        %4331 = vmatprep.subr.bf16.mxu0 0
        %4332 = vmatpush1.bf16.xpose.msra.mxu0 0
        %4333 = vmatprep.subr.bf16.mxu0 0
        %4334 = vmatpush1.bf16.xpose.msra.mxu0 0
        %4335 = vmatprep.subr.bf16.mxu0 0
        %4336 = vmatpush1.bf16.xpose.msra.mxu0 0
        %4337 = vmatprep.subr.bf16.mxu0 0
        %4338 = vmatpush1.bf16.xpose.msra.mxu0 0
        %4339 = vmatprep.subr.bf16.mxu0 0
        %4340 = vmatpush1.bf16.xpose.msra.mxu0 0
        %4341 = vmatprep.subr.bf16.mxu0 0
        %4342 = vmatpush1.bf16.xpose.msra.mxu0 0
        %4343 = vmatprep.subr.bf16.mxu0 0
        %4344 = vmatpush1.bf16.xpose.msra.mxu0 0
        %4345 = vmatprep.subr.bf16.mxu0 0
        %4346 = vmatpush1.bf16.xpose.msra.mxu0 0
        %4347 = vmatprep.mubr.bf16.mxu0 0
        %4348 = vmatmul.mubr.bf16.gmra.mrb[0].mxu0 %v4310
        %v4349 = vpop.f32.mrb[0].mxu0
        %v4350 = vadd.f32 0.0, %v4349
        %v4351 = vpop.f32.mrb[0].mxu0
        %v4352 = vpop.f32.mrb[0].mxu0
        %v4353 = vadd.f32 0.0, %v4352
        %v4354 = vpop.f32.mrb[0].mxu0
        %4355 = vdwg.mxu0
        %4356 = vrot.lane.b32.xlu0 %v818, 104
        %v4357 = vpop.permute.xlu0 %4356
        %4358 = vrot.lane.b32.xlu0 %v826, 104
        %v4359 = vpop.permute.xlu0 %4358
        %v4361 = vsel %vm839, %v4357, 0
        %v4364 = vsel %vm839, %v4359, 0
        %4366 = vmatprep.subr.bf16.mxu0 0
        %4367 = vmatpush1.bf16.xpose.msra.mxu0 %v4364
        %4368 = vmatprep.subr.bf16.mxu0 0
        %4369 = vmatpush1.bf16.xpose.msra.mxu0 0
        %4370 = vmatprep.subr.bf16.mxu0 0
        %4371 = vmatpush1.bf16.xpose.msra.mxu0 0
        %4372 = vmatprep.subr.bf16.mxu0 0
        %4373 = vmatpush1.bf16.xpose.msra.mxu0 0
        %4374 = vmatprep.subr.bf16.mxu0 0
        %4375 = vmatpush1.bf16.xpose.msra.mxu0 0
        %4376 = vmatprep.subr.bf16.mxu0 0
        %4377 = vmatpush1.bf16.xpose.msra.mxu0 0
        %4378 = vmatprep.subr.bf16.mxu0 0
        %4379 = vmatpush1.bf16.xpose.msra.mxu0 0
        %4380 = vmatprep.subr.bf16.mxu0 0
        %4381 = vmatpush1.bf16.xpose.msra.mxu0 0
        %4382 = vmatprep.subr.bf16.mxu0 0
        %4383 = vmatpush1.bf16.xpose.msra.mxu0 0
        %4384 = vmatprep.subr.bf16.mxu0 0
        %4385 = vmatpush1.bf16.xpose.msra.mxu0 0
        %4386 = vmatprep.subr.bf16.mxu0 0
        %4387 = vmatpush1.bf16.xpose.msra.mxu0 0
        %4388 = vmatprep.subr.bf16.mxu0 0
        %4389 = vmatpush1.bf16.xpose.msra.mxu0 0
        %4390 = vmatprep.subr.bf16.mxu0 0
        %4391 = vmatpush1.bf16.xpose.msra.mxu0 0
        %4392 = vmatprep.subr.bf16.mxu0 0
        %4393 = vmatpush1.bf16.xpose.msra.mxu0 0
        %4394 = vmatprep.subr.bf16.mxu0 0
        %4395 = vmatpush1.bf16.xpose.msra.mxu0 0
        %4396 = vmatprep.subr.bf16.mxu0 0
        %4397 = vmatpush1.bf16.xpose.msra.mxu0 0
        %4398 = vmatprep.mubr.bf16.mxu0 0
        %4399 = vmatmul.mubr.bf16.gmra.mrb[0].mxu0 %v4361
        %v4400 = vpop.f32.mrb[0].mxu0
        %v4401 = vadd.f32 0.0, %v4400
        %v4402 = vpop.f32.mrb[0].mxu0
        %v4403 = vpop.f32.mrb[0].mxu0
        %v4404 = vadd.f32 0.0, %v4403
        %v4405 = vpop.f32.mrb[0].mxu0
        %4406 = vdwg.mxu0
        %4407 = vrot.lane.b32.xlu0 %v819, 104
        %v4408 = vpop.permute.xlu0 %4407
        %4409 = vrot.lane.b32.xlu0 %v827, 104
        %v4410 = vpop.permute.xlu0 %4409
        %v4412 = vsel %vm839, %v4408, 0
        %v4415 = vsel %vm839, %v4410, 0
        %4417 = vmatprep.subr.bf16.mxu0 0
        %4418 = vmatpush1.bf16.xpose.msra.mxu0 %v4415
        %4419 = vmatprep.subr.bf16.mxu0 0
        %4420 = vmatpush1.bf16.xpose.msra.mxu0 0
        %4421 = vmatprep.subr.bf16.mxu0 0
        %4422 = vmatpush1.bf16.xpose.msra.mxu0 0
        %4423 = vmatprep.subr.bf16.mxu0 0
        %4424 = vmatpush1.bf16.xpose.msra.mxu0 0
        %4425 = vmatprep.subr.bf16.mxu0 0
        %4426 = vmatpush1.bf16.xpose.msra.mxu0 0
        %4427 = vmatprep.subr.bf16.mxu0 0
        %4428 = vmatpush1.bf16.xpose.msra.mxu0 0
        %4429 = vmatprep.subr.bf16.mxu0 0
        %4430 = vmatpush1.bf16.xpose.msra.mxu0 0
        %4431 = vmatprep.subr.bf16.mxu0 0
        %4432 = vmatpush1.bf16.xpose.msra.mxu0 0
        %4433 = vmatprep.subr.bf16.mxu0 0
        %4434 = vmatpush1.bf16.xpose.msra.mxu0 0
        %4435 = vmatprep.subr.bf16.mxu0 0
        %4436 = vmatpush1.bf16.xpose.msra.mxu0 0
        %4437 = vmatprep.subr.bf16.mxu0 0
        %4438 = vmatpush1.bf16.xpose.msra.mxu0 0
        %4439 = vmatprep.subr.bf16.mxu0 0
        %4440 = vmatpush1.bf16.xpose.msra.mxu0 0
        %4441 = vmatprep.subr.bf16.mxu0 0
        %4442 = vmatpush1.bf16.xpose.msra.mxu0 0
        %4443 = vmatprep.subr.bf16.mxu0 0
        %4444 = vmatpush1.bf16.xpose.msra.mxu0 0
        %4445 = vmatprep.subr.bf16.mxu0 0
        %4446 = vmatpush1.bf16.xpose.msra.mxu0 0
        %4447 = vmatprep.subr.bf16.mxu0 0
        %4448 = vmatpush1.bf16.xpose.msra.mxu0 0
        %4449 = vmatprep.mubr.bf16.mxu0 0
        %4450 = vmatmul.mubr.bf16.gmra.mrb[0].mxu0 %v4412
        %v4451 = vpop.f32.mrb[0].mxu0
        %v4452 = vadd.f32 0.0, %v4451
        %v4453 = vpop.f32.mrb[0].mxu0
        %v4454 = vpop.f32.mrb[0].mxu0
        %v4455 = vadd.f32 0.0, %v4454
        %v4456 = vpop.f32.mrb[0].mxu0
        %4457 = vdwg.mxu0
        %4458 = vrot.lane.b32.xlu0 %v820, 104
        %v4459 = vpop.permute.xlu0 %4458
        %4460 = vrot.lane.b32.xlu0 %v828, 104
        %v4461 = vpop.permute.xlu0 %4460
        %v4463 = vsel %vm839, %v4459, 0
        %v4466 = vsel %vm839, %v4461, 0
        %4468 = vmatprep.subr.bf16.mxu0 0
        %4469 = vmatpush1.bf16.xpose.msra.mxu0 %v4466
        %4470 = vmatprep.subr.bf16.mxu0 0
        %4471 = vmatpush1.bf16.xpose.msra.mxu0 0
        %4472 = vmatprep.subr.bf16.mxu0 0
        %4473 = vmatpush1.bf16.xpose.msra.mxu0 0
        %4474 = vmatprep.subr.bf16.mxu0 0
        %4475 = vmatpush1.bf16.xpose.msra.mxu0 0
        %4476 = vmatprep.subr.bf16.mxu0 0
        %4477 = vmatpush1.bf16.xpose.msra.mxu0 0
        %4478 = vmatprep.subr.bf16.mxu0 0
        %4479 = vmatpush1.bf16.xpose.msra.mxu0 0
        %4480 = vmatprep.subr.bf16.mxu0 0
        %4481 = vmatpush1.bf16.xpose.msra.mxu0 0
        %4482 = vmatprep.subr.bf16.mxu0 0
        %4483 = vmatpush1.bf16.xpose.msra.mxu0 0
        %4484 = vmatprep.subr.bf16.mxu0 0
        %4485 = vmatpush1.bf16.xpose.msra.mxu0 0
        %4486 = vmatprep.subr.bf16.mxu0 0
        %4487 = vmatpush1.bf16.xpose.msra.mxu0 0
        %4488 = vmatprep.subr.bf16.mxu0 0
        %4489 = vmatpush1.bf16.xpose.msra.mxu0 0
        %4490 = vmatprep.subr.bf16.mxu0 0
        %4491 = vmatpush1.bf16.xpose.msra.mxu0 0
        %4492 = vmatprep.subr.bf16.mxu0 0
        %4493 = vmatpush1.bf16.xpose.msra.mxu0 0
        %4494 = vmatprep.subr.bf16.mxu0 0
        %4495 = vmatpush1.bf16.xpose.msra.mxu0 0
        %4496 = vmatprep.subr.bf16.mxu0 0
        %4497 = vmatpush1.bf16.xpose.msra.mxu0 0
        %4498 = vmatprep.subr.bf16.mxu0 0
        %4499 = vmatpush1.bf16.xpose.msra.mxu0 0
        %4500 = vmatprep.mubr.bf16.mxu0 0
        %4501 = vmatmul.mubr.bf16.gmra.mrb[0].mxu0 %v4463
        %v4502 = vpop.f32.mrb[0].mxu0
        %v4503 = vadd.f32 0.0, %v4502
        %v4504 = vpop.f32.mrb[0].mxu0
        %v4505 = vpop.f32.mrb[0].mxu0
        %v4506 = vadd.f32 0.0, %v4505
        %v4507 = vpop.f32.mrb[0].mxu0
        %4508 = vdwg.mxu0
        %4509 = vrot.lane.b32.xlu0 %v821, 104
        %v4510 = vpop.permute.xlu0 %4509
        %4511 = vrot.lane.b32.xlu0 %v829, 104
        %v4512 = vpop.permute.xlu0 %4511
        %v4514 = vsel %vm839, %v4510, 0
        %v4517 = vsel %vm839, %v4512, 0
        %4519 = vmatprep.subr.bf16.mxu0 0
        %4520 = vmatpush1.bf16.xpose.msra.mxu0 %v4517
        %4521 = vmatprep.subr.bf16.mxu0 0
        %4522 = vmatpush1.bf16.xpose.msra.mxu0 0
        %4523 = vmatprep.subr.bf16.mxu0 0
        %4524 = vmatpush1.bf16.xpose.msra.mxu0 0
        %4525 = vmatprep.subr.bf16.mxu0 0
        %4526 = vmatpush1.bf16.xpose.msra.mxu0 0
        %4527 = vmatprep.subr.bf16.mxu0 0
        %4528 = vmatpush1.bf16.xpose.msra.mxu0 0
        %4529 = vmatprep.subr.bf16.mxu0 0
        %4530 = vmatpush1.bf16.xpose.msra.mxu0 0
        %4531 = vmatprep.subr.bf16.mxu0 0
        %4532 = vmatpush1.bf16.xpose.msra.mxu0 0
        %4533 = vmatprep.subr.bf16.mxu0 0
        %4534 = vmatpush1.bf16.xpose.msra.mxu0 0
        %4535 = vmatprep.subr.bf16.mxu0 0
        %4536 = vmatpush1.bf16.xpose.msra.mxu0 0
        %4537 = vmatprep.subr.bf16.mxu0 0
        %4538 = vmatpush1.bf16.xpose.msra.mxu0 0
        %4539 = vmatprep.subr.bf16.mxu0 0
        %4540 = vmatpush1.bf16.xpose.msra.mxu0 0
        %4541 = vmatprep.subr.bf16.mxu0 0
        %4542 = vmatpush1.bf16.xpose.msra.mxu0 0
        %4543 = vmatprep.subr.bf16.mxu0 0
        %4544 = vmatpush1.bf16.xpose.msra.mxu0 0
        %4545 = vmatprep.subr.bf16.mxu0 0
        %4546 = vmatpush1.bf16.xpose.msra.mxu0 0
        %4547 = vmatprep.subr.bf16.mxu0 0
        %4548 = vmatpush1.bf16.xpose.msra.mxu0 0
        %4549 = vmatprep.subr.bf16.mxu0 0
        %4550 = vmatpush1.bf16.xpose.msra.mxu0 0
        %4551 = vmatprep.mubr.bf16.mxu0 0
        %4552 = vmatmul.mubr.bf16.gmra.mrb[0].mxu0 %v4514
        %v4553 = vpop.f32.mrb[0].mxu0
        %v4554 = vadd.f32 0.0, %v4553
        %v4555 = vpop.f32.mrb[0].mxu0
        %v4556 = vpop.f32.mrb[0].mxu0
        %v4557 = vadd.f32 0.0, %v4556
        %v4558 = vpop.f32.mrb[0].mxu0
        %4559 = vdwg.mxu0
        %4560 = vrot.lane.b32.xlu0 %v822, 104
        %v4561 = vpop.permute.xlu0 %4560
        %4562 = vrot.lane.b32.xlu0 %v830, 104
        %v4563 = vpop.permute.xlu0 %4562
        %v4565 = vsel %vm839, %v4561, 0
        %v4568 = vsel %vm839, %v4563, 0
        %4570 = vmatprep.subr.bf16.mxu0 0
        %4571 = vmatpush1.bf16.xpose.msra.mxu0 %v4568
        %4572 = vmatprep.subr.bf16.mxu0 0
        %4573 = vmatpush1.bf16.xpose.msra.mxu0 0
        %4574 = vmatprep.subr.bf16.mxu0 0
        %4575 = vmatpush1.bf16.xpose.msra.mxu0 0
        %4576 = vmatprep.subr.bf16.mxu0 0
        %4577 = vmatpush1.bf16.xpose.msra.mxu0 0
        %4578 = vmatprep.subr.bf16.mxu0 0
        %4579 = vmatpush1.bf16.xpose.msra.mxu0 0
        %4580 = vmatprep.subr.bf16.mxu0 0
        %4581 = vmatpush1.bf16.xpose.msra.mxu0 0
        %4582 = vmatprep.subr.bf16.mxu0 0
        %4583 = vmatpush1.bf16.xpose.msra.mxu0 0
        %4584 = vmatprep.subr.bf16.mxu0 0
        %4585 = vmatpush1.bf16.xpose.msra.mxu0 0
        %4586 = vmatprep.subr.bf16.mxu0 0
        %4587 = vmatpush1.bf16.xpose.msra.mxu0 0
        %4588 = vmatprep.subr.bf16.mxu0 0
        %4589 = vmatpush1.bf16.xpose.msra.mxu0 0
        %4590 = vmatprep.subr.bf16.mxu0 0
        %4591 = vmatpush1.bf16.xpose.msra.mxu0 0
        %4592 = vmatprep.subr.bf16.mxu0 0
        %4593 = vmatpush1.bf16.xpose.msra.mxu0 0
        %4594 = vmatprep.subr.bf16.mxu0 0
        %4595 = vmatpush1.bf16.xpose.msra.mxu0 0
        %4596 = vmatprep.subr.bf16.mxu0 0
        %4597 = vmatpush1.bf16.xpose.msra.mxu0 0
        %4598 = vmatprep.subr.bf16.mxu0 0
        %4599 = vmatpush1.bf16.xpose.msra.mxu0 0
        %4600 = vmatprep.subr.bf16.mxu0 0
        %4601 = vmatpush1.bf16.xpose.msra.mxu0 0
        %4602 = vmatprep.mubr.bf16.mxu0 0
        %4603 = vmatmul.mubr.bf16.gmra.mrb[0].mxu0 %v4565
        %v4604 = vpop.f32.mrb[0].mxu0
        %v4605 = vadd.f32 0.0, %v4604
        %v4606 = vpop.f32.mrb[0].mxu0
        %v4607 = vpop.f32.mrb[0].mxu0
        %v4608 = vadd.f32 0.0, %v4607
        %v4609 = vpop.f32.mrb[0].mxu0
        %4610 = vdwg.mxu0
        %s4611 = scalar_lea.vmem [#allocation5], 192
        %v4612 = vld [vmem:[%s4611] sm:$0xff]
        %v4613 = vld [vmem:[%s4611 + $0x8] sm:$0xff]
        %v4614 = vld [vmem:[%s4611 + $0x10] sm:$0xff]
        %v4615 = vld [vmem:[%s4611 + $0x18] sm:$0xff]
        %v4616 = vld [vmem:[%s4611 + $0x20] sm:$0xff]
        %v4617 = vld [vmem:[%s4611 + $0x28] sm:$0xff]
        %v4618 = vld [vmem:[%s4611 + $0x30] sm:$0xff]
        %v4619 = vld [vmem:[%s4611 + $0x38] sm:$0xff]
        %v4620 = vadd.f32 %v4248, %v4612
        %v4621 = vadd.f32 %v4251, %v4613
        %v4622 = vadd.f32 %v4299, %v4614
        %v4623 = vadd.f32 %v4302, %v4615
        %v4624 = vadd.f32 %v4350, %v4616
        %v4625 = vadd.f32 %v4353, %v4617
        %v4626 = vadd.f32 %v4401, %v4618
        %v4627 = vadd.f32 %v4404, %v4619
        %v4628 = vadd.f32 %v4452, %v4612
        %v4629 = vadd.f32 %v4455, %v4613
        %v4630 = vadd.f32 %v4503, %v4614
        %v4631 = vadd.f32 %v4506, %v4615
        %v4632 = vadd.f32 %v4554, %v4616
        %v4633 = vadd.f32 %v4557, %v4617
        %v4634 = vadd.f32 %v4605, %v4618
        %v4635 = vadd.f32 %v4608, %v4619
        %v4636 = vsel %vm1240, %v4620, -inf
        %4637 = vmax.xlane.f32.xlu0 %v4636
        %v4638 = vpop.xlane.xlu0 %4637
        %v4639 = vsel %vm1240, %v4621, -inf
        %4640 = vmax.xlane.f32.xlu0 %v4639
        %v4641 = vpop.xlane.xlu0 %4640
        %v4642 = vsel %vm1240, %v4622, -inf
        %4643 = vmax.xlane.f32.xlu0 %v4642
        %v4644 = vpop.xlane.xlu0 %4643
        %v4645 = vsel %vm1240, %v4623, -inf
        %4646 = vmax.xlane.f32.xlu0 %v4645
        %v4647 = vpop.xlane.xlu0 %4646
        %v4648 = vsel %vm1240, %v4624, -inf
        %4649 = vmax.xlane.f32.xlu0 %v4648
        %v4650 = vpop.xlane.xlu0 %4649
        %v4651 = vsel %vm1240, %v4625, -inf
        %4652 = vmax.xlane.f32.xlu0 %v4651
        %v4653 = vpop.xlane.xlu0 %4652
        %v4654 = vsel %vm1240, %v4626, -inf
        %4655 = vmax.xlane.f32.xlu0 %v4654
        %v4656 = vpop.xlane.xlu0 %4655
        %v4657 = vsel %vm1240, %v4627, -inf
        %4658 = vmax.xlane.f32.xlu0 %v4657
        %v4659 = vpop.xlane.xlu0 %4658
        %v4660 = vsel %vm1240, %v4628, -inf
        %4661 = vmax.xlane.f32.xlu0 %v4660
        %v4662 = vpop.xlane.xlu0 %4661
        %v4663 = vsel %vm1240, %v4629, -inf
        %4664 = vmax.xlane.f32.xlu0 %v4663
        %v4665 = vpop.xlane.xlu0 %4664
        %v4666 = vsel %vm1240, %v4630, -inf
        %4667 = vmax.xlane.f32.xlu0 %v4666
        %v4668 = vpop.xlane.xlu0 %4667
        %v4669 = vsel %vm1240, %v4631, -inf
        %4670 = vmax.xlane.f32.xlu0 %v4669
        %v4671 = vpop.xlane.xlu0 %4670
        %v4672 = vsel %vm1240, %v4632, -inf
        %4673 = vmax.xlane.f32.xlu0 %v4672
        %v4674 = vpop.xlane.xlu0 %4673
        %v4675 = vsel %vm1240, %v4633, -inf
        %4676 = vmax.xlane.f32.xlu0 %v4675
        %v4677 = vpop.xlane.xlu0 %4676
        %v4678 = vsel %vm1240, %v4634, -inf
        %4679 = vmax.xlane.f32.xlu0 %v4678
        %v4680 = vpop.xlane.xlu0 %4679
        %v4681 = vsel %vm1240, %v4635, -inf
        %4682 = vmax.xlane.f32.xlu0 %v4681
        %v4683 = vpop.xlane.xlu0 %4682
        %v4684 = vsub.f32 %v4620, %v4638
        %v4685 = vsub.f32 %v4621, %v4641
        %v4686 = vsub.f32 %v4622, %v4644
        %v4687 = vsub.f32 %v4623, %v4647
        %v4688 = vsub.f32 %v4624, %v4650
        %v4689 = vsub.f32 %v4625, %v4653
        %v4690 = vsub.f32 %v4626, %v4656
        %v4691 = vsub.f32 %v4627, %v4659
        %v4692 = vsub.f32 %v4628, %v4662
        %v4693 = vsub.f32 %v4629, %v4665
        %v4694 = vsub.f32 %v4630, %v4668
        %v4695 = vsub.f32 %v4631, %v4671
        %v4696 = vsub.f32 %v4632, %v4674
        %v4697 = vsub.f32 %v4633, %v4677
        %v4698 = vsub.f32 %v4634, %v4680
        %v4699 = vsub.f32 %v4635, %v4683
        %v4700 = vmul.f32 %v4684, 1.442695
        %v4701 = vpow.pop %v4700
        %v4702 = vmul.f32 %v4685, 1.442695
        %v4703 = vpow.pop %v4702
        %v4704 = vmul.f32 %v4686, 1.442695
        %v4705 = vpow.pop %v4704
        %v4706 = vmul.f32 %v4687, 1.442695
        %v4707 = vpow.pop %v4706
        %v4708 = vmul.f32 %v4688, 1.442695
        %v4709 = vpow.pop %v4708
        %v4710 = vmul.f32 %v4689, 1.442695
        %v4711 = vpow.pop %v4710
        %v4712 = vmul.f32 %v4690, 1.442695
        %v4713 = vpow.pop %v4712
        %v4714 = vmul.f32 %v4691, 1.442695
        %v4715 = vpow.pop %v4714
        %v4716 = vmul.f32 %v4692, 1.442695
        %v4717 = vpow.pop %v4716
        %v4718 = vmul.f32 %v4693, 1.442695
        %v4719 = vpow.pop %v4718
        %v4720 = vmul.f32 %v4694, 1.442695
        %v4721 = vpow.pop %v4720
        %v4722 = vmul.f32 %v4695, 1.442695
        %v4723 = vpow.pop %v4722
        %v4724 = vmul.f32 %v4696, 1.442695
        %v4725 = vpow.pop %v4724
        %v4726 = vmul.f32 %v4697, 1.442695
        %v4727 = vpow.pop %v4726
        %v4728 = vmul.f32 %v4698, 1.442695
        %v4729 = vpow.pop %v4728
        %v4730 = vmul.f32 %v4699, 1.442695
        %v4731 = vpow.pop %v4730
        %v4732 = vsel %vm1240, %v4701, 0.0
        %4733 = vadd.xlane.f32.xlu0 %v4732
        %v4734 = vpop.xlane.xlu0 %4733
        %v4735 = vsel %vm1240, %v4703, 0.0
        %4736 = vadd.xlane.f32.xlu0 %v4735
        %v4737 = vpop.xlane.xlu0 %4736
        %v4738 = vsel %vm1240, %v4705, 0.0
        %4739 = vadd.xlane.f32.xlu0 %v4738
        %v4740 = vpop.xlane.xlu0 %4739
        %v4741 = vsel %vm1240, %v4707, 0.0
        %4742 = vadd.xlane.f32.xlu0 %v4741
        %v4743 = vpop.xlane.xlu0 %4742
        %v4744 = vsel %vm1240, %v4709, 0.0
        %4745 = vadd.xlane.f32.xlu0 %v4744
        %v4746 = vpop.xlane.xlu0 %4745
        %v4747 = vsel %vm1240, %v4711, 0.0
        %4748 = vadd.xlane.f32.xlu0 %v4747
        %v4749 = vpop.xlane.xlu0 %4748
        %v4750 = vsel %vm1240, %v4713, 0.0
        %4751 = vadd.xlane.f32.xlu0 %v4750
        %v4752 = vpop.xlane.xlu0 %4751
        %v4753 = vsel %vm1240, %v4715, 0.0
        %4754 = vadd.xlane.f32.xlu0 %v4753
        %v4755 = vpop.xlane.xlu0 %4754
        %v4756 = vsel %vm1240, %v4717, 0.0
        %4757 = vadd.xlane.f32.xlu0 %v4756
        %v4758 = vpop.xlane.xlu0 %4757
        %v4759 = vsel %vm1240, %v4719, 0.0
        %4760 = vadd.xlane.f32.xlu0 %v4759
        %v4761 = vpop.xlane.xlu0 %4760
        %v4762 = vsel %vm1240, %v4721, 0.0
        %4763 = vadd.xlane.f32.xlu0 %v4762
        %v4764 = vpop.xlane.xlu0 %4763
        %v4765 = vsel %vm1240, %v4723, 0.0
        %4766 = vadd.xlane.f32.xlu0 %v4765
        %v4767 = vpop.xlane.xlu0 %4766
        %v4768 = vsel %vm1240, %v4725, 0.0
        %4769 = vadd.xlane.f32.xlu0 %v4768
        %v4770 = vpop.xlane.xlu0 %4769
        %v4771 = vsel %vm1240, %v4727, 0.0
        %4772 = vadd.xlane.f32.xlu0 %v4771
        %v4773 = vpop.xlane.xlu0 %4772
        %v4774 = vsel %vm1240, %v4729, 0.0
        %4775 = vadd.xlane.f32.xlu0 %v4774
        %v4776 = vpop.xlane.xlu0 %4775
        %v4777 = vsel %vm1240, %v4731, 0.0
        %4778 = vadd.xlane.f32.xlu0 %v4777
        %v4779 = vpop.xlane.xlu0 %4778
        %v4780 = vrcp.pop %v4734
        %v4781 = vrcp.pop %v4737
        %v4782 = vrcp.pop %v4740
        %v4783 = vrcp.pop %v4743
        %v4784 = vrcp.pop %v4746
        %v4785 = vrcp.pop %v4749
        %v4786 = vrcp.pop %v4752
        %v4787 = vrcp.pop %v4755
        %v4788 = vrcp.pop %v4758
        %v4789 = vrcp.pop %v4761
        %v4790 = vrcp.pop %v4764
        %v4791 = vrcp.pop %v4767
        %v4792 = vrcp.pop %v4770
        %v4793 = vrcp.pop %v4773
        %v4794 = vrcp.pop %v4776
        %v4795 = vrcp.pop %v4779
        %v4796 = vmul.f32 %v4701, %v4780
        %v4797 = vmul.f32 %v4703, %v4781
        %v4798 = vmul.f32 %v4705, %v4782
        %v4799 = vmul.f32 %v4707, %v4783
        %v4800 = vmul.f32 %v4709, %v4784
        %v4801 = vmul.f32 %v4711, %v4785
        %v4802 = vmul.f32 %v4713, %v4786
        %v4803 = vmul.f32 %v4715, %v4787
        %v4804 = vmul.f32 %v4717, %v4788
        %v4805 = vmul.f32 %v4719, %v4789
        %v4806 = vmul.f32 %v4721, %v4790
        %v4807 = vmul.f32 %v4723, %v4791
        %v4808 = vmul.f32 %v4725, %v4792
        %v4809 = vmul.f32 %v4727, %v4793
        %v4810 = vmul.f32 %v4729, %v4794
        %v4811 = vmul.f32 %v4731, %v4795
        %v4812 = vpack.c.bf16 %v4797, %v4796
        %v4813 = vpack.c.bf16 %v4799, %v4798
        %v4814 = vpack.c.bf16 %v4801, %v4800
        %v4815 = vpack.c.bf16 %v4803, %v4802
        %v4816 = vpack.c.bf16 %v4805, %v4804
        %v4817 = vpack.c.bf16 %v4807, %v4806
        %v4818 = vpack.c.bf16 %v4809, %v4808
        %v4819 = vpack.c.bf16 %v4811, %v4810
        %4820 = vrot.lane.b32.xlu0 %v831, 104
        %v4821 = vpop.permute.xlu0 %4820
        %v4824 = vsel %vm1240, %v4812, 0
        %4826 = vmatprep.subr.bf16.mxu0 0
        %4827 = vmatpush1.bf16.msra.mxu0 %v4821
        %4828 = vmatprep.subr.bf16.mxu0 0
        %4829 = vmatpush1.bf16.msra.mxu0 0
        %4830 = vmatprep.subr.bf16.mxu0 0
        %4831 = vmatpush1.bf16.msra.mxu0 0
        %4832 = vmatprep.subr.bf16.mxu0 0
        %4833 = vmatpush1.bf16.msra.mxu0 0
        %4834 = vmatprep.subr.bf16.mxu0 0
        %4835 = vmatpush1.bf16.msra.mxu0 0
        %4836 = vmatprep.subr.bf16.mxu0 0
        %4837 = vmatpush1.bf16.msra.mxu0 0
        %4838 = vmatprep.subr.bf16.mxu0 0
        %4839 = vmatpush1.bf16.msra.mxu0 0
        %4840 = vmatprep.subr.bf16.mxu0 0
        %4841 = vmatpush1.bf16.msra.mxu0 0
        %4842 = vmatprep.subr.bf16.mxu0 0
        %4843 = vmatpush1.bf16.msra.mxu0 0
        %4844 = vmatprep.subr.bf16.mxu0 0
        %4845 = vmatpush1.bf16.msra.mxu0 0
        %4846 = vmatprep.subr.bf16.mxu0 0
        %4847 = vmatpush1.bf16.msra.mxu0 0
        %4848 = vmatprep.subr.bf16.mxu0 0
        %4849 = vmatpush1.bf16.msra.mxu0 0
        %4850 = vmatprep.subr.bf16.mxu0 0
        %4851 = vmatpush1.bf16.msra.mxu0 0
        %4852 = vmatprep.subr.bf16.mxu0 0
        %4853 = vmatpush1.bf16.msra.mxu0 0
        %4854 = vmatprep.subr.bf16.mxu0 0
        %4855 = vmatpush1.bf16.msra.mxu0 0
        %4856 = vmatprep.subr.bf16.mxu0 0
        %4857 = vmatpush1.bf16.msra.mxu0 0
        %4858 = vmatprep.mubr.bf16.mxu0 0
        %4859 = vmatmul.mubr.bf16.gmra.mrb[0].mxu0 %v4824
        %v4860 = vpop.f32.mrb[0].mxu0
        %v4861 = vadd.f32 0.0, %v4860
        %v4862 = vpop.f32.mrb[0].mxu0
        %v4863 = vpop.f32.mrb[0].mxu0
        %v4864 = vadd.f32 0.0, %v4863
        %v4865 = vpop.f32.mrb[0].mxu0
        %4866 = vdwg.mxu0
        %4867 = vrot.lane.b32.xlu0 %v832, 104
        %v4868 = vpop.permute.xlu0 %4867
        %v4871 = vsel %vm1240, %v4813, 0
        %4873 = vmatprep.subr.bf16.mxu0 0
        %4874 = vmatpush1.bf16.msra.mxu0 %v4868
        %4875 = vmatprep.subr.bf16.mxu0 0
        %4876 = vmatpush1.bf16.msra.mxu0 0
        %4877 = vmatprep.subr.bf16.mxu0 0
        %4878 = vmatpush1.bf16.msra.mxu0 0
        %4879 = vmatprep.subr.bf16.mxu0 0
        %4880 = vmatpush1.bf16.msra.mxu0 0
        %4881 = vmatprep.subr.bf16.mxu0 0
        %4882 = vmatpush1.bf16.msra.mxu0 0
        %4883 = vmatprep.subr.bf16.mxu0 0
        %4884 = vmatpush1.bf16.msra.mxu0 0
        %4885 = vmatprep.subr.bf16.mxu0 0
        %4886 = vmatpush1.bf16.msra.mxu0 0
        %4887 = vmatprep.subr.bf16.mxu0 0
        %4888 = vmatpush1.bf16.msra.mxu0 0
        %4889 = vmatprep.subr.bf16.mxu0 0
        %4890 = vmatpush1.bf16.msra.mxu0 0
        %4891 = vmatprep.subr.bf16.mxu0 0
        %4892 = vmatpush1.bf16.msra.mxu0 0
        %4893 = vmatprep.subr.bf16.mxu0 0
        %4894 = vmatpush1.bf16.msra.mxu0 0
        %4895 = vmatprep.subr.bf16.mxu0 0
        %4896 = vmatpush1.bf16.msra.mxu0 0
        %4897 = vmatprep.subr.bf16.mxu0 0
        %4898 = vmatpush1.bf16.msra.mxu0 0
        %4899 = vmatprep.subr.bf16.mxu0 0
        %4900 = vmatpush1.bf16.msra.mxu0 0
        %4901 = vmatprep.subr.bf16.mxu0 0
        %4902 = vmatpush1.bf16.msra.mxu0 0
        %4903 = vmatprep.subr.bf16.mxu0 0
        %4904 = vmatpush1.bf16.msra.mxu0 0
        %4905 = vmatprep.mubr.bf16.mxu0 0
        %4906 = vmatmul.mubr.bf16.gmra.mrb[0].mxu0 %v4871
        %v4907 = vpop.f32.mrb[0].mxu0
        %v4908 = vadd.f32 0.0, %v4907
        %v4909 = vpop.f32.mrb[0].mxu0
        %v4910 = vpop.f32.mrb[0].mxu0
        %v4911 = vadd.f32 0.0, %v4910
        %v4912 = vpop.f32.mrb[0].mxu0
        %4913 = vdwg.mxu0
        %4914 = vrot.lane.b32.xlu0 %v833, 104
        %v4915 = vpop.permute.xlu0 %4914
        %v4918 = vsel %vm1240, %v4814, 0
        %4920 = vmatprep.subr.bf16.mxu0 0
        %4921 = vmatpush1.bf16.msra.mxu0 %v4915
        %4922 = vmatprep.subr.bf16.mxu0 0
        %4923 = vmatpush1.bf16.msra.mxu0 0
        %4924 = vmatprep.subr.bf16.mxu0 0
        %4925 = vmatpush1.bf16.msra.mxu0 0
        %4926 = vmatprep.subr.bf16.mxu0 0
        %4927 = vmatpush1.bf16.msra.mxu0 0
        %4928 = vmatprep.subr.bf16.mxu0 0
        %4929 = vmatpush1.bf16.msra.mxu0 0
        %4930 = vmatprep.subr.bf16.mxu0 0
        %4931 = vmatpush1.bf16.msra.mxu0 0
        %4932 = vmatprep.subr.bf16.mxu0 0
        %4933 = vmatpush1.bf16.msra.mxu0 0
        %4934 = vmatprep.subr.bf16.mxu0 0
        %4935 = vmatpush1.bf16.msra.mxu0 0
        %4936 = vmatprep.subr.bf16.mxu0 0
        %4937 = vmatpush1.bf16.msra.mxu0 0
        %4938 = vmatprep.subr.bf16.mxu0 0
        %4939 = vmatpush1.bf16.msra.mxu0 0
        %4940 = vmatprep.subr.bf16.mxu0 0
        %4941 = vmatpush1.bf16.msra.mxu0 0
        %4942 = vmatprep.subr.bf16.mxu0 0
        %4943 = vmatpush1.bf16.msra.mxu0 0
        %4944 = vmatprep.subr.bf16.mxu0 0
        %4945 = vmatpush1.bf16.msra.mxu0 0
        %4946 = vmatprep.subr.bf16.mxu0 0
        %4947 = vmatpush1.bf16.msra.mxu0 0
        %4948 = vmatprep.subr.bf16.mxu0 0
        %4949 = vmatpush1.bf16.msra.mxu0 0
        %4950 = vmatprep.subr.bf16.mxu0 0
        %4951 = vmatpush1.bf16.msra.mxu0 0
        %4952 = vmatprep.mubr.bf16.mxu0 0
        %4953 = vmatmul.mubr.bf16.gmra.mrb[0].mxu0 %v4918
        %v4954 = vpop.f32.mrb[0].mxu0
        %v4955 = vadd.f32 0.0, %v4954
        %v4956 = vpop.f32.mrb[0].mxu0
        %v4957 = vpop.f32.mrb[0].mxu0
        %v4958 = vadd.f32 0.0, %v4957
        %v4959 = vpop.f32.mrb[0].mxu0
        %4960 = vdwg.mxu0
        %4961 = vrot.lane.b32.xlu0 %v834, 104
        %v4962 = vpop.permute.xlu0 %4961
        %v4965 = vsel %vm1240, %v4815, 0
        %4967 = vmatprep.subr.bf16.mxu0 0
        %4968 = vmatpush1.bf16.msra.mxu0 %v4962
        %4969 = vmatprep.subr.bf16.mxu0 0
        %4970 = vmatpush1.bf16.msra.mxu0 0
        %4971 = vmatprep.subr.bf16.mxu0 0
        %4972 = vmatpush1.bf16.msra.mxu0 0
        %4973 = vmatprep.subr.bf16.mxu0 0
        %4974 = vmatpush1.bf16.msra.mxu0 0
        %4975 = vmatprep.subr.bf16.mxu0 0
        %4976 = vmatpush1.bf16.msra.mxu0 0
        %4977 = vmatprep.subr.bf16.mxu0 0
        %4978 = vmatpush1.bf16.msra.mxu0 0
        %4979 = vmatprep.subr.bf16.mxu0 0
        %4980 = vmatpush1.bf16.msra.mxu0 0
        %4981 = vmatprep.subr.bf16.mxu0 0
        %4982 = vmatpush1.bf16.msra.mxu0 0
        %4983 = vmatprep.subr.bf16.mxu0 0
        %4984 = vmatpush1.bf16.msra.mxu0 0
        %4985 = vmatprep.subr.bf16.mxu0 0
        %4986 = vmatpush1.bf16.msra.mxu0 0
        %4987 = vmatprep.subr.bf16.mxu0 0
        %4988 = vmatpush1.bf16.msra.mxu0 0
        %4989 = vmatprep.subr.bf16.mxu0 0
        %4990 = vmatpush1.bf16.msra.mxu0 0
        %4991 = vmatprep.subr.bf16.mxu0 0
        %4992 = vmatpush1.bf16.msra.mxu0 0
        %4993 = vmatprep.subr.bf16.mxu0 0
        %4994 = vmatpush1.bf16.msra.mxu0 0
        %4995 = vmatprep.subr.bf16.mxu0 0
        %4996 = vmatpush1.bf16.msra.mxu0 0
        %4997 = vmatprep.subr.bf16.mxu0 0
        %4998 = vmatpush1.bf16.msra.mxu0 0
        %4999 = vmatprep.mubr.bf16.mxu0 0
        %5000 = vmatmul.mubr.bf16.gmra.mrb[0].mxu0 %v4965
        %v5001 = vpop.f32.mrb[0].mxu0
        %v5002 = vadd.f32 0.0, %v5001
        %v5003 = vpop.f32.mrb[0].mxu0
        %v5004 = vpop.f32.mrb[0].mxu0
        %v5005 = vadd.f32 0.0, %v5004
        %v5006 = vpop.f32.mrb[0].mxu0
        %5007 = vdwg.mxu0
        %5008 = vrot.lane.b32.xlu0 %v835, 104
        %v5009 = vpop.permute.xlu0 %5008
        %v5012 = vsel %vm1240, %v4816, 0
        %5014 = vmatprep.subr.bf16.mxu0 0
        %5015 = vmatpush1.bf16.msra.mxu0 %v5009
        %5016 = vmatprep.subr.bf16.mxu0 0
        %5017 = vmatpush1.bf16.msra.mxu0 0
        %5018 = vmatprep.subr.bf16.mxu0 0
        %5019 = vmatpush1.bf16.msra.mxu0 0
        %5020 = vmatprep.subr.bf16.mxu0 0
        %5021 = vmatpush1.bf16.msra.mxu0 0
        %5022 = vmatprep.subr.bf16.mxu0 0
        %5023 = vmatpush1.bf16.msra.mxu0 0
        %5024 = vmatprep.subr.bf16.mxu0 0
        %5025 = vmatpush1.bf16.msra.mxu0 0
        %5026 = vmatprep.subr.bf16.mxu0 0
        %5027 = vmatpush1.bf16.msra.mxu0 0
        %5028 = vmatprep.subr.bf16.mxu0 0
        %5029 = vmatpush1.bf16.msra.mxu0 0
        %5030 = vmatprep.subr.bf16.mxu0 0
        %5031 = vmatpush1.bf16.msra.mxu0 0
        %5032 = vmatprep.subr.bf16.mxu0 0
        %5033 = vmatpush1.bf16.msra.mxu0 0
        %5034 = vmatprep.subr.bf16.mxu0 0
        %5035 = vmatpush1.bf16.msra.mxu0 0
        %5036 = vmatprep.subr.bf16.mxu0 0
        %5037 = vmatpush1.bf16.msra.mxu0 0
        %5038 = vmatprep.subr.bf16.mxu0 0
        %5039 = vmatpush1.bf16.msra.mxu0 0
        %5040 = vmatprep.subr.bf16.mxu0 0
        %5041 = vmatpush1.bf16.msra.mxu0 0
        %5042 = vmatprep.subr.bf16.mxu0 0
        %5043 = vmatpush1.bf16.msra.mxu0 0
        %5044 = vmatprep.subr.bf16.mxu0 0
        %5045 = vmatpush1.bf16.msra.mxu0 0
        %5046 = vmatprep.mubr.bf16.mxu0 0
        %5047 = vmatmul.mubr.bf16.gmra.mrb[0].mxu0 %v5012
        %v5048 = vpop.f32.mrb[0].mxu0
        %v5049 = vadd.f32 0.0, %v5048
        %v5050 = vpop.f32.mrb[0].mxu0
        %v5051 = vpop.f32.mrb[0].mxu0
        %v5052 = vadd.f32 0.0, %v5051
        %v5053 = vpop.f32.mrb[0].mxu0
        %5054 = vdwg.mxu0
        %5055 = vrot.lane.b32.xlu0 %v836, 104
        %v5056 = vpop.permute.xlu0 %5055
        %v5059 = vsel %vm1240, %v4817, 0
        %5061 = vmatprep.subr.bf16.mxu0 0
        %5062 = vmatpush1.bf16.msra.mxu0 %v5056
        %5063 = vmatprep.subr.bf16.mxu0 0
        %5064 = vmatpush1.bf16.msra.mxu0 0
        %5065 = vmatprep.subr.bf16.mxu0 0
        %5066 = vmatpush1.bf16.msra.mxu0 0
        %5067 = vmatprep.subr.bf16.mxu0 0
        %5068 = vmatpush1.bf16.msra.mxu0 0
        %5069 = vmatprep.subr.bf16.mxu0 0
        %5070 = vmatpush1.bf16.msra.mxu0 0
        %5071 = vmatprep.subr.bf16.mxu0 0
        %5072 = vmatpush1.bf16.msra.mxu0 0
        %5073 = vmatprep.subr.bf16.mxu0 0
        %5074 = vmatpush1.bf16.msra.mxu0 0
        %5075 = vmatprep.subr.bf16.mxu0 0
        %5076 = vmatpush1.bf16.msra.mxu0 0
        %5077 = vmatprep.subr.bf16.mxu0 0
        %5078 = vmatpush1.bf16.msra.mxu0 0
        %5079 = vmatprep.subr.bf16.mxu0 0
        %5080 = vmatpush1.bf16.msra.mxu0 0
        %5081 = vmatprep.subr.bf16.mxu0 0
        %5082 = vmatpush1.bf16.msra.mxu0 0
        %5083 = vmatprep.subr.bf16.mxu0 0
        %5084 = vmatpush1.bf16.msra.mxu0 0
        %5085 = vmatprep.subr.bf16.mxu0 0
        %5086 = vmatpush1.bf16.msra.mxu0 0
        %5087 = vmatprep.subr.bf16.mxu0 0
        %5088 = vmatpush1.bf16.msra.mxu0 0
        %5089 = vmatprep.subr.bf16.mxu0 0
        %5090 = vmatpush1.bf16.msra.mxu0 0
        %5091 = vmatprep.subr.bf16.mxu0 0
        %5092 = vmatpush1.bf16.msra.mxu0 0
        %5093 = vmatprep.mubr.bf16.mxu0 0
        %5094 = vmatmul.mubr.bf16.gmra.mrb[0].mxu0 %v5059
        %v5095 = vpop.f32.mrb[0].mxu0
        %v5096 = vadd.f32 0.0, %v5095
        %v5097 = vpop.f32.mrb[0].mxu0
        %v5098 = vpop.f32.mrb[0].mxu0
        %v5099 = vadd.f32 0.0, %v5098
        %v5100 = vpop.f32.mrb[0].mxu0
        %5101 = vdwg.mxu0
        %5102 = vrot.lane.b32.xlu0 %v837, 104
        %v5103 = vpop.permute.xlu0 %5102
        %v5106 = vsel %vm1240, %v4818, 0
        %5108 = vmatprep.subr.bf16.mxu0 0
        %5109 = vmatpush1.bf16.msra.mxu0 %v5103
        %5110 = vmatprep.subr.bf16.mxu0 0
        %5111 = vmatpush1.bf16.msra.mxu0 0
        %5112 = vmatprep.subr.bf16.mxu0 0
        %5113 = vmatpush1.bf16.msra.mxu0 0
        %5114 = vmatprep.subr.bf16.mxu0 0
        %5115 = vmatpush1.bf16.msra.mxu0 0
        %5116 = vmatprep.subr.bf16.mxu0 0
        %5117 = vmatpush1.bf16.msra.mxu0 0
        %5118 = vmatprep.subr.bf16.mxu0 0
        %5119 = vmatpush1.bf16.msra.mxu0 0
        %5120 = vmatprep.subr.bf16.mxu0 0
        %5121 = vmatpush1.bf16.msra.mxu0 0
        %5122 = vmatprep.subr.bf16.mxu0 0
        %5123 = vmatpush1.bf16.msra.mxu0 0
        %5124 = vmatprep.subr.bf16.mxu0 0
        %5125 = vmatpush1.bf16.msra.mxu0 0
        %5126 = vmatprep.subr.bf16.mxu0 0
        %5127 = vmatpush1.bf16.msra.mxu0 0
        %5128 = vmatprep.subr.bf16.mxu0 0
        %5129 = vmatpush1.bf16.msra.mxu0 0
        %5130 = vmatprep.subr.bf16.mxu0 0
        %5131 = vmatpush1.bf16.msra.mxu0 0
        %5132 = vmatprep.subr.bf16.mxu0 0
        %5133 = vmatpush1.bf16.msra.mxu0 0
        %5134 = vmatprep.subr.bf16.mxu0 0
        %5135 = vmatpush1.bf16.msra.mxu0 0
        %5136 = vmatprep.subr.bf16.mxu0 0
        %5137 = vmatpush1.bf16.msra.mxu0 0
        %5138 = vmatprep.subr.bf16.mxu0 0
        %5139 = vmatpush1.bf16.msra.mxu0 0
        %5140 = vmatprep.mubr.bf16.mxu0 0
        %5141 = vmatmul.mubr.bf16.gmra.mrb[0].mxu0 %v5106
        %v5142 = vpop.f32.mrb[0].mxu0
        %v5143 = vadd.f32 0.0, %v5142
        %v5144 = vpop.f32.mrb[0].mxu0
        %v5145 = vpop.f32.mrb[0].mxu0
        %v5146 = vadd.f32 0.0, %v5145
        %v5147 = vpop.f32.mrb[0].mxu0
        %5148 = vdwg.mxu0
        %5149 = vrot.lane.b32.xlu0 %v838, 104
        %v5150 = vpop.permute.xlu0 %5149
        %v5153 = vsel %vm1240, %v4819, 0
        %5155 = vmatprep.subr.bf16.mxu0 0
        %5156 = vmatpush1.bf16.msra.mxu0 %v5150
        %5157 = vmatprep.subr.bf16.mxu0 0
        %5158 = vmatpush1.bf16.msra.mxu0 0
        %5159 = vmatprep.subr.bf16.mxu0 0
        %5160 = vmatpush1.bf16.msra.mxu0 0
        %5161 = vmatprep.subr.bf16.mxu0 0
        %5162 = vmatpush1.bf16.msra.mxu0 0
        %5163 = vmatprep.subr.bf16.mxu0 0
        %5164 = vmatpush1.bf16.msra.mxu0 0
        %5165 = vmatprep.subr.bf16.mxu0 0
        %5166 = vmatpush1.bf16.msra.mxu0 0
        %5167 = vmatprep.subr.bf16.mxu0 0
        %5168 = vmatpush1.bf16.msra.mxu0 0
        %5169 = vmatprep.subr.bf16.mxu0 0
        %5170 = vmatpush1.bf16.msra.mxu0 0
        %5171 = vmatprep.subr.bf16.mxu0 0
        %5172 = vmatpush1.bf16.msra.mxu0 0
        %5173 = vmatprep.subr.bf16.mxu0 0
        %5174 = vmatpush1.bf16.msra.mxu0 0
        %5175 = vmatprep.subr.bf16.mxu0 0
        %5176 = vmatpush1.bf16.msra.mxu0 0
        %5177 = vmatprep.subr.bf16.mxu0 0
        %5178 = vmatpush1.bf16.msra.mxu0 0
        %5179 = vmatprep.subr.bf16.mxu0 0
        %5180 = vmatpush1.bf16.msra.mxu0 0
        %5181 = vmatprep.subr.bf16.mxu0 0
        %5182 = vmatpush1.bf16.msra.mxu0 0
        %5183 = vmatprep.subr.bf16.mxu0 0
        %5184 = vmatpush1.bf16.msra.mxu0 0
        %5185 = vmatprep.subr.bf16.mxu0 0
        %5186 = vmatpush1.bf16.msra.mxu0 0
        %5187 = vmatprep.mubr.bf16.mxu0 0
        %5188 = vmatmul.mubr.bf16.gmra.mrb[0].mxu0 %v5153
        %v5189 = vpop.f32.mrb[0].mxu0
        %v5190 = vadd.f32 0.0, %v5189
        %v5191 = vpop.f32.mrb[0].mxu0
        %v5192 = vpop.f32.mrb[0].mxu0
        %v5193 = vadd.f32 0.0, %v5192
        %v5194 = vpop.f32.mrb[0].mxu0
        %5195 = vdwg.mxu0
        %v5196 = vpack.c.bf16 %v4864, %v4861
        %v5197 = vpack.c.bf16 %v4911, %v4908
        %v5198 = vpack.c.bf16 %v4958, %v4955
        %v5199 = vpack.c.bf16 %v5005, %v5002
        %v5200 = vpack.c.bf16 %v5052, %v5049
        %v5201 = vpack.c.bf16 %v5099, %v5096
        %v5202 = vpack.c.bf16 %v5146, %v5143
        %v5203 = vpack.c.bf16 %v5193, %v5190
        %v5204 = vld [vmem:[#allocation10 + $0xc] sm:$0xf]
        %v5206 = vsel %vm839, %v5196, 0
        %v5209 = vsel %vm839, %v5197, 0
        %v5212 = vsel %vm839, %v5198, 0
        %v5215 = vsel %vm839, %v5199, 0
        %v5218 = vsel %vm839, %v5200, 0
        %v5221 = vsel %vm839, %v5201, 0
        %v5224 = vsel %vm839, %v5202, 0
        %v5227 = vsel %vm839, %v5203, 0
        %v5230 = vsel %vm2836, %v5204, 0
        %5232 = vmatprep.subr.bf16.mxu0 0
        %5233 = vmatpush1.bf16.msra.mxu0 %v5230
        %5234 = vmatprep.subr.bf16.mxu0 0
        %5235 = vmatpush1.bf16.msra.mxu0 0
        %5236 = vmatprep.subr.bf16.mxu0 0
        %5237 = vmatpush1.bf16.msra.mxu0 0
        %5238 = vmatprep.subr.bf16.mxu0 0
        %5239 = vmatpush1.bf16.msra.mxu0 0
        %5240 = vmatprep.subr.bf16.mxu0 0
        %5241 = vmatpush1.bf16.msra.mxu0 0
        %5242 = vmatprep.subr.bf16.mxu0 0
        %5243 = vmatpush1.bf16.msra.mxu0 0
        %5244 = vmatprep.subr.bf16.mxu0 0
        %5245 = vmatpush1.bf16.msra.mxu0 0
        %5246 = vmatprep.subr.bf16.mxu0 0
        %5247 = vmatpush1.bf16.msra.mxu0 0
        %5248 = vmatprep.subr.bf16.mxu0 0
        %5249 = vmatpush1.bf16.msra.mxu0 0
        %5250 = vmatprep.subr.bf16.mxu0 0
        %5251 = vmatpush1.bf16.msra.mxu0 0
        %5252 = vmatprep.subr.bf16.mxu0 0
        %5253 = vmatpush1.bf16.msra.mxu0 0
        %5254 = vmatprep.subr.bf16.mxu0 0
        %5255 = vmatpush1.bf16.msra.mxu0 0
        %5256 = vmatprep.subr.bf16.mxu0 0
        %5257 = vmatpush1.bf16.msra.mxu0 0
        %5258 = vmatprep.subr.bf16.mxu0 0
        %5259 = vmatpush1.bf16.msra.mxu0 0
        %5260 = vmatprep.subr.bf16.mxu0 0
        %5261 = vmatpush1.bf16.msra.mxu0 0
        %5262 = vmatprep.subr.bf16.mxu0 0
        %5263 = vmatpush1.bf16.msra.mxu0 0
        %5264 = vmatprep.mubr.bf16.mxu0 0
        %5265 = vmatmul.mubr.bf16.gmra.mrb[0].mxu0 %v5206
        %v5266 = vpop.f32.mrb[0].mxu0
        %v5267 = vadd.f32 0.0, %v5266
        %v5268 = vpop.f32.mrb[0].mxu0
        %v5269 = vpop.f32.mrb[0].mxu0
        %v5270 = vadd.f32 0.0, %v5269
        %v5271 = vpop.f32.mrb[0].mxu0
        %5272 = vmatprep.mubr.bf16.mxu0 0
        %5273 = vmatmul.mubr.bf16.gmra.mrb[0].mxu0 %v5209
        %v5274 = vpop.f32.mrb[0].mxu0
        %v5275 = vadd.f32 0.0, %v5274
        %v5276 = vpop.f32.mrb[0].mxu0
        %v5277 = vpop.f32.mrb[0].mxu0
        %v5278 = vadd.f32 0.0, %v5277
        %v5279 = vpop.f32.mrb[0].mxu0
        %5280 = vmatprep.mubr.bf16.mxu0 0
        %5281 = vmatmul.mubr.bf16.gmra.mrb[0].mxu0 %v5212
        %v5282 = vpop.f32.mrb[0].mxu0
        %v5283 = vadd.f32 0.0, %v5282
        %v5284 = vpop.f32.mrb[0].mxu0
        %v5285 = vpop.f32.mrb[0].mxu0
        %v5286 = vadd.f32 0.0, %v5285
        %v5287 = vpop.f32.mrb[0].mxu0
        %5288 = vmatprep.mubr.bf16.mxu0 0
        %5289 = vmatmul.mubr.bf16.gmra.mrb[0].mxu0 %v5215
        %v5290 = vpop.f32.mrb[0].mxu0
        %v5291 = vadd.f32 0.0, %v5290
        %v5292 = vpop.f32.mrb[0].mxu0
        %v5293 = vpop.f32.mrb[0].mxu0
        %v5294 = vadd.f32 0.0, %v5293
        %v5295 = vpop.f32.mrb[0].mxu0
        %5296 = vmatprep.mubr.bf16.mxu0 0
        %5297 = vmatmul.mubr.bf16.gmra.mrb[0].mxu0 %v5218
        %v5298 = vpop.f32.mrb[0].mxu0
        %v5299 = vadd.f32 0.0, %v5298
        %v5300 = vpop.f32.mrb[0].mxu0
        %v5301 = vpop.f32.mrb[0].mxu0
        %v5302 = vadd.f32 0.0, %v5301
        %v5303 = vpop.f32.mrb[0].mxu0
        %5304 = vmatprep.mubr.bf16.mxu0 0
        %5305 = vmatmul.mubr.bf16.gmra.mrb[0].mxu0 %v5221
        %v5306 = vpop.f32.mrb[0].mxu0
        %v5307 = vadd.f32 0.0, %v5306
        %v5308 = vpop.f32.mrb[0].mxu0
        %v5309 = vpop.f32.mrb[0].mxu0
        %v5310 = vadd.f32 0.0, %v5309
        %v5311 = vpop.f32.mrb[0].mxu0
        %5312 = vmatprep.mubr.bf16.mxu0 0
        %5313 = vmatmul.mubr.bf16.gmra.mrb[0].mxu0 %v5224
        %v5314 = vpop.f32.mrb[0].mxu0
        %v5315 = vadd.f32 0.0, %v5314
        %v5316 = vpop.f32.mrb[0].mxu0
        %v5317 = vpop.f32.mrb[0].mxu0
        %v5318 = vadd.f32 0.0, %v5317
        %v5319 = vpop.f32.mrb[0].mxu0
        %5320 = vmatprep.mubr.bf16.mxu0 0
        %5321 = vmatmul.mubr.bf16.gmra.mrb[0].mxu0 %v5227
        %v5322 = vpop.f32.mrb[0].mxu0
        %v5323 = vadd.f32 0.0, %v5322
        %v5324 = vpop.f32.mrb[0].mxu0
        %v5325 = vpop.f32.mrb[0].mxu0
        %v5326 = vadd.f32 0.0, %v5325
        %v5327 = vpop.f32.mrb[0].mxu0
        %5328 = vdwg.mxu0
        %v5329 = vadd.f32 %v4187, %v5267
        %v5330 = vadd.f32 %v4188, %v5270
        %v5331 = vadd.f32 %v4189, %v5275
        %v5332 = vadd.f32 %v4190, %v5278
        %v5333 = vadd.f32 %v4191, %v5283
        %v5334 = vadd.f32 %v4192, %v5286
        %v5335 = vadd.f32 %v4193, %v5291
        %v5336 = vadd.f32 %v4194, %v5294
        %v5337 = vadd.f32 %v4195, %v5299
        %v5338 = vadd.f32 %v4196, %v5302
        %v5339 = vadd.f32 %v4197, %v5307
        %v5340 = vadd.f32 %v4198, %v5310
        %v5341 = vadd.f32 %v4199, %v5315
        %v5342 = vadd.f32 %v4200, %v5318
        %v5343 = vadd.f32 %v4201, %v5323
        %v5344 = vadd.f32 %v4202, %v5326
        %v5345 = vld [vmem:[%s8] sm:$0x1]
        %v5347 = vlaneseq
        %v5348 = vshrl.u32 %v5347, 7
        %v5349 = vsub.s32 0, %v5348
        %v5350 = vrot.slane %v5345, %v5349
        %v5352 = vadd.f32 %v5329, %v5350
        %v5353 = vadd.f32 %v5330, %v5350
        %v5354 = vadd.f32 %v5331, %v5350
        %v5355 = vadd.f32 %v5332, %v5350
        %v5356 = vadd.f32 %v5333, %v5350
        %v5357 = vadd.f32 %v5334, %v5350
        %v5358 = vadd.f32 %v5335, %v5350
        %v5359 = vadd.f32 %v5336, %v5350
        %v5360 = vadd.f32 %v5337, %v5350
        %v5361 = vadd.f32 %v5338, %v5350
        %v5362 = vadd.f32 %v5339, %v5350
        %v5363 = vadd.f32 %v5340, %v5350
        %v5364 = vadd.f32 %v5341, %v5350
        %v5365 = vadd.f32 %v5342, %v5350
        %v5366 = vadd.f32 %v5343, %v5350
        %v5367 = vadd.f32 %v5344, %v5350
        %5368 = vst.msk [vmem:[%s409] sm:$0xff] %vm460, %v5352
        %5369 = vst.msk [vmem:[%s409 + $0x8] sm:$0xff] %vm460, %v5353
        %5370 = vst.msk [vmem:[%s409 + $0x10] sm:$0xff] %vm460, %v5354
        %5371 = vst.msk [vmem:[%s409 + $0x18] sm:$0xff] %vm460, %v5355
        %5372 = vst.msk [vmem:[%s409 + $0x20] sm:$0xff] %vm460, %v5356
        %5373 = vst.msk [vmem:[%s409 + $0x28] sm:$0xff] %vm460, %v5357
        %5374 = vst.msk [vmem:[%s409 + $0x30] sm:$0xff] %vm460, %v5358
        %5375 = vst.msk [vmem:[%s409 + $0x38] sm:$0xff] %vm460, %v5359
        %5376 = vst.msk [vmem:[%s409 + $0x40] sm:$0xff] %vm460, %v5360
        %5377 = vst.msk [vmem:[%s409 + $0x48] sm:$0xff] %vm460, %v5361
        %5378 = vst.msk [vmem:[%s409 + $0x50] sm:$0xff] %vm460, %v5362
        %5379 = vst.msk [vmem:[%s409 + $0x58] sm:$0xff] %vm460, %v5363
        %5380 = vst.msk [vmem:[%s409 + $0x60] sm:$0xff] %vm460, %v5364
        %5381 = vst.msk [vmem:[%s409 + $0x68] sm:$0xff] %vm460, %v5365
        %5382 = vst.msk [vmem:[%s409 + $0x70] sm:$0xff] %vm460, %v5366
        %5383 = vst.msk [vmem:[%s409 + $0x78] sm:$0xff] %vm460, %v5367
        %s5384 = sand.u32 %s230, 1
        %s5385 = scalar_lea.sflag [#allocation4], %s5384
        %s5386 = sand.u32 %s230, 1
        %s5387 = smul.addr %s5386, 128
        %s5388 = scalar_lea.vmem [#allocation11], %s5387
        // Predicated region
        $region77: #{tpu_custom_call.1} parent=55 // pred_check
          %p5389 = pneg %p240
        $region78: #{tpu_custom_call.1} parent=55 // pred_check_branch
          %5391 = sbr.rel (%p5389) target = $region80
        $region79: #{tpu_custom_call.1} parent=55 // pred_region
          %s5392 = smul.u32 8, %s28
          %s5394 = ssub.s32 2048, 2048
          %5395 = vsyncadd %s5385, %s5394
          %s5396 = smul.addr %s5392, 2
          %s5397 = smul.addr %s5396, 128
          %s5398 = scalar_lea.hbm %s9, %s5397
          %s5399 = sshll.u32 %s5388, 4
          %s5400 = int_to_ptr.vmem [resolvable:$true] %s5399
          %5405 = dma.vmem_to_hbm [thread:$0]  %s5400, 2048, %s5398, %s5385, 128, 128, 8
        $region80: #{tpu_custom_call.1} parent=55 // pred_fallthru
          _
      $region56: #{tpu_custom_call.1} parent=5 // pred_fallthru
        _
      %p5406 = scmp.le.s32.totalorder 2, %s23
      // Predicated region
      $region81: #{tpu_custom_call.1} parent=5 // pred_check
        %p5407 = pneg %p5406
      $region82: #{tpu_custom_call.1} parent=5 // pred_check_branch
        %5409 = sbr.rel (%p5407) target = $region84
      $region83: #{tpu_custom_call.1} parent=5 // pred_region
        %s5410 = ssub.s32 %s23, 2
        // Predicated region
        $region85: #{tpu_custom_call.1} parent=83 // pred_check
          %p5411 = pneg %p246
        $region86: #{tpu_custom_call.1} parent=83 // pred_check_branch
          %5413 = sbr.rel (%p5411) target = $region88
        $region87: #{tpu_custom_call.1} parent=83 // pred_region
          %s5414 = sand.u32 %s231, 1
          %s5415 = scalar_lea.sflag [#allocation4], %s5414
          %s5416 = sand.u32 %s231, 1
          %s5417 = smul.addr %s5416, 128
          %s5418 = scalar_lea.vmem [#allocation11], %s5417
          %5419 = dma.done %s5415, 2048
        $region88: #{tpu_custom_call.1} parent=83 // pred_fallthru
          _
      $region84: #{tpu_custom_call.1} parent=5 // pred_fallthru
        _
    $region6: #{tpu_custom_call.1} parent=1 // loop_footer
      %s27 = sadd.s32 1, %s23
    $region7: #{tpu_custom_call.1} parent=1 // loop_footer_branch
      %22 = sbr.rel target = $region3
    $region8: #{tpu_custom_call.1} parent=1 // loop_exit
      _
    %5420 = vsyncpa [#allocation3], 1
    %s5421 = scalar_lea.sflag [#allocation3], 1
    %5422 = vsyncpa %s5421, 1
    %5423 = vsyncpa [#allocation6], 1
    %5424 = vsyncpa [#allocation9], 1
    %5425 = vsyncpa [#allocation4], 1
    %s5426 = scalar_lea.sflag [#allocation4], 1
    %5427 = vsyncpa %s5426, 1

</llo_original>
